<compile_context>
chip_gen: v7x
topology: tpu7x:2x2x1
jax: 0.10.0
libtpu: 0.0.40
codegen_flags: <defaults>
</compile_context>

<pallas_src>
import functools

import jax
import jax.numpy as jnp
from jax.experimental import pallas as pl
from jax.experimental.pallas import tpu as pltpu


def _vmem_limit_bytes():
    try:
        return int(pltpu.get_tpu_info().vmem_capacity_bytes * 0.6)
    except Exception:
        return 32 * 1024 * 1024          # safe default on v5e / v6e / v7x


_VMEM_LIMIT = _vmem_limit_bytes()


def _compiler_params():
    return pltpu.CompilerParams(dimension_semantics=("parallel",),
                                vmem_limit_bytes=_VMEM_LIMIT)


# ----------------------- fused multi-head self-attention kernel -----------------------

def _mha_kernel(x_ref, wqkv_ref, bqkv_ref, wo_ref, bo_ref, *rest,
                n_seq, seq_len, n_heads, d_k, d_v, scale,
                add_x_residual, fused_norm):
    """One grid step handles `n_seq` sequences of length `seq_len`.

    x_ref    : (1, n_seq*seq_len, d_in)   activations, f32
    wqkv_ref : (d_in, 3*n_heads*d_k)      fused Q|K|V projection, bf16
    wo_ref   : (n_heads*d_v, d_out)       output projection, bf16
    rest     : [res_ref, scale_ref, shift_ref,] out_ref
    """
    if fused_norm:
        res_ref, sc_ref, sh_ref, o_ref = rest
    else:
        (o_ref,) = rest

    S = n_seq * seq_len
    hdk = n_heads * d_k
    d_out = wo_ref.shape[-1]

    x = x_ref[0]                                            # (S, d_in) f32
    # bf16 MXU operands, f32 accumulation and epilogue.
    qkv = jnp.dot(x.astype(jnp.bfloat16), wqkv_ref[...],
                  preferred_element_type=jnp.float32) + bqkv_ref[...]   # (S, 3*hdk)
    wo = wo_ref[...]                                        # (n_heads*d_v, d_out) bf16

    y = jnp.zeros((S, d_out), jnp.float32)
    # TODO(synk): per-head static slices (d_k = 8) kept for lowering robustness; a fully
    # batched-head einsum would require 4-D dot_general / in-kernel transposes on TPU.
    for h in range(n_heads):
        q = qkv[:, h * d_k:(h + 1) * d_k]
        k = qkv[:, hdk + h * d_k: hdk + (h + 1) * d_k]
        v = qkv[:, 2 * hdk + h * d_v: 2 * hdk + (h + 1) * d_v]
        q = q.reshape(n_seq, seq_len, d_k).astype(jnp.bfloat16)
        k = k.reshape(n_seq, seq_len, d_k).astype(jnp.bfloat16)
        v = v.reshape(n_seq, seq_len, d_v).astype(jnp.bfloat16)

        s = jnp.einsum("bqd,bkd->bqk", q, k,
                       preferred_element_type=jnp.float32) * scale      # (n_seq, L, L)
        s = s - jnp.max(s, axis=-1, keepdims=True)
        p = jnp.exp(s)
        # TODO(synk): approximate reciprocal (EUP) in the softmax denominator — tiny
        # deviation from an exact softmax, fine for inference.
        p = p * pl.reciprocal(jnp.sum(p, axis=-1, keepdims=True), approx=True)

        o_h = jnp.einsum("bqk,bkd->bqd", p.astype(jnp.bfloat16), v,
                         preferred_element_type=jnp.float32)             # (n_seq, L, d_v)
        # sum_h (o_h @ W_o[h]) == concat_h(o_h) @ W_o  (avoids an in-kernel concatenate)
        y = y + jnp.dot(o_h.reshape(S, d_v).astype(jnp.bfloat16),
                        wo[h * d_v:(h + 1) * d_v, :],
                        preferred_element_type=jnp.float32)

    y = y + bo_ref[...]
    if add_x_residual:
        y = y + x                                           # fused "+ x" residual
    if fused_norm:
        y = y + res_ref[0]                                  # fused sub-layer residual
        y = y * sc_ref[...] + sh_ref[...]                   # eval-mode BatchNorm affine
    o_ref[0] = y.astype(o_ref.dtype)


def temporal_attention(tp, x):
    """TemporalAttentionLayer + fused '+ x' residual.  x: (B, C, T, D) -> (B, C*T, D)."""
    B, C, T, D = x.shape
    H, dk, dv = tp["n_heads"], tp["d_k"], tp["d_v"]
    F = 3 * H * dk
    xs = x.reshape(B, C * T, D)
    kern = functools.partial(
        _mha_kernel, n_seq=C, seq_len=T, n_heads=H, d_k=dk, d_v=dv,
        scale=tp["scale"], add_x_residual=True, fused_norm=False)
    flops = 2 * B * C * T * (D * F + H * T * dk + H * T * dv + H * dv * D)
    return pl.pallas_call(
        kern,
        out_shape=jax.ShapeDtypeStruct((B, C * T, D), x.dtype),
        grid=(B,),
        in_specs=[
            pl.BlockSpec((1, C * T, D), lambda b: (b, 0, 0)),
            pl.BlockSpec((D, F), lambda b: (0, 0)),
            pl.BlockSpec((1, F), lambda b: (0, 0)),
            pl.BlockSpec((H * dv, D), lambda b: (0, 0)),
            pl.BlockSpec((1, D), lambda b: (0, 0)),
        ],
        out_specs=pl.BlockSpec((1, C * T, D), lambda b: (b, 0, 0)),
        compiler_params=_compiler_params(),
        cost_estimate=pl.CostEstimate(
            flops=flops, transcendentals=B * C * H * T * T,
            bytes_accessed=8 * B * C * T * D + 2 * (D * F + H * dv * D)),
    )(xs, tp["w_qkv"], tp["b_qkv"], tp["w_o"], tp["b_o"])


def channel_attention(cp, x_flat, res1, bn_scale_t, bn_shift_t):
    """ChannelAttentionLayer (W_P/P_W folded) + residual(x_temporal + x) + BatchNorm1.

    x_flat, res1: (B, C, T*D) -> post-norm sub-layer-1 output (B, C, T*D)."""
    B, C, TD = x_flat.shape
    H, dk, dv = cp["n_heads"], cp["d_k"], cp["d_v"]
    F = 3 * H * dk
    kern = functools.partial(
        _mha_kernel, n_seq=1, seq_len=C, n_heads=H, d_k=dk, d_v=dv,
        scale=cp["scale"], add_x_residual=False, fused_norm=True)
    flops = 2 * B * C * (TD * F + H * C * dk + H * C * dv + H * dv * TD)
    return pl.pallas_call(
        kern,
        out_shape=jax.ShapeDtypeStruct((B, C, TD), x_flat.dtype),
        grid=(B,),
        in_specs=[
            pl.BlockSpec((1, C, TD), lambda b: (b, 0, 0)),
            pl.BlockSpec((TD, F), lambda b: (0, 0)),
            pl.BlockSpec((1, F), lambda b: (0, 0)),
            pl.BlockSpec((H * dv, TD), lambda b: (0, 0)),
            pl.BlockSpec((1, TD), lambda b: (0, 0)),
            pl.BlockSpec((1, C, TD), lambda b: (b, 0, 0)),     # residual (x_temporal + x)
            pl.BlockSpec((1, TD), lambda b: (0, 0)),           # BN1 scale (tiled)
            pl.BlockSpec((1, TD), lambda b: (0, 0)),           # BN1 shift (tiled)
        ],
        out_specs=pl.BlockSpec((1, C, TD), lambda b: (b, 0, 0)),
        compiler_params=_compiler_params(),
        cost_estimate=pl.CostEstimate(
            flops=flops, transcendentals=B * H * C * C,
            bytes_accessed=12 * B * C * TD + 2 * (TD * F + H * dv * TD)),
    )(x_flat, cp["w_qkv"], cp["b_qkv"], cp["w_o"], cp["b_o"],
      res1, bn_scale_t, bn_shift_t)


# --------------------------------- fused FFN kernel ---------------------------------

def _ffn_kernel(x_ref, w1_ref, b1_ref, w2_ref, b2_ref, sc_ref, sh_ref, o_ref):
    x = x_ref[...]
    h = jnp.dot(x.astype(jnp.bfloat16), w1_ref[...],
                preferred_element_type=jnp.float32) + b1_ref[...]
    # TODO(synk): tanh-approx GELU; PyTorch nn.GELU default is exact erf (~1e-3 deviation).
    h = 0.5 * h * (1.0 + jnp.tanh(0.7978845608028654 * (h + 0.044715 * h * h * h)))
    y = jnp.dot(h.astype(jnp.bfloat16), w2_ref[...],
                preferred_element_type=jnp.float32) + b2_ref[...]
    y = y + x                                   # fused residual
    y = y * sc_ref[...] + sh_ref[...]           # eval-mode BatchNorm affine
    o_ref[...] = y.astype(o_ref.dtype)


def _pick_rows_tile(m):
    """>=2 row blocks when possible so v7x's two TensorCores both get work."""
    if m % 16 == 0:
        tm = m // 2
        while tm > 256 and tm % 16 == 0:
            tm //= 2
        return tm
    return m


def ffn(fp, x2d):
    """ff2(gelu(ff1(x))) + x, then BatchNorm_ffn.  x2d: (M, D) -> (M, D)."""
    M, D = x2d.shape
    d_ff = fp["w1"].shape[1]
    tm = _pick_rows_tile(M)
    return pl.pallas_call(
        _ffn_kernel,
        out_shape=jax.ShapeDtypeStruct((M, D), x2d.dtype),
        grid=(M // tm,),
        in_specs=[
            pl.BlockSpec((tm, D), lambda i: (i, 0)),
            pl.BlockSpec((D, d_ff), lambda i: (0, 0)),
            pl.BlockSpec((1, d_ff), lambda i: (0, 0)),
            pl.BlockSpec((d_ff, D), lambda i: (0, 0)),
            pl.BlockSpec((1, D), lambda i: (0, 0)),
            pl.BlockSpec((1, D), lambda i: (0, 0)),
            pl.BlockSpec((1, D), lambda i: (0, 0)),
        ],
        out_specs=pl.BlockSpec((tm, D), lambda i: (i, 0)),
        compiler_params=_compiler_params(),
        cost_estimate=pl.CostEstimate(
            flops=4 * M * D * d_ff, transcendentals=M * d_ff,
            bytes_accessed=8 * M * D + 4 * D * d_ff),
    )(x2d, fp["w1"], fp["b1"], fp["w2"], fp["b2"], fp["bn_scale"], fp["bn_shift"])


# ------------------------------- parameter construction -------------------------------

def _init_linear(key, d_in, d_out):
    kw, kb = jax.random.split(key)
    bound = 1.0 / (d_in ** 0.5)
    w = jax.random.uniform(kw, (d_in, d_out), jnp.float32, -bound, bound)
    b = jax.random.uniform(kb, (d_out,), jnp.float32, -bound, bound)
    return w, b


def _bn_affine(d, eps=1e-5):
    # PyTorch BatchNorm1d defaults (eval mode): gamma=1, beta=0, running_mean=0, running_var=1
    gamma = jnp.ones((d,), jnp.float32)
    beta = jnp.zeros((d,), jnp.float32)
    rm = jnp.zeros((d,), jnp.float32)
    rv = jnp.ones((d,), jnp.float32)
    scale = gamma * jax.lax.rsqrt(rv + eps)
    shift = beta - rm * scale
    return scale, shift


def init_encoder_layer(key, *, q_len, d_model, channel_proj_len, n_heads, d_ff):
    T, D, P = q_len, d_model, channel_proj_len
    ks = jax.random.split(key, 12)

    # --- temporal multi-head attention ---
    dk = dv = D // n_heads
    wq, bq = _init_linear(ks[0], D, n_heads * dk)
    wk, bk = _init_linear(ks[1], D, n_heads * dk)
    wv, bv = _init_linear(ks[2], D, n_heads * dv)
    wo, bo = _init_linear(ks[3], n_heads * dv, D)
    temporal = dict(
        n_heads=n_heads, d_k=dk, d_v=dv, scale=float(dk) ** -0.5,
        w_qkv=jnp.concatenate([wq, wk, wv], axis=1).astype(jnp.bfloat16),
        b_qkv=jnp.concatenate([bq, bk, bv]).reshape(1, -1),
        w_o=wo.astype(jnp.bfloat16), b_o=bo.reshape(1, -1))

    # --- channel attention (4 heads hard-coded in the module) ---
    ch_heads = 4
    cdk = cdv = P // ch_heads
    wP, bP = _init_linear(ks[4], T * D, P)
    cwq, cbq = _init_linear(ks[5], P, ch_heads * cdk)
    cwk, cbk = _init_linear(ks[6], P, ch_heads * cdk)
    cwv, cbv = _init_linear(ks[7], P, ch_heads * cdv)
    cwo, cbo = _init_linear(ks[8], ch_heads * cdv, P)
    wPW, bPW = _init_linear(ks[9], P, T * D)
    cw_qkv = jnp.concatenate([cwq, cwk, cwv], axis=1)     # (P, 3*H*dk)
    cb_qkv = jnp.concatenate([cbq, cbk, cbv])
    # Exact linear folds: W_P feeds only the QKV projections, and W_o feeds only P_W.
    w_qkv_comb = wP @ cw_qkv                              # (T*D, 3*H*dk)
    b_qkv_comb = bP @ cw_qkv + cb_qkv
    w_o_comb = cwo @ wPW                                  # (H*dv, T*D)
    b_o_comb = cbo @ wPW + bPW
    channel = dict(
        n_heads=ch_heads, d_k=cdk, d_v=cdv, scale=float(cdk) ** -0.5,
        w_qkv=w_qkv_comb.astype(jnp.bfloat16), b_qkv=b_qkv_comb.reshape(1, -1),
        w_o=w_o_comb.astype(jnp.bfloat16), b_o=b_o_comb.reshape(1, -1))

    # --- BatchNorm eval-mode affines, hoisted out of the forward path ---
    sc1, sh1 = _bn_affine(D)
    scf, shf = _bn_affine(D)

    # --- feed-forward ---
    w1, b1 = _init_linear(ks[10], D, d_ff)
    w2, b2 = _init_linear(ks[11], d_ff, D)
    ffn_p = dict(w1=w1.astype(jnp.bfloat16), b1=b1.reshape(1, -1),
                 w2=w2.astype(jnp.bfloat16), b2=b2.reshape(1, -1),
                 bn_scale=scf.reshape(1, -1), bn_shift=shf.reshape(1, -1))

    return dict(
        temporal=temporal, channel=channel, ffn=ffn_p,
        bn1_scale_t=jnp.tile(sc1, T).reshape(1, T * D),   # per (t, d) column of (C, T*D)
        bn1_shift_t=jnp.tile(sh1, T).reshape(1, T * D))


# ------------------------------------ forward pass ------------------------------------

def encoder_layer_forward(p, x):
    """EncoderLayer.forward: channel_attn_type='parallel', BatchNorm, post-norm, eval.
    x: (B, C, T, D) -> (B, C, T, D)."""
    B, C, T, D = x.shape
    # sub-layer 1: temporal attention (+x fused) and channel attention (+residual+BN1 fused)
    res1 = temporal_attention(p["temporal"], x)            # (B, C*T, D) = x_temporal + x
    res1 = res1.reshape(B, C, T * D)                       # contiguous -> free reshape
    x1 = channel_attention(p["channel"], x.reshape(B, C, T * D), res1,
                           p["bn1_scale_t"], p["bn1_shift_t"])          # (B, C, T*D)
    # sub-layer 2: feed-forward + residual + BN_ffn (all fused in one kernel)
    y = ffn(p["ffn"], x1.reshape(B * C * T, D))            # (B*C*T, D)
    return y.reshape(B, C, T, D)
    # TODO(synk): channel_attn_type 'sequential' / 'parallel2', pre_norm and LayerNorm
    # branches not implemented (module defaults are 'parallel', BatchNorm, post-norm).


if __name__ == "__main__":
    B, C, T, D = 2, 4, 16, 32            # batch, channels (c_in), q_len (patch_num), d_model
    N_HEADS, D_FF, PROJ_LEN = 4, 64, 32

    key = jax.random.PRNGKey(0)
    pkey, xkey = jax.random.split(key)
    params = init_encoder_layer(pkey, q_len=T, d_model=D, channel_proj_len=PROJ_LEN,
                                n_heads=N_HEADS, d_ff=D_FF)
    x = jax.random.normal(xkey, (B, C, T, D), jnp.float32)

    fwd = jax.jit(lambda v: encoder_layer_forward(params, v))
    out = jax.block_until_ready(fwd(x))
    assert out.shape == (B, C, T, D), out.shape
    assert bool(jnp.all(jnp.isfinite(out)))
    print("KERNEL_OK")
</pallas_src>

<mosaic_0001>
module attributes {stable_mosaic.version = 11 : i64} {
  func.func @_mha_kernel(%arg0: i32, %arg1: memref<1x64x32xf32, #tpu.memory_space<vmem>>, %arg2: memref<32x96xbf16, #tpu.memory_space<vmem>>, %arg3: memref<1x96xf32, #tpu.memory_space<vmem>>, %arg4: memref<32x32xbf16, #tpu.memory_space<vmem>>, %arg5: memref<1x32xf32, #tpu.memory_space<vmem>>, %arg6: memref<1x64x32xf32, #tpu.memory_space<vmem>>) attributes {dimension_semantics = [#tpu.dimension_semantics<parallel>], iteration_bounds = array<i64: 2>, scalar_prefetch = 0 : i64, scratch_operands = 0 : i64, tpu.core_type = #tpu.core_type<tc>, window_params = [{transform_indices = @transform_0, window_bounds = array<i64: 1, 64, 32>}, {pipeline_mode = #tpu.pipeline_mode<synchronous>, transform_indices = @transform_1, window_bounds = array<i64: 32, 96>}, {pipeline_mode = #tpu.pipeline_mode<synchronous>, transform_indices = @transform_2, window_bounds = array<i64: 1, 96>}, {pipeline_mode = #tpu.pipeline_mode<synchronous>, transform_indices = @transform_3, window_bounds = array<i64: 32, 32>}, {pipeline_mode = #tpu.pipeline_mode<synchronous>, transform_indices = @transform_4, window_bounds = array<i64: 1, 32>}, {transform_indices = @transform_5, window_bounds = array<i64: 1, 64, 32>}]} {
    %c0 = arith.constant 0 : index
    %c0_0 = arith.constant 0 : index
    %c0_1 = arith.constant 0 : index
    %0 = vector.load %arg1[%c0, %c0_0, %c0_1] : memref<1x64x32xf32, #tpu.memory_space<vmem>>, vector<1x64x32xf32>
    %1 = vector.shape_cast %0 : vector<1x64x32xf32> to vector<64x32xf32>
    %2 = arith.truncf %1 : vector<64x32xf32> to vector<64x32xbf16>
    %c0_2 = arith.constant 0 : index
    %c0_3 = arith.constant 0 : index
    %3 = vector.load %arg2[%c0_2, %c0_3] : memref<32x96xbf16, #tpu.memory_space<vmem>>, vector<32x96xbf16>
    %cst = arith.constant dense<0.000000e+00> : vector<64x96xf32>
    %4 = tpu.matmul %2, %3, %cst {dimension_numbers = #tpu.dot_dimension_numbers<[1], [0], [0], [1], [0, 0, 1, 1], [], []>} : vector<64x32xbf16>, vector<32x96xbf16>, vector<64x96xf32> -> vector<64x96xf32>
    %c0_4 = arith.constant 0 : index
    %c0_5 = arith.constant 0 : index
    %5 = vector.load %arg3[%c0_4, %c0_5] : memref<1x96xf32, #tpu.memory_space<vmem>>, vector<1x96xf32>
    %6 = vector.broadcast %5 : vector<1x96xf32> to vector<64x96xf32>
    %7 = arith.addf %4, %6 : vector<64x96xf32>
    %c0_6 = arith.constant 0 : index
    %c0_7 = arith.constant 0 : index
    %8 = vector.load %arg4[%c0_6, %c0_7] : memref<32x32xbf16, #tpu.memory_space<vmem>>, vector<32x32xbf16>
    %cst_8 = arith.constant 0.000000e+00 : f32
    %9 = vector.broadcast %cst_8 : f32 to vector<64x32xf32>
    %10 = vector.extract_strided_slice %7 {offsets = [0, 0], sizes = [64, 8], strides = [1, 1]} : vector<64x96xf32> to vector<64x8xf32>
    %11 = vector.extract_strided_slice %7 {offsets = [0, 32], sizes = [64, 8], strides = [1, 1]} : vector<64x96xf32> to vector<64x8xf32>
    %12 = vector.extract_strided_slice %7 {offsets = [0, 64], sizes = [64, 8], strides = [1, 1]} : vector<64x96xf32> to vector<64x8xf32>
    %13 = vector.shape_cast %10 : vector<64x8xf32> to vector<4x16x8xf32>
    %14 = arith.truncf %13 : vector<4x16x8xf32> to vector<4x16x8xbf16>
    %15 = vector.shape_cast %11 : vector<64x8xf32> to vector<4x16x8xf32>
    %16 = arith.truncf %15 : vector<4x16x8xf32> to vector<4x16x8xbf16>
    %17 = vector.shape_cast %12 : vector<64x8xf32> to vector<4x16x8xf32>
    %18 = arith.truncf %17 : vector<4x16x8xf32> to vector<4x16x8xbf16>
    "tpu.trace_start"() <{level = 10 : i32, message = "bqd,bkd->bqk"}> : () -> ()
    %cst_9 = arith.constant dense<0.000000e+00> : vector<4x16x16xf32>
    %19 = tpu.matmul %14, %16, %cst_9 {dimension_numbers = #tpu.dot_dimension_numbers<[2], [2], [1], [1], [0, 0, 0, 1, 1, 1], [0], [0]>} : vector<4x16x8xbf16>, vector<4x16x8xbf16>, vector<4x16x16xf32> -> vector<4x16x16xf32>
    "tpu.trace_stop"() : () -> ()
    %cst_10 = arith.constant 0.353553385 : f32
    %20 = vector.broadcast %cst_10 : f32 to vector<4x16x16xf32>
    %21 = arith.mulf %19, %20 : vector<4x16x16xf32>
    %cst_11 = arith.constant dense<0xFF800000> : vector<4x16xf32>
    %22 = vector.multi_reduction <maximumf>, %21, %cst_11 [2] : vector<4x16x16xf32> to vector<4x16xf32>
    %23 = vector.shape_cast %22 : vector<4x16xf32> to vector<4x16x1xf32>
    %24 = vector.broadcast %23 : vector<4x16x1xf32> to vector<4x16x16xf32>
    %25 = arith.subf %21, %24 : vector<4x16x16xf32>
    %26 = math.exp %25 : vector<4x16x16xf32>
    %cst_12 = arith.constant dense<0.000000e+00> : vector<4x16xf32>
    %27 = vector.multi_reduction <add>, %26, %cst_12 [2] : vector<4x16x16xf32> to vector<4x16xf32>
    %28 = vector.shape_cast %27 : vector<4x16xf32> to vector<4x16x1xf32>
    %29 = tpu.reciprocal %28 {approx = true} : vector<4x16x1xf32> -> vector<4x16x1xf32>
    %30 = vector.broadcast %29 : vector<4x16x1xf32> to vector<4x16x16xf32>
    %31 = arith.mulf %26, %30 : vector<4x16x16xf32>
    %32 = arith.truncf %31 : vector<4x16x16xf32> to vector<4x16x16xbf16>
    "tpu.trace_start"() <{level = 10 : i32, message = "bqk,bkd->bqd"}> : () -> ()
    %cst_13 = arith.constant dense<0.000000e+00> : vector<4x16x8xf32>
    %33 = tpu.matmul %32, %18, %cst_13 {dimension_numbers = #tpu.dot_dimension_numbers<[2], [1], [1], [2], [0, 0, 0, 1, 1, 2], [0], [0]>} : vector<4x16x16xbf16>, vector<4x16x8xbf16>, vector<4x16x8xf32> -> vector<4x16x8xf32>
    "tpu.trace_stop"() : () -> ()
    %34 = vector.shape_cast %33 : vector<4x16x8xf32> to vector<64x8xf32>
    %35 = arith.truncf %34 : vector<64x8xf32> to vector<64x8xbf16>
    %36 = vector.extract_strided_slice %8 {offsets = [0, 0], sizes = [8, 32], strides = [1, 1]} : vector<32x32xbf16> to vector<8x32xbf16>
    %cst_14 = arith.constant dense<0.000000e+00> : vector<64x32xf32>
    %37 = tpu.matmul %35, %36, %cst_14 {dimension_numbers = #tpu.dot_dimension_numbers<[1], [0], [0], [1], [0, 0, 1, 1], [], []>} : vector<64x8xbf16>, vector<8x32xbf16>, vector<64x32xf32> -> vector<64x32xf32>
    %38 = arith.addf %9, %37 : vector<64x32xf32>
    %39 = vector.extract_strided_slice %7 {offsets = [0, 8], sizes = [64, 8], strides = [1, 1]} : vector<64x96xf32> to vector<64x8xf32>
    %40 = vector.extract_strided_slice %7 {offsets = [0, 40], sizes = [64, 8], strides = [1, 1]} : vector<64x96xf32> to vector<64x8xf32>
    %41 = vector.extract_strided_slice %7 {offsets = [0, 72], sizes = [64, 8], strides = [1, 1]} : vector<64x96xf32> to vector<64x8xf32>
    %42 = vector.shape_cast %39 : vector<64x8xf32> to vector<4x16x8xf32>
    %43 = arith.truncf %42 : vector<4x16x8xf32> to vector<4x16x8xbf16>
    %44 = vector.shape_cast %40 : vector<64x8xf32> to vector<4x16x8xf32>
    %45 = arith.truncf %44 : vector<4x16x8xf32> to vector<4x16x8xbf16>
    %46 = vector.shape_cast %41 : vector<64x8xf32> to vector<4x16x8xf32>
    %47 = arith.truncf %46 : vector<4x16x8xf32> to vector<4x16x8xbf16>
    "tpu.trace_start"() <{level = 10 : i32, message = "bqd,bkd->bqk"}> : () -> ()
    %cst_15 = arith.constant dense<0.000000e+00> : vector<4x16x16xf32>
    %48 = tpu.matmul %43, %45, %cst_15 {dimension_numbers = #tpu.dot_dimension_numbers<[2], [2], [1], [1], [0, 0, 0, 1, 1, 1], [0], [0]>} : vector<4x16x8xbf16>, vector<4x16x8xbf16>, vector<4x16x16xf32> -> vector<4x16x16xf32>
    "tpu.trace_stop"() : () -> ()
    %cst_16 = arith.constant 0.353553385 : f32
    %49 = vector.broadcast %cst_16 : f32 to vector<4x16x16xf32>
    %50 = arith.mulf %48, %49 : vector<4x16x16xf32>
    %cst_17 = arith.constant dense<0xFF800000> : vector<4x16xf32>
    %51 = vector.multi_reduction <maximumf>, %50, %cst_17 [2] : vector<4x16x16xf32> to vector<4x16xf32>
    %52 = vector.shape_cast %51 : vector<4x16xf32> to vector<4x16x1xf32>
    %53 = vector.broadcast %52 : vector<4x16x1xf32> to vector<4x16x16xf32>
    %54 = arith.subf %50, %53 : vector<4x16x16xf32>
    %55 = math.exp %54 : vector<4x16x16xf32>
    %cst_18 = arith.constant dense<0.000000e+00> : vector<4x16xf32>
    %56 = vector.multi_reduction <add>, %55, %cst_18 [2] : vector<4x16x16xf32> to vector<4x16xf32>
    %57 = vector.shape_cast %56 : vector<4x16xf32> to vector<4x16x1xf32>
    %58 = tpu.reciprocal %57 {approx = true} : vector<4x16x1xf32> -> vector<4x16x1xf32>
    %59 = vector.broadcast %58 : vector<4x16x1xf32> to vector<4x16x16xf32>
    %60 = arith.mulf %55, %59 : vector<4x16x16xf32>
    %61 = arith.truncf %60 : vector<4x16x16xf32> to vector<4x16x16xbf16>
    "tpu.trace_start"() <{level = 10 : i32, message = "bqk,bkd->bqd"}> : () -> ()
    %cst_19 = arith.constant dense<0.000000e+00> : vector<4x16x8xf32>
    %62 = tpu.matmul %61, %47, %cst_19 {dimension_numbers = #tpu.dot_dimension_numbers<[2], [1], [1], [2], [0, 0, 0, 1, 1, 2], [0], [0]>} : vector<4x16x16xbf16>, vector<4x16x8xbf16>, vector<4x16x8xf32> -> vector<4x16x8xf32>
    "tpu.trace_stop"() : () -> ()
    %63 = vector.shape_cast %62 : vector<4x16x8xf32> to vector<64x8xf32>
    %64 = arith.truncf %63 : vector<64x8xf32> to vector<64x8xbf16>
    %65 = vector.extract_strided_slice %8 {offsets = [8, 0], sizes = [8, 32], strides = [1, 1]} : vector<32x32xbf16> to vector<8x32xbf16>
    %cst_20 = arith.constant dense<0.000000e+00> : vector<64x32xf32>
    %66 = tpu.matmul %64, %65, %cst_20 {dimension_numbers = #tpu.dot_dimension_numbers<[1], [0], [0], [1], [0, 0, 1, 1], [], []>} : vector<64x8xbf16>, vector<8x32xbf16>, vector<64x32xf32> -> vector<64x32xf32>
    %67 = arith.addf %38, %66 : vector<64x32xf32>
    %68 = vector.extract_strided_slice %7 {offsets = [0, 16], sizes = [64, 8], strides = [1, 1]} : vector<64x96xf32> to vector<64x8xf32>
    %69 = vector.extract_strided_slice %7 {offsets = [0, 48], sizes = [64, 8], strides = [1, 1]} : vector<64x96xf32> to vector<64x8xf32>
    %70 = vector.extract_strided_slice %7 {offsets = [0, 80], sizes = [64, 8], strides = [1, 1]} : vector<64x96xf32> to vector<64x8xf32>
    %71 = vector.shape_cast %68 : vector<64x8xf32> to vector<4x16x8xf32>
    %72 = arith.truncf %71 : vector<4x16x8xf32> to vector<4x16x8xbf16>
    %73 = vector.shape_cast %69 : vector<64x8xf32> to vector<4x16x8xf32>
    %74 = arith.truncf %73 : vector<4x16x8xf32> to vector<4x16x8xbf16>
    %75 = vector.shape_cast %70 : vector<64x8xf32> to vector<4x16x8xf32>
    %76 = arith.truncf %75 : vector<4x16x8xf32> to vector<4x16x8xbf16>
    "tpu.trace_start"() <{level = 10 : i32, message = "bqd,bkd->bqk"}> : () -> ()
    %cst_21 = arith.constant dense<0.000000e+00> : vector<4x16x16xf32>
    %77 = tpu.matmul %72, %74, %cst_21 {dimension_numbers = #tpu.dot_dimension_numbers<[2], [2], [1], [1], [0, 0, 0, 1, 1, 1], [0], [0]>} : vector<4x16x8xbf16>, vector<4x16x8xbf16>, vector<4x16x16xf32> -> vector<4x16x16xf32>
    "tpu.trace_stop"() : () -> ()
    %cst_22 = arith.constant 0.353553385 : f32
    %78 = vector.broadcast %cst_22 : f32 to vector<4x16x16xf32>
    %79 = arith.mulf %77, %78 : vector<4x16x16xf32>
    %cst_23 = arith.constant dense<0xFF800000> : vector<4x16xf32>
    %80 = vector.multi_reduction <maximumf>, %79, %cst_23 [2] : vector<4x16x16xf32> to vector<4x16xf32>
    %81 = vector.shape_cast %80 : vector<4x16xf32> to vector<4x16x1xf32>
    %82 = vector.broadcast %81 : vector<4x16x1xf32> to vector<4x16x16xf32>
    %83 = arith.subf %79, %82 : vector<4x16x16xf32>
    %84 = math.exp %83 : vector<4x16x16xf32>
    %cst_24 = arith.constant dense<0.000000e+00> : vector<4x16xf32>
    %85 = vector.multi_reduction <add>, %84, %cst_24 [2] : vector<4x16x16xf32> to vector<4x16xf32>
    %86 = vector.shape_cast %85 : vector<4x16xf32> to vector<4x16x1xf32>
    %87 = tpu.reciprocal %86 {approx = true} : vector<4x16x1xf32> -> vector<4x16x1xf32>
    %88 = vector.broadcast %87 : vector<4x16x1xf32> to vector<4x16x16xf32>
    %89 = arith.mulf %84, %88 : vector<4x16x16xf32>
    %90 = arith.truncf %89 : vector<4x16x16xf32> to vector<4x16x16xbf16>
    "tpu.trace_start"() <{level = 10 : i32, message = "bqk,bkd->bqd"}> : () -> ()
    %cst_25 = arith.constant dense<0.000000e+00> : vector<4x16x8xf32>
    %91 = tpu.matmul %90, %76, %cst_25 {dimension_numbers = #tpu.dot_dimension_numbers<[2], [1], [1], [2], [0, 0, 0, 1, 1, 2], [0], [0]>} : vector<4x16x16xbf16>, vector<4x16x8xbf16>, vector<4x16x8xf32> -> vector<4x16x8xf32>
    "tpu.trace_stop"() : () -> ()
    %92 = vector.shape_cast %91 : vector<4x16x8xf32> to vector<64x8xf32>
    %93 = arith.truncf %92 : vector<64x8xf32> to vector<64x8xbf16>
    %94 = vector.extract_strided_slice %8 {offsets = [16, 0], sizes = [8, 32], strides = [1, 1]} : vector<32x32xbf16> to vector<8x32xbf16>
    %cst_26 = arith.constant dense<0.000000e+00> : vector<64x32xf32>
    %95 = tpu.matmul %93, %94, %cst_26 {dimension_numbers = #tpu.dot_dimension_numbers<[1], [0], [0], [1], [0, 0, 1, 1], [], []>} : vector<64x8xbf16>, vector<8x32xbf16>, vector<64x32xf32> -> vector<64x32xf32>
    %96 = arith.addf %67, %95 : vector<64x32xf32>
    %97 = vector.extract_strided_slice %7 {offsets = [0, 24], sizes = [64, 8], strides = [1, 1]} : vector<64x96xf32> to vector<64x8xf32>
    %98 = vector.extract_strided_slice %7 {offsets = [0, 56], sizes = [64, 8], strides = [1, 1]} : vector<64x96xf32> to vector<64x8xf32>
    %99 = vector.extract_strided_slice %7 {offsets = [0, 88], sizes = [64, 8], strides = [1, 1]} : vector<64x96xf32> to vector<64x8xf32>
    %100 = vector.shape_cast %97 : vector<64x8xf32> to vector<4x16x8xf32>
    %101 = arith.truncf %100 : vector<4x16x8xf32> to vector<4x16x8xbf16>
    %102 = vector.shape_cast %98 : vector<64x8xf32> to vector<4x16x8xf32>
    %103 = arith.truncf %102 : vector<4x16x8xf32> to vector<4x16x8xbf16>
    %104 = vector.shape_cast %99 : vector<64x8xf32> to vector<4x16x8xf32>
    %105 = arith.truncf %104 : vector<4x16x8xf32> to vector<4x16x8xbf16>
    "tpu.trace_start"() <{level = 10 : i32, message = "bqd,bkd->bqk"}> : () -> ()
    %cst_27 = arith.constant dense<0.000000e+00> : vector<4x16x16xf32>
    %106 = tpu.matmul %101, %103, %cst_27 {dimension_numbers = #tpu.dot_dimension_numbers<[2], [2], [1], [1], [0, 0, 0, 1, 1, 1], [0], [0]>} : vector<4x16x8xbf16>, vector<4x16x8xbf16>, vector<4x16x16xf32> -> vector<4x16x16xf32>
    "tpu.trace_stop"() : () -> ()
    %cst_28 = arith.constant 0.353553385 : f32
    %107 = vector.broadcast %cst_28 : f32 to vector<4x16x16xf32>
    %108 = arith.mulf %106, %107 : vector<4x16x16xf32>
    %cst_29 = arith.constant dense<0xFF800000> : vector<4x16xf32>
    %109 = vector.multi_reduction <maximumf>, %108, %cst_29 [2] : vector<4x16x16xf32> to vector<4x16xf32>
    %110 = vector.shape_cast %109 : vector<4x16xf32> to vector<4x16x1xf32>
    %111 = vector.broadcast %110 : vector<4x16x1xf32> to vector<4x16x16xf32>
    %112 = arith.subf %108, %111 : vector<4x16x16xf32>
    %113 = math.exp %112 : vector<4x16x16xf32>
    %cst_30 = arith.constant dense<0.000000e+00> : vector<4x16xf32>
    %114 = vector.multi_reduction <add>, %113, %cst_30 [2] : vector<4x16x16xf32> to vector<4x16xf32>
    %115 = vector.shape_cast %114 : vector<4x16xf32> to vector<4x16x1xf32>
    %116 = tpu.reciprocal %115 {approx = true} : vector<4x16x1xf32> -> vector<4x16x1xf32>
    %117 = vector.broadcast %116 : vector<4x16x1xf32> to vector<4x16x16xf32>
    %118 = arith.mulf %113, %117 : vector<4x16x16xf32>
    %119 = arith.truncf %118 : vector<4x16x16xf32> to vector<4x16x16xbf16>
    "tpu.trace_start"() <{level = 10 : i32, message = "bqk,bkd->bqd"}> : () -> ()
    %cst_31 = arith.constant dense<0.000000e+00> : vector<4x16x8xf32>
    %120 = tpu.matmul %119, %105, %cst_31 {dimension_numbers = #tpu.dot_dimension_numbers<[2], [1], [1], [2], [0, 0, 0, 1, 1, 2], [0], [0]>} : vector<4x16x16xbf16>, vector<4x16x8xbf16>, vector<4x16x8xf32> -> vector<4x16x8xf32>
    "tpu.trace_stop"() : () -> ()
    %121 = vector.shape_cast %120 : vector<4x16x8xf32> to vector<64x8xf32>
    %122 = arith.truncf %121 : vector<64x8xf32> to vector<64x8xbf16>
    %123 = vector.extract_strided_slice %8 {offsets = [24, 0], sizes = [8, 32], strides = [1, 1]} : vector<32x32xbf16> to vector<8x32xbf16>
    %cst_32 = arith.constant dense<0.000000e+00> : vector<64x32xf32>
    %124 = tpu.matmul %122, %123, %cst_32 {dimension_numbers = #tpu.dot_dimension_numbers<[1], [0], [0], [1], [0, 0, 1, 1], [], []>} : vector<64x8xbf16>, vector<8x32xbf16>, vector<64x32xf32> -> vector<64x32xf32>
    %125 = arith.addf %96, %124 : vector<64x32xf32>
    %c0_33 = arith.constant 0 : index
    %c0_34 = arith.constant 0 : index
    %126 = vector.load %arg5[%c0_33, %c0_34] : memref<1x32xf32, #tpu.memory_space<vmem>>, vector<1x32xf32>
    %127 = vector.broadcast %126 : vector<1x32xf32> to vector<64x32xf32>
    %128 = arith.addf %125, %127 : vector<64x32xf32>
    %129 = arith.addf %128, %1 : vector<64x32xf32>
    %c0_35 = arith.constant 0 : index
    %c0_36 = arith.constant 0 : index
    %c0_37 = arith.constant 0 : index
    %130 = vector.load %arg6[%c0_35, %c0_36, %c0_37] : memref<1x64x32xf32, #tpu.memory_space<vmem>>, vector<1x64x32xf32>
    %131 = vector.shape_cast %130 : vector<1x64x32xf32> to vector<64x32xf32>
    %132 = vector.shape_cast %129 : vector<64x32xf32> to vector<1x64x32xf32>
    tpu.vector_store %arg6[%c0_35, %c0_36, %c0_37], %132 {strides = array<i32>} : memref<1x64x32xf32, #tpu.memory_space<vmem>>, vector<1x64x32xf32>,
    return
  }
  func.func @transform_0(%arg0: i32) -> (i32, i32, i32) {
    %c0_i32 = arith.constant 0 : i32
    %c0_i32_0 = arith.constant 0 : i32
    %c0_i32_1 = arith.constant 0 : i32
    return %arg0, %c0_i32, %c0_i32_0 : i32, i32, i32
  }
  func.func @transform_1(%arg0: i32) -> (i32, i32) {
    %c0_i32 = arith.constant 0 : i32
    %c0_i32_0 = arith.constant 0 : i32
    %c0_i32_1 = arith.constant 0 : i32
    return %c0_i32, %c0_i32_0 : i32, i32
  }
  func.func @transform_2(%arg0: i32) -> (i32, i32) {
    %c0_i32 = arith.constant 0 : i32
    %c0_i32_0 = arith.constant 0 : i32
    %c0_i32_1 = arith.constant 0 : i32
    return %c0_i32, %c0_i32_0 : i32, i32
  }
  func.func @transform_3(%arg0: i32) -> (i32, i32) {
    %c0_i32 = arith.constant 0 : i32
    %c0_i32_0 = arith.constant 0 : i32
    %c0_i32_1 = arith.constant 0 : i32
    return %c0_i32, %c0_i32_0 : i32, i32
  }
  func.func @transform_4(%arg0: i32) -> (i32, i32) {
    %c0_i32 = arith.constant 0 : i32
    %c0_i32_0 = arith.constant 0 : i32
    %c0_i32_1 = arith.constant 0 : i32
    return %c0_i32, %c0_i32_0 : i32, i32
  }
  func.func @transform_5(%arg0: i32) -> (i32, i32, i32) {
    %c0_i32 = arith.constant 0 : i32
    %c0_i32_0 = arith.constant 0 : i32
    %c0_i32_1 = arith.constant 0 : i32
    return %arg0, %c0_i32, %c0_i32_0 : i32, i32, i32
  }
}

module attributes {stable_mosaic.version = 11 : i64} {
  func.func @_mha_kernel(%arg0: i32, %arg1: memref<1x4x512xf32, #tpu.memory_space<vmem>>, %arg2: memref<512x96xbf16, #tpu.memory_space<vmem>>, %arg3: memref<1x96xf32, #tpu.memory_space<vmem>>, %arg4: memref<32x512xbf16, #tpu.memory_space<vmem>>, %arg5: memref<1x512xf32, #tpu.memory_space<vmem>>, %arg6: memref<1x4x512xf32, #tpu.memory_space<vmem>>, %arg7: memref<1x512xf32, #tpu.memory_space<vmem>>, %arg8: memref<1x512xf32, #tpu.memory_space<vmem>>, %arg9: memref<1x4x512xf32, #tpu.memory_space<vmem>>) attributes {dimension_semantics = [#tpu.dimension_semantics<parallel>], iteration_bounds = array<i64: 2>, scalar_prefetch = 0 : i64, scratch_operands = 0 : i64, tpu.core_type = #tpu.core_type<tc>, window_params = [{transform_indices = @transform_0, window_bounds = array<i64: 1, 4, 512>}, {pipeline_mode = #tpu.pipeline_mode<synchronous>, transform_indices = @transform_1, window_bounds = array<i64: 512, 96>}, {pipeline_mode = #tpu.pipeline_mode<synchronous>, transform_indices = @transform_2, window_bounds = array<i64: 1, 96>}, {pipeline_mode = #tpu.pipeline_mode<synchronous>, transform_indices = @transform_3, window_bounds = array<i64: 32, 512>}, {pipeline_mode = #tpu.pipeline_mode<synchronous>, transform_indices = @transform_4, window_bounds = array<i64: 1, 512>}, {transform_indices = @transform_5, window_bounds = array<i64: 1, 4, 512>}, {pipeline_mode = #tpu.pipeline_mode<synchronous>, transform_indices = @transform_6, window_bounds = array<i64: 1, 512>}, {pipeline_mode = #tpu.pipeline_mode<synchronous>, transform_indices = @transform_7, window_bounds = array<i64: 1, 512>}, {transform_indices = @transform_8, window_bounds = array<i64: 1, 4, 512>}]} {
    %c0 = arith.constant 0 : index
    %c0_0 = arith.constant 0 : index
    %c0_1 = arith.constant 0 : index
    %0 = vector.load %arg1[%c0, %c0_0, %c0_1] : memref<1x4x512xf32, #tpu.memory_space<vmem>>, vector<1x4x512xf32>
    %1 = vector.shape_cast %0 : vector<1x4x512xf32> to vector<4x512xf32>
    %2 = arith.truncf %1 : vector<4x512xf32> to vector<4x512xbf16>
    %c0_2 = arith.constant 0 : index
    %c0_3 = arith.constant 0 : index
    %3 = vector.load %arg2[%c0_2, %c0_3] : memref<512x96xbf16, #tpu.memory_space<vmem>>, vector<512x96xbf16>
    %cst = arith.constant dense<0.000000e+00> : vector<4x96xf32>
    %4 = tpu.matmul %2, %3, %cst {dimension_numbers = #tpu.dot_dimension_numbers<[1], [0], [0], [1], [0, 0, 1, 1], [], []>} : vector<4x512xbf16>, vector<512x96xbf16>, vector<4x96xf32> -> vector<4x96xf32>
    %c0_4 = arith.constant 0 : index
    %c0_5 = arith.constant 0 : index
    %5 = vector.load %arg3[%c0_4, %c0_5] : memref<1x96xf32, #tpu.memory_space<vmem>>, vector<1x96xf32>
    %6 = vector.broadcast %5 : vector<1x96xf32> to vector<4x96xf32>
    %7 = arith.addf %4, %6 : vector<4x96xf32>
    %c0_6 = arith.constant 0 : index
    %c0_7 = arith.constant 0 : index
    %8 = vector.load %arg4[%c0_6, %c0_7] : memref<32x512xbf16, #tpu.memory_space<vmem>>, vector<32x512xbf16>
    %cst_8 = arith.constant 0.000000e+00 : f32
    %9 = vector.broadcast %cst_8 : f32 to vector<4x512xf32>
    %10 = vector.extract_strided_slice %7 {offsets = [0, 0], sizes = [4, 8], strides = [1, 1]} : vector<4x96xf32> to vector<4x8xf32>
    %11 = vector.extract_strided_slice %7 {offsets = [0, 32], sizes = [4, 8], strides = [1, 1]} : vector<4x96xf32> to vector<4x8xf32>
    %12 = vector.extract_strided_slice %7 {offsets = [0, 64], sizes = [4, 8], strides = [1, 1]} : vector<4x96xf32> to vector<4x8xf32>
    %13 = vector.shape_cast %10 : vector<4x8xf32> to vector<1x4x8xf32>
    %14 = arith.truncf %13 : vector<1x4x8xf32> to vector<1x4x8xbf16>
    %15 = vector.shape_cast %11 : vector<4x8xf32> to vector<1x4x8xf32>
    %16 = arith.truncf %15 : vector<1x4x8xf32> to vector<1x4x8xbf16>
    %17 = vector.shape_cast %12 : vector<4x8xf32> to vector<1x4x8xf32>
    %18 = arith.truncf %17 : vector<1x4x8xf32> to vector<1x4x8xbf16>
    "tpu.trace_start"() <{level = 10 : i32, message = "bqd,bkd->bqk"}> : () -> ()
    %cst_9 = arith.constant dense<0.000000e+00> : vector<1x4x4xf32>
    %19 = tpu.matmul %14, %16, %cst_9 {dimension_numbers = #tpu.dot_dimension_numbers<[2], [2], [1], [1], [0, 0, 0, 1, 1, 1], [0], [0]>} : vector<1x4x8xbf16>, vector<1x4x8xbf16>, vector<1x4x4xf32> -> vector<1x4x4xf32>
    "tpu.trace_stop"() : () -> ()
    %cst_10 = arith.constant 0.353553385 : f32
    %20 = vector.broadcast %cst_10 : f32 to vector<1x4x4xf32>
    %21 = arith.mulf %19, %20 : vector<1x4x4xf32>
    %cst_11 = arith.constant dense<0xFF800000> : vector<1x4xf32>
    %22 = vector.multi_reduction <maximumf>, %21, %cst_11 [2] : vector<1x4x4xf32> to vector<1x4xf32>
    %23 = vector.shape_cast %22 : vector<1x4xf32> to vector<1x4x1xf32>
    %24 = vector.broadcast %23 : vector<1x4x1xf32> to vector<1x4x4xf32>
    %25 = arith.subf %21, %24 : vector<1x4x4xf32>
    %26 = math.exp %25 : vector<1x4x4xf32>
    %cst_12 = arith.constant dense<0.000000e+00> : vector<1x4xf32>
    %27 = vector.multi_reduction <add>, %26, %cst_12 [2] : vector<1x4x4xf32> to vector<1x4xf32>
    %28 = vector.shape_cast %27 : vector<1x4xf32> to vector<1x4x1xf32>
    %29 = tpu.reciprocal %28 {approx = true} : vector<1x4x1xf32> -> vector<1x4x1xf32>
    %30 = vector.broadcast %29 : vector<1x4x1xf32> to vector<1x4x4xf32>
    %31 = arith.mulf %26, %30 : vector<1x4x4xf32>
    %32 = arith.truncf %31 : vector<1x4x4xf32> to vector<1x4x4xbf16>
    "tpu.trace_start"() <{level = 10 : i32, message = "bqk,bkd->bqd"}> : () -> ()
    %cst_13 = arith.constant dense<0.000000e+00> : vector<1x4x8xf32>
    %33 = tpu.matmul %32, %18, %cst_13 {dimension_numbers = #tpu.dot_dimension_numbers<[2], [1], [1], [2], [0, 0, 0, 1, 1, 2], [0], [0]>} : vector<1x4x4xbf16>, vector<1x4x8xbf16>, vector<1x4x8xf32> -> vector<1x4x8xf32>
    "tpu.trace_stop"() : () -> ()
    %34 = vector.shape_cast %33 : vector<1x4x8xf32> to vector<4x8xf32>
    %35 = arith.truncf %34 : vector<4x8xf32> to vector<4x8xbf16>
    %36 = vector.extract_strided_slice %8 {offsets = [0, 0], sizes = [8, 512], strides = [1, 1]} : vector<32x512xbf16> to vector<8x512xbf16>
    %cst_14 = arith.constant dense<0.000000e+00> : vector<4x512xf32>
    %37 = tpu.matmul %35, %36, %cst_14 {dimension_numbers = #tpu.dot_dimension_numbers<[1], [0], [0], [1], [0, 0, 1, 1], [], []>} : vector<4x8xbf16>, vector<8x512xbf16>, vector<4x512xf32> -> vector<4x512xf32>
    %38 = arith.addf %9, %37 : vector<4x512xf32>
    %39 = vector.extract_strided_slice %7 {offsets = [0, 8], sizes = [4, 8], strides = [1, 1]} : vector<4x96xf32> to vector<4x8xf32>
    %40 = vector.extract_strided_slice %7 {offsets = [0, 40], sizes = [4, 8], strides = [1, 1]} : vector<4x96xf32> to vector<4x8xf32>
    %41 = vector.extract_strided_slice %7 {offsets = [0, 72], sizes = [4, 8], strides = [1, 1]} : vector<4x96xf32> to vector<4x8xf32>
    %42 = vector.shape_cast %39 : vector<4x8xf32> to vector<1x4x8xf32>
    %43 = arith.truncf %42 : vector<1x4x8xf32> to vector<1x4x8xbf16>
    %44 = vector.shape_cast %40 : vector<4x8xf32> to vector<1x4x8xf32>
    %45 = arith.truncf %44 : vector<1x4x8xf32> to vector<1x4x8xbf16>
    %46 = vector.shape_cast %41 : vector<4x8xf32> to vector<1x4x8xf32>
    %47 = arith.truncf %46 : vector<1x4x8xf32> to vector<1x4x8xbf16>
    "tpu.trace_start"() <{level = 10 : i32, message = "bqd,bkd->bqk"}> : () -> ()
    %cst_15 = arith.constant dense<0.000000e+00> : vector<1x4x4xf32>
    %48 = tpu.matmul %43, %45, %cst_15 {dimension_numbers = #tpu.dot_dimension_numbers<[2], [2], [1], [1], [0, 0, 0, 1, 1, 1], [0], [0]>} : vector<1x4x8xbf16>, vector<1x4x8xbf16>, vector<1x4x4xf32> -> vector<1x4x4xf32>
    "tpu.trace_stop"() : () -> ()
    %cst_16 = arith.constant 0.353553385 : f32
    %49 = vector.broadcast %cst_16 : f32 to vector<1x4x4xf32>
    %50 = arith.mulf %48, %49 : vector<1x4x4xf32>
    %cst_17 = arith.constant dense<0xFF800000> : vector<1x4xf32>
    %51 = vector.multi_reduction <maximumf>, %50, %cst_17 [2] : vector<1x4x4xf32> to vector<1x4xf32>
    %52 = vector.shape_cast %51 : vector<1x4xf32> to vector<1x4x1xf32>
    %53 = vector.broadcast %52 : vector<1x4x1xf32> to vector<1x4x4xf32>
    %54 = arith.subf %50, %53 : vector<1x4x4xf32>
    %55 = math.exp %54 : vector<1x4x4xf32>
    %cst_18 = arith.constant dense<0.000000e+00> : vector<1x4xf32>
    %56 = vector.multi_reduction <add>, %55, %cst_18 [2] : vector<1x4x4xf32> to vector<1x4xf32>
    %57 = vector.shape_cast %56 : vector<1x4xf32> to vector<1x4x1xf32>
    %58 = tpu.reciprocal %57 {approx = true} : vector<1x4x1xf32> -> vector<1x4x1xf32>
    %59 = vector.broadcast %58 : vector<1x4x1xf32> to vector<1x4x4xf32>
    %60 = arith.mulf %55, %59 : vector<1x4x4xf32>
    %61 = arith.truncf %60 : vector<1x4x4xf32> to vector<1x4x4xbf16>
    "tpu.trace_start"() <{level = 10 : i32, message = "bqk,bkd->bqd"}> : () -> ()
    %cst_19 = arith.constant dense<0.000000e+00> : vector<1x4x8xf32>
    %62 = tpu.matmul %61, %47, %cst_19 {dimension_numbers = #tpu.dot_dimension_numbers<[2], [1], [1], [2], [0, 0, 0, 1, 1, 2], [0], [0]>} : vector<1x4x4xbf16>, vector<1x4x8xbf16>, vector<1x4x8xf32> -> vector<1x4x8xf32>
    "tpu.trace_stop"() : () -> ()
    %63 = vector.shape_cast %62 : vector<1x4x8xf32> to vector<4x8xf32>
    %64 = arith.truncf %63 : vector<4x8xf32> to vector<4x8xbf16>
    %65 = vector.extract_strided_slice %8 {offsets = [8, 0], sizes = [8, 512], strides = [1, 1]} : vector<32x512xbf16> to vector<8x512xbf16>
    %cst_20 = arith.constant dense<0.000000e+00> : vector<4x512xf32>
    %66 = tpu.matmul %64, %65, %cst_20 {dimension_numbers = #tpu.dot_dimension_numbers<[1], [0], [0], [1], [0, 0, 1, 1], [], []>} : vector<4x8xbf16>, vector<8x512xbf16>, vector<4x512xf32> -> vector<4x512xf32>
    %67 = arith.addf %38, %66 : vector<4x512xf32>
    %68 = vector.extract_strided_slice %7 {offsets = [0, 16], sizes = [4, 8], strides = [1, 1]} : vector<4x96xf32> to vector<4x8xf32>
    %69 = vector.extract_strided_slice %7 {offsets = [0, 48], sizes = [4, 8], strides = [1, 1]} : vector<4x96xf32> to vector<4x8xf32>
    %70 = vector.extract_strided_slice %7 {offsets = [0, 80], sizes = [4, 8], strides = [1, 1]} : vector<4x96xf32> to vector<4x8xf32>
    %71 = vector.shape_cast %68 : vector<4x8xf32> to vector<1x4x8xf32>
    %72 = arith.truncf %71 : vector<1x4x8xf32> to vector<1x4x8xbf16>
    %73 = vector.shape_cast %69 : vector<4x8xf32> to vector<1x4x8xf32>
    %74 = arith.truncf %73 : vector<1x4x8xf32> to vector<1x4x8xbf16>
    %75 = vector.shape_cast %70 : vector<4x8xf32> to vector<1x4x8xf32>
    %76 = arith.truncf %75 : vector<1x4x8xf32> to vector<1x4x8xbf16>
    "tpu.trace_start"() <{level = 10 : i32, message = "bqd,bkd->bqk"}> : () -> ()
    %cst_21 = arith.constant dense<0.000000e+00> : vector<1x4x4xf32>
    %77 = tpu.matmul %72, %74, %cst_21 {dimension_numbers = #tpu.dot_dimension_numbers<[2], [2], [1], [1], [0, 0, 0, 1, 1, 1], [0], [0]>} : vector<1x4x8xbf16>, vector<1x4x8xbf16>, vector<1x4x4xf32> -> vector<1x4x4xf32>
    "tpu.trace_stop"() : () -> ()
    %cst_22 = arith.constant 0.353553385 : f32
    %78 = vector.broadcast %cst_22 : f32 to vector<1x4x4xf32>
    %79 = arith.mulf %77, %78 : vector<1x4x4xf32>
    %cst_23 = arith.constant dense<0xFF800000> : vector<1x4xf32>
    %80 = vector.multi_reduction <maximumf>, %79, %cst_23 [2] : vector<1x4x4xf32> to vector<1x4xf32>
    %81 = vector.shape_cast %80 : vector<1x4xf32> to vector<1x4x1xf32>
    %82 = vector.broadcast %81 : vector<1x4x1xf32> to vector<1x4x4xf32>
    %83 = arith.subf %79, %82 : vector<1x4x4xf32>
    %84 = math.exp %83 : vector<1x4x4xf32>
    %cst_24 = arith.constant dense<0.000000e+00> : vector<1x4xf32>
    %85 = vector.multi_reduction <add>, %84, %cst_24 [2] : vector<1x4x4xf32> to vector<1x4xf32>
    %86 = vector.shape_cast %85 : vector<1x4xf32> to vector<1x4x1xf32>
    %87 = tpu.reciprocal %86 {approx = true} : vector<1x4x1xf32> -> vector<1x4x1xf32>
    %88 = vector.broadcast %87 : vector<1x4x1xf32> to vector<1x4x4xf32>
    %89 = arith.mulf %84, %88 : vector<1x4x4xf32>
    %90 = arith.truncf %89 : vector<1x4x4xf32> to vector<1x4x4xbf16>
    "tpu.trace_start"() <{level = 10 : i32, message = "bqk,bkd->bqd"}> : () -> ()
    %cst_25 = arith.constant dense<0.000000e+00> : vector<1x4x8xf32>
    %91 = tpu.matmul %90, %76, %cst_25 {dimension_numbers = #tpu.dot_dimension_numbers<[2], [1], [1], [2], [0, 0, 0, 1, 1, 2], [0], [0]>} : vector<1x4x4xbf16>, vector<1x4x8xbf16>, vector<1x4x8xf32> -> vector<1x4x8xf32>
    "tpu.trace_stop"() : () -> ()
    %92 = vector.shape_cast %91 : vector<1x4x8xf32> to vector<4x8xf32>
    %93 = arith.truncf %92 : vector<4x8xf32> to vector<4x8xbf16>
    %94 = vector.extract_strided_slice %8 {offsets = [16, 0], sizes = [8, 512], strides = [1, 1]} : vector<32x512xbf16> to vector<8x512xbf16>
    %cst_26 = arith.constant dense<0.000000e+00> : vector<4x512xf32>
    %95 = tpu.matmul %93, %94, %cst_26 {dimension_numbers = #tpu.dot_dimension_numbers<[1], [0], [0], [1], [0, 0, 1, 1], [], []>} : vector<4x8xbf16>, vector<8x512xbf16>, vector<4x512xf32> -> vector<4x512xf32>
    %96 = arith.addf %67, %95 : vector<4x512xf32>
    %97 = vector.extract_strided_slice %7 {offsets = [0, 24], sizes = [4, 8], strides = [1, 1]} : vector<4x96xf32> to vector<4x8xf32>
    %98 = vector.extract_strided_slice %7 {offsets = [0, 56], sizes = [4, 8], strides = [1, 1]} : vector<4x96xf32> to vector<4x8xf32>
    %99 = vector.extract_strided_slice %7 {offsets = [0, 88], sizes = [4, 8], strides = [1, 1]} : vector<4x96xf32> to vector<4x8xf32>
    %100 = vector.shape_cast %97 : vector<4x8xf32> to vector<1x4x8xf32>
    %101 = arith.truncf %100 : vector<1x4x8xf32> to vector<1x4x8xbf16>
    %102 = vector.shape_cast %98 : vector<4x8xf32> to vector<1x4x8xf32>
    %103 = arith.truncf %102 : vector<1x4x8xf32> to vector<1x4x8xbf16>
    %104 = vector.shape_cast %99 : vector<4x8xf32> to vector<1x4x8xf32>
    %105 = arith.truncf %104 : vector<1x4x8xf32> to vector<1x4x8xbf16>
    "tpu.trace_start"() <{level = 10 : i32, message = "bqd,bkd->bqk"}> : () -> ()
    %cst_27 = arith.constant dense<0.000000e+00> : vector<1x4x4xf32>
    %106 = tpu.matmul %101, %103, %cst_27 {dimension_numbers = #tpu.dot_dimension_numbers<[2], [2], [1], [1], [0, 0, 0, 1, 1, 1], [0], [0]>} : vector<1x4x8xbf16>, vector<1x4x8xbf16>, vector<1x4x4xf32> -> vector<1x4x4xf32>
    "tpu.trace_stop"() : () -> ()
    %cst_28 = arith.constant 0.353553385 : f32
    %107 = vector.broadcast %cst_28 : f32 to vector<1x4x4xf32>
    %108 = arith.mulf %106, %107 : vector<1x4x4xf32>
    %cst_29 = arith.constant dense<0xFF800000> : vector<1x4xf32>
    %109 = vector.multi_reduction <maximumf>, %108, %cst_29 [2] : vector<1x4x4xf32> to vector<1x4xf32>
    %110 = vector.shape_cast %109 : vector<1x4xf32> to vector<1x4x1xf32>
    %111 = vector.broadcast %110 : vector<1x4x1xf32> to vector<1x4x4xf32>
    %112 = arith.subf %108, %111 : vector<1x4x4xf32>
    %113 = math.exp %112 : vector<1x4x4xf32>
    %cst_30 = arith.constant dense<0.000000e+00> : vector<1x4xf32>
    %114 = vector.multi_reduction <add>, %113, %cst_30 [2] : vector<1x4x4xf32> to vector<1x4xf32>
    %115 = vector.shape_cast %114 : vector<1x4xf32> to vector<1x4x1xf32>
    %116 = tpu.reciprocal %115 {approx = true} : vector<1x4x1xf32> -> vector<1x4x1xf32>
    %117 = vector.broadcast %116 : vector<1x4x1xf32> to vector<1x4x4xf32>
    %118 = arith.mulf %113, %117 : vector<1x4x4xf32>
    %119 = arith.truncf %118 : vector<1x4x4xf32> to vector<1x4x4xbf16>
    "tpu.trace_start"() <{level = 10 : i32, message = "bqk,bkd->bqd"}> : () -> ()
    %cst_31 = arith.constant dense<0.000000e+00> : vector<1x4x8xf32>
    %120 = tpu.matmul %119, %105, %cst_31 {dimension_numbers = #tpu.dot_dimension_numbers<[2], [1], [1], [2], [0, 0, 0, 1, 1, 2], [0], [0]>} : vector<1x4x4xbf16>, vector<1x4x8xbf16>, vector<1x4x8xf32> -> vector<1x4x8xf32>
    "tpu.trace_stop"() : () -> ()
    %121 = vector.shape_cast %120 : vector<1x4x8xf32> to vector<4x8xf32>
    %122 = arith.truncf %121 : vector<4x8xf32> to vector<4x8xbf16>
    %123 = vector.extract_strided_slice %8 {offsets = [24, 0], sizes = [8, 512], strides = [1, 1]} : vector<32x512xbf16> to vector<8x512xbf16>
    %cst_32 = arith.constant dense<0.000000e+00> : vector<4x512xf32>
    %124 = tpu.matmul %122, %123, %cst_32 {dimension_numbers = #tpu.dot_dimension_numbers<[1], [0], [0], [1], [0, 0, 1, 1], [], []>} : vector<4x8xbf16>, vector<8x512xbf16>, vector<4x512xf32> -> vector<4x512xf32>
    %125 = arith.addf %96, %124 : vector<4x512xf32>
    %c0_33 = arith.constant 0 : index
    %c0_34 = arith.constant 0 : index
    %126 = vector.load %arg5[%c0_33, %c0_34] : memref<1x512xf32, #tpu.memory_space<vmem>>, vector<1x512xf32>
    %127 = vector.broadcast %126 : vector<1x512xf32> to vector<4x512xf32>
    %128 = arith.addf %125, %127 : vector<4x512xf32>
    %c0_35 = arith.constant 0 : index
    %c0_36 = arith.constant 0 : index
    %c0_37 = arith.constant 0 : index
    %129 = vector.load %arg6[%c0_35, %c0_36, %c0_37] : memref<1x4x512xf32, #tpu.memory_space<vmem>>, vector<1x4x512xf32>
    %130 = vector.shape_cast %129 : vector<1x4x512xf32> to vector<4x512xf32>
    %131 = arith.addf %128, %130 : vector<4x512xf32>
    %c0_38 = arith.constant 0 : index
    %c0_39 = arith.constant 0 : index
    %132 = vector.load %arg7[%c0_38, %c0_39] : memref<1x512xf32, #tpu.memory_space<vmem>>, vector<1x512xf32>
    %133 = vector.broadcast %132 : vector<1x512xf32> to vector<4x512xf32>
    %134 = arith.mulf %131, %133 : vector<4x512xf32>
    %c0_40 = arith.constant 0 : index
    %c0_41 = arith.constant 0 : index
    %135 = vector.load %arg8[%c0_40, %c0_41] : memref<1x512xf32, #tpu.memory_space<vmem>>, vector<1x512xf32>
    %136 = vector.broadcast %135 : vector<1x512xf32> to vector<4x512xf32>
    %137 = arith.addf %134, %136 : vector<4x512xf32>
    %c0_42 = arith.constant 0 : index
    %c0_43 = arith.constant 0 : index
    %c0_44 = arith.constant 0 : index
    %138 = vector.load %arg9[%c0_42, %c0_43, %c0_44] : memref<1x4x512xf32, #tpu.memory_space<vmem>>, vector<1x4x512xf32>
    %139 = vector.shape_cast %138 : vector<1x4x512xf32> to vector<4x512xf32>
    %140 = vector.shape_cast %137 : vector<4x512xf32> to vector<1x4x512xf32>
    tpu.vector_store %arg9[%c0_42, %c0_43, %c0_44], %140 {strides = array<i32>} : memref<1x4x512xf32, #tpu.memory_space<vmem>>, vector<1x4x512xf32>,
    return
  }
  func.func @transform_0(%arg0: i32) -> (i32, i32, i32) {
    %c0_i32 = arith.constant 0 : i32
    %c0_i32_0 = arith.constant 0 : i32
    %c0_i32_1 = arith.constant 0 : i32
    return %arg0, %c0_i32, %c0_i32_0 : i32, i32, i32
  }
  func.func @transform_1(%arg0: i32) -> (i32, i32) {
    %c0_i32 = arith.constant 0 : i32
    %c0_i32_0 = arith.constant 0 : i32
    %c0_i32_1 = arith.constant 0 : i32
    return %c0_i32, %c0_i32_0 : i32, i32
  }
  func.func @transform_2(%arg0: i32) -> (i32, i32) {
    %c0_i32 = arith.constant 0 : i32
    %c0_i32_0 = arith.constant 0 : i32
    %c0_i32_1 = arith.constant 0 : i32
    return %c0_i32, %c0_i32_0 : i32, i32
  }
  func.func @transform_3(%arg0: i32) -> (i32, i32) {
    %c0_i32 = arith.constant 0 : i32
    %c0_i32_0 = arith.constant 0 : i32
    %c0_i32_1 = arith.constant 0 : i32
    return %c0_i32, %c0_i32_0 : i32, i32
  }
  func.func @transform_4(%arg0: i32) -> (i32, i32) {
    %c0_i32 = arith.constant 0 : i32
    %c0_i32_0 = arith.constant 0 : i32
    %c0_i32_1 = arith.constant 0 : i32
    return %c0_i32, %c0_i32_0 : i32, i32
  }
  func.func @transform_5(%arg0: i32) -> (i32, i32, i32) {
    %c0_i32 = arith.constant 0 : i32
    %c0_i32_0 = arith.constant 0 : i32
    %c0_i32_1 = arith.constant 0 : i32
    return %arg0, %c0_i32, %c0_i32_0 : i32, i32, i32
  }
  func.func @transform_6(%arg0: i32) -> (i32, i32) {
    %c0_i32 = arith.constant 0 : i32
    %c0_i32_0 = arith.constant 0 : i32
    %c0_i32_1 = arith.constant 0 : i32
    return %c0_i32, %c0_i32_0 : i32, i32
  }
  func.func @transform_7(%arg0: i32) -> (i32, i32) {
    %c0_i32 = arith.constant 0 : i32
    %c0_i32_0 = arith.constant 0 : i32
    %c0_i32_1 = arith.constant 0 : i32
    return %c0_i32, %c0_i32_0 : i32, i32
  }
  func.func @transform_8(%arg0: i32) -> (i32, i32, i32) {
    %c0_i32 = arith.constant 0 : i32
    %c0_i32_0 = arith.constant 0 : i32
    %c0_i32_1 = arith.constant 0 : i32
    return %arg0, %c0_i32, %c0_i32_0 : i32, i32, i32
  }
}

module attributes {stable_mosaic.version = 11 : i64} {
  func.func @_ffn_kernel(%arg0: i32, %arg1: memref<64x32xf32, #tpu.memory_space<vmem>>, %arg2: memref<32x64xbf16, #tpu.memory_space<vmem>>, %arg3: memref<1x64xf32, #tpu.memory_space<vmem>>, %arg4: memref<64x32xbf16, #tpu.memory_space<vmem>>, %arg5: memref<1x32xf32, #tpu.memory_space<vmem>>, %arg6: memref<1x32xf32, #tpu.memory_space<vmem>>, %arg7: memref<1x32xf32, #tpu.memory_space<vmem>>, %arg8: memref<64x32xf32, #tpu.memory_space<vmem>>) attributes {dimension_semantics = [#tpu.dimension_semantics<parallel>], iteration_bounds = array<i64: 2>, scalar_prefetch = 0 : i64, scratch_operands = 0 : i64, tpu.core_type = #tpu.core_type<tc>, window_params = [{transform_indices = @transform_0, window_bounds = array<i64: 64, 32>}, {pipeline_mode = #tpu.pipeline_mode<synchronous>, transform_indices = @transform_1, window_bounds = array<i64: 32, 64>}, {pipeline_mode = #tpu.pipeline_mode<synchronous>, transform_indices = @transform_2, window_bounds = array<i64: 1, 64>}, {pipeline_mode = #tpu.pipeline_mode<synchronous>, transform_indices = @transform_3, window_bounds = array<i64: 64, 32>}, {pipeline_mode = #tpu.pipeline_mode<synchronous>, transform_indices = @transform_4, window_bounds = array<i64: 1, 32>}, {pipeline_mode = #tpu.pipeline_mode<synchronous>, transform_indices = @transform_5, window_bounds = array<i64: 1, 32>}, {pipeline_mode = #tpu.pipeline_mode<synchronous>, transform_indices = @transform_6, window_bounds = array<i64: 1, 32>}, {transform_indices = @transform_7, window_bounds = array<i64: 64, 32>}]} {
    %c0 = arith.constant 0 : index
    %c0_0 = arith.constant 0 : index
    %0 = vector.load %arg1[%c0, %c0_0] : memref<64x32xf32, #tpu.memory_space<vmem>>, vector<64x32xf32>
    %1 = arith.truncf %0 : vector<64x32xf32> to vector<64x32xbf16>
    %c0_1 = arith.constant 0 : index
    %c0_2 = arith.constant 0 : index
    %2 = vector.load %arg2[%c0_1, %c0_2] : memref<32x64xbf16, #tpu.memory_space<vmem>>, vector<32x64xbf16>
    %cst = arith.constant dense<0.000000e+00> : vector<64x64xf32>
    %3 = tpu.matmul %1, %2, %cst {dimension_numbers = #tpu.dot_dimension_numbers<[1], [0], [0], [1], [0, 0, 1, 1], [], []>} : vector<64x32xbf16>, vector<32x64xbf16>, vector<64x64xf32> -> vector<64x64xf32>
    %c0_3 = arith.constant 0 : index
    %c0_4 = arith.constant 0 : index
    %4 = vector.load %arg3[%c0_3, %c0_4] : memref<1x64xf32, #tpu.memory_space<vmem>>, vector<1x64xf32>
    %5 = vector.broadcast %4 : vector<1x64xf32> to vector<64x64xf32>
    %6 = arith.addf %3, %5 : vector<64x64xf32>
    %cst_5 = arith.constant 5.000000e-01 : f32
    %7 = vector.broadcast %cst_5 : f32 to vector<64x64xf32>
    %8 = arith.mulf %7, %6 : vector<64x64xf32>
    %cst_6 = arith.constant 4.471500e-02 : f32
    %9 = vector.broadcast %cst_6 : f32 to vector<64x64xf32>
    %10 = arith.mulf %9, %6 : vector<64x64xf32>
    %11 = arith.mulf %10, %6 : vector<64x64xf32>
    %12 = arith.mulf %11, %6 : vector<64x64xf32>
    %13 = arith.addf %6, %12 : vector<64x64xf32>
    %cst_7 = arith.constant 0.797884583 : f32
    %14 = vector.broadcast %cst_7 : f32 to vector<64x64xf32>
    %15 = arith.mulf %14, %13 : vector<64x64xf32>
    %16 = math.tanh %15 : vector<64x64xf32>
    %cst_8 = arith.constant 1.000000e+00 : f32
    %17 = vector.broadcast %cst_8 : f32 to vector<64x64xf32>
    %18 = arith.addf %17, %16 : vector<64x64xf32>
    %19 = arith.mulf %8, %18 : vector<64x64xf32>
    %20 = arith.truncf %19 : vector<64x64xf32> to vector<64x64xbf16>
    %c0_9 = arith.constant 0 : index
    %c0_10 = arith.constant 0 : index
    %21 = vector.load %arg4[%c0_9, %c0_10] : memref<64x32xbf16, #tpu.memory_space<vmem>>, vector<64x32xbf16>
    %cst_11 = arith.constant dense<0.000000e+00> : vector<64x32xf32>
    %22 = tpu.matmul %20, %21, %cst_11 {dimension_numbers = #tpu.dot_dimension_numbers<[1], [0], [0], [1], [0, 0, 1, 1], [], []>} : vector<64x64xbf16>, vector<64x32xbf16>, vector<64x32xf32> -> vector<64x32xf32>
    %c0_12 = arith.constant 0 : index
    %c0_13 = arith.constant 0 : index
    %23 = vector.load %arg5[%c0_12, %c0_13] : memref<1x32xf32, #tpu.memory_space<vmem>>, vector<1x32xf32>
    %24 = vector.broadcast %23 : vector<1x32xf32> to vector<64x32xf32>
    %25 = arith.addf %22, %24 : vector<64x32xf32>
    %26 = arith.addf %25, %0 : vector<64x32xf32>
    %c0_14 = arith.constant 0 : index
    %c0_15 = arith.constant 0 : index
    %27 = vector.load %arg6[%c0_14, %c0_15] : memref<1x32xf32, #tpu.memory_space<vmem>>, vector<1x32xf32>
    %28 = vector.broadcast %27 : vector<1x32xf32> to vector<64x32xf32>
    %29 = arith.mulf %26, %28 : vector<64x32xf32>
    %c0_16 = arith.constant 0 : index
    %c0_17 = arith.constant 0 : index
    %30 = vector.load %arg7[%c0_16, %c0_17] : memref<1x32xf32, #tpu.memory_space<vmem>>, vector<1x32xf32>
    %31 = vector.broadcast %30 : vector<1x32xf32> to vector<64x32xf32>
    %32 = arith.addf %29, %31 : vector<64x32xf32>
    %c0_18 = arith.constant 0 : index
    %c0_19 = arith.constant 0 : index
    %33 = vector.load %arg8[%c0_18, %c0_19] : memref<64x32xf32, #tpu.memory_space<vmem>>, vector<64x32xf32>
    tpu.vector_store %arg8[%c0_18, %c0_19], %32 {strides = array<i32>} : memref<64x32xf32, #tpu.memory_space<vmem>>, vector<64x32xf32>,
    return
  }
  func.func @transform_0(%arg0: i32) -> (i32, i32) {
    %c0_i32 = arith.constant 0 : i32
    %c0_i32_0 = arith.constant 0 : i32
    return %arg0, %c0_i32 : i32, i32
  }
  func.func @transform_1(%arg0: i32) -> (i32, i32) {
    %c0_i32 = arith.constant 0 : i32
    %c0_i32_0 = arith.constant 0 : i32
    %c0_i32_1 = arith.constant 0 : i32
    return %c0_i32, %c0_i32_0 : i32, i32
  }
  func.func @transform_2(%arg0: i32) -> (i32, i32) {
    %c0_i32 = arith.constant 0 : i32
    %c0_i32_0 = arith.constant 0 : i32
    %c0_i32_1 = arith.constant 0 : i32
    return %c0_i32, %c0_i32_0 : i32, i32
  }
  func.func @transform_3(%arg0: i32) -> (i32, i32) {
    %c0_i32 = arith.constant 0 : i32
    %c0_i32_0 = arith.constant 0 : i32
    %c0_i32_1 = arith.constant 0 : i32
    return %c0_i32, %c0_i32_0 : i32, i32
  }
  func.func @transform_4(%arg0: i32) -> (i32, i32) {
    %c0_i32 = arith.constant 0 : i32
    %c0_i32_0 = arith.constant 0 : i32
    %c0_i32_1 = arith.constant 0 : i32
    return %c0_i32, %c0_i32_0 : i32, i32
  }
  func.func @transform_5(%arg0: i32) -> (i32, i32) {
    %c0_i32 = arith.constant 0 : i32
    %c0_i32_0 = arith.constant 0 : i32
    %c0_i32_1 = arith.constant 0 : i32
    return %c0_i32, %c0_i32_0 : i32, i32
  }
  func.func @transform_6(%arg0: i32) -> (i32, i32) {
    %c0_i32 = arith.constant 0 : i32
    %c0_i32_0 = arith.constant 0 : i32
    %c0_i32_1 = arith.constant 0 : i32
    return %c0_i32, %c0_i32_0 : i32, i32
  }
  func.func @transform_7(%arg0: i32) -> (i32, i32) {
    %c0_i32 = arith.constant 0 : i32
    %c0_i32_0 = arith.constant 0 : i32
    return %arg0, %c0_i32 : i32, i32
  }
}

</mosaic_0001>

<llo_original>
// kernel: _lambda_.5
$region0: #{_lambda_.5}
  #allocation0 [shape = 'u32[]', space=smem, size = 0x4, offset = 0x4, fixed_abs, tag = 'smem constant byte address 0x4 - core index']
  #allocation1 [shape = 'u32[144,128]{1,0:T(1,128)}', space=vmem, size = 0x12000, scoped, tag = 'internal scratch']
  %s0 = inlined_call_operand.vmem [shape: f32[128,32], index: 0, kind: input, shape index: {}]
  %s1 = inlined_call_operand.vmem [shape: bf16[32,64], index: 1, kind: input, shape index: {}]
  %s2 = inlined_call_operand.vmem [shape: f32[1,64], index: 2, kind: input, shape index: {}]
  %s3 = inlined_call_operand.vmem [shape: bf16[64,32], index: 3, kind: input, shape index: {}]
  %s4 = inlined_call_operand.vmem [shape: f32[1,32], index: 4, kind: input, shape index: {}]
  %s5 = inlined_call_operand.vmem [shape: f32[1,32], index: 5, kind: input, shape index: {}]
  %s6 = inlined_call_operand.vmem [shape: f32[1,32], index: 6, kind: input, shape index: {}]
  %s7 = inlined_call_operand.hbm [shape: f32[128,32], index: 7, kind: output, shape index: {}]
  %s8 = sld [smem:[#allocation0]]
  $region61: #{_lambda_.5} parent=0
    _
  %s10 = ssub.s32 1, %s8
  %s11 = scalar_select 0, %s10, %s8
  $region1: #{_lambda_.5} parent=0
    #allocation2 [shape = 'u8[65536]{0}', space=vmem, size = 0x10000, scoped, tag = 'output window, operand 0']
    #allocation3 [shape = 's32[2]{0}', space=sflag, size = 0x8, scoped, tag = 'scoped memory for _lambda_.5']
    %12 = vsyncpa [#allocation3], 0
    %s13 = scalar_lea.sflag [#allocation3], 1
    %14 = vsyncpa %s13, 0
    loop: start=0, step=1, limit=4
    $region2: #{_lambda_.5} parent=1 // loop_pre_header
      _
    $region3: #{_lambda_.5} parent=1 // loop_header
      %s16 = sphi 0, %s20
      %p17 = scmp.ge.s32.totalorder %s16, 4
      %s26 = sphi 0, %s28
      %s29 = sphi 0, %s26
      %s30 = sphi 0, %s29
      %s46 = sphi 0, %s30
      %s50 = sphi 0, %s50
      %s52 = sphi 0, %s50
      %s53 = sphi 0, %s52
      %s67 = sphi 0, %s53
      %s71 = sphi 0, %s71
      %s73 = sphi 0, %s71
      %s74 = sphi 0, %s73
      %s88 = sphi 0, %s74
      %s92 = sphi 0, %s92
      %s94 = sphi 0, %s92
      %s95 = sphi 0, %s94
      %s109 = sphi 0, %s95
      %s113 = sphi 0, %s113
      %s115 = sphi 0, %s113
      %s116 = sphi 0, %s115
      %s130 = sphi 0, %s116
      %s134 = sphi 0, %s134
      %s136 = sphi 0, %s134
      %s137 = sphi 0, %s136
      %s151 = sphi 0, %s137
      %s155 = sphi 0, %s155
      %s157 = sphi 0, %s155
      %s158 = sphi 0, %s157
      %s172 = sphi 0, %s158
      %s178 = sphi 0, %s180
      %s181 = sphi 0, %s178
      %s182 = sphi 0, %s181
      %s198 = sphi 0, %s182
    $region4: #{_lambda_.5} parent=1 // loop_header_branch
      %19 = sbr.rel (%p17) target = $region8
    $region5: #{_lambda_.5} parent=1 // loop_body
      %s21 = ssub.s32 %s16, 1
      %s22 = ssub.s32 %s16, 2
      %s23 = sadd.s32 %s16, 1
      %s24 = ssub.s32 %s16, %s23
      %p25 = scmp.eq.s32.totalorder %s24, 0
      %s27 = sadd.s32 %s26, 1
      %s28 = scalar_select %p25, %s26, %s27
      %p31 = pneg %p25
      %p32 = scmp.eq.s32.totalorder %s16, 1
      %p33 = por %p31, %p32
      %p34 = scmp.ne.s32.totalorder %s26, %s29
      %p35 = scmp.eq.s32.totalorder %s16, 0
      %p36 = por %p34, %p35
      %p37 = scmp.ne.s32.totalorder %s26, %s29
      %p38 = scmp.eq.s32.totalorder %s21, 1
      %p39 = por %p37, %p38
      %p40 = scmp.ne.s32.totalorder %s29, %s30
      %p41 = scmp.eq.s32.totalorder %s21, 0
      %p42 = por %p40, %p41
      %p43 = scmp.ne.s32.totalorder %s29, %s30
      %p44 = scmp.eq.s32.totalorder %s22, 1
      %p45 = por %p43, %p44
      %p47 = scmp.ne.s32.totalorder %s30, %s46
      %p48 = scmp.eq.s32.totalorder %s22, 0
      %p49 = por %p47, %p48
      %s51 = sadd.s32 %s50, 1
      %p54 = scmp.eq.s32.totalorder %s16, 1
      %p55 = scmp.ne.s32.totalorder %s50, %s52
      %p56 = scmp.eq.s32.totalorder %s16, 0
      %p57 = por %p55, %p56
      %p58 = scmp.ne.s32.totalorder %s50, %s52
      %p59 = scmp.eq.s32.totalorder %s21, 1
      %p60 = por %p58, %p59
      %p61 = scmp.ne.s32.totalorder %s52, %s53
      %p62 = scmp.eq.s32.totalorder %s21, 0
      %p63 = por %p61, %p62
      %p64 = scmp.ne.s32.totalorder %s52, %s53
      %p65 = scmp.eq.s32.totalorder %s22, 1
      %p66 = por %p64, %p65
      %p68 = scmp.ne.s32.totalorder %s53, %s67
      %p69 = scmp.eq.s32.totalorder %s22, 0
      %p70 = por %p68, %p69
      %s72 = sadd.s32 %s71, 1
      %p75 = scmp.eq.s32.totalorder %s16, 1
      %p76 = scmp.ne.s32.totalorder %s71, %s73
      %p77 = scmp.eq.s32.totalorder %s16, 0
      %p78 = por %p76, %p77
      %p79 = scmp.ne.s32.totalorder %s71, %s73
      %p80 = scmp.eq.s32.totalorder %s21, 1
      %p81 = por %p79, %p80
      %p82 = scmp.ne.s32.totalorder %s73, %s74
      %p83 = scmp.eq.s32.totalorder %s21, 0
      %p84 = por %p82, %p83
      %p85 = scmp.ne.s32.totalorder %s73, %s74
      %p86 = scmp.eq.s32.totalorder %s22, 1
      %p87 = por %p85, %p86
      %p89 = scmp.ne.s32.totalorder %s74, %s88
      %p90 = scmp.eq.s32.totalorder %s22, 0
      %p91 = por %p89, %p90
      %s93 = sadd.s32 %s92, 1
      %p96 = scmp.eq.s32.totalorder %s16, 1
      %p97 = scmp.ne.s32.totalorder %s92, %s94
      %p98 = scmp.eq.s32.totalorder %s16, 0
      %p99 = por %p97, %p98
      %p100 = scmp.ne.s32.totalorder %s92, %s94
      %p101 = scmp.eq.s32.totalorder %s21, 1
      %p102 = por %p100, %p101
      %p103 = scmp.ne.s32.totalorder %s94, %s95
      %p104 = scmp.eq.s32.totalorder %s21, 0
      %p105 = por %p103, %p104
      %p106 = scmp.ne.s32.totalorder %s94, %s95
      %p107 = scmp.eq.s32.totalorder %s22, 1
      %p108 = por %p106, %p107
      %p110 = scmp.ne.s32.totalorder %s95, %s109
      %p111 = scmp.eq.s32.totalorder %s22, 0
      %p112 = por %p110, %p111
      %s114 = sadd.s32 %s113, 1
      %p117 = scmp.eq.s32.totalorder %s16, 1
      %p118 = scmp.ne.s32.totalorder %s113, %s115
      %p119 = scmp.eq.s32.totalorder %s16, 0
      %p120 = por %p118, %p119
      %p121 = scmp.ne.s32.totalorder %s113, %s115
      %p122 = scmp.eq.s32.totalorder %s21, 1
      %p123 = por %p121, %p122
      %p124 = scmp.ne.s32.totalorder %s115, %s116
      %p125 = scmp.eq.s32.totalorder %s21, 0
      %p126 = por %p124, %p125
      %p127 = scmp.ne.s32.totalorder %s115, %s116
      %p128 = scmp.eq.s32.totalorder %s22, 1
      %p129 = por %p127, %p128
      %p131 = scmp.ne.s32.totalorder %s116, %s130
      %p132 = scmp.eq.s32.totalorder %s22, 0
      %p133 = por %p131, %p132
      %s135 = sadd.s32 %s134, 1
      %p138 = scmp.eq.s32.totalorder %s16, 1
      %p139 = scmp.ne.s32.totalorder %s134, %s136
      %p140 = scmp.eq.s32.totalorder %s16, 0
      %p141 = por %p139, %p140
      %p142 = scmp.ne.s32.totalorder %s134, %s136
      %p143 = scmp.eq.s32.totalorder %s21, 1
      %p144 = por %p142, %p143
      %p145 = scmp.ne.s32.totalorder %s136, %s137
      %p146 = scmp.eq.s32.totalorder %s21, 0
      %p147 = por %p145, %p146
      %p148 = scmp.ne.s32.totalorder %s136, %s137
      %p149 = scmp.eq.s32.totalorder %s22, 1
      %p150 = por %p148, %p149
      %p152 = scmp.ne.s32.totalorder %s137, %s151
      %p153 = scmp.eq.s32.totalorder %s22, 0
      %p154 = por %p152, %p153
      %s156 = sadd.s32 %s155, 1
      %p159 = scmp.eq.s32.totalorder %s16, 1
      %p160 = scmp.ne.s32.totalorder %s155, %s157
      %p161 = scmp.eq.s32.totalorder %s16, 0
      %p162 = por %p160, %p161
      %p163 = scmp.ne.s32.totalorder %s155, %s157
      %p164 = scmp.eq.s32.totalorder %s21, 1
      %p165 = por %p163, %p164
      %p166 = scmp.ne.s32.totalorder %s157, %s158
      %p167 = scmp.eq.s32.totalorder %s21, 0
      %p168 = por %p166, %p167
      %p169 = scmp.ne.s32.totalorder %s157, %s158
      %p170 = scmp.eq.s32.totalorder %s22, 1
      %p171 = por %p169, %p170
      %p173 = scmp.ne.s32.totalorder %s158, %s172
      %p174 = scmp.eq.s32.totalorder %s22, 0
      %p175 = por %p173, %p174
      %s176 = ssub.s32 %s16, %s23
      %p177 = scmp.eq.s32.totalorder %s176, 0
      %s179 = sadd.s32 %s178, 1
      %s180 = scalar_select %p177, %s178, %s179
      %p183 = pneg %p177
      %p184 = scmp.eq.s32.totalorder %s16, 1
      %p185 = por %p183, %p184
      %p186 = scmp.ne.s32.totalorder %s178, %s181
      %p187 = scmp.eq.s32.totalorder %s16, 0
      %p188 = por %p186, %p187
      %p189 = scmp.ne.s32.totalorder %s178, %s181
      %p190 = scmp.eq.s32.totalorder %s21, 1
      %p191 = por %p189, %p190
      %p192 = scmp.ne.s32.totalorder %s181, %s182
      %p193 = scmp.eq.s32.totalorder %s21, 0
      %p194 = por %p192, %p193
      %p195 = scmp.ne.s32.totalorder %s181, %s182
      %p196 = scmp.eq.s32.totalorder %s22, 1
      %p197 = por %p195, %p196
      %p199 = scmp.ne.s32.totalorder %s182, %s198
      %p200 = scmp.eq.s32.totalorder %s22, 0
      %p201 = por %p199, %p200
      %p202 = scmp.le.s32.totalorder 1, %s16
      %p203 = scmp.lt.s32.totalorder %s16, 3
      %p204 = pnand %p202, %p203
      %p205 = pneg %p204
      // Predicated region
      $region9: #{_lambda_.5} parent=5 // pred_check
        _
      $region10: #{_lambda_.5} parent=5 // pred_check_branch
        %207 = sbr.rel (%p204) target = $region12
      $region11: #{_lambda_.5} parent=5 // pred_region
        %s208 = ssub.s32 %s16, 1
        // Predicated region
        $region13: #{_lambda_.5} parent=11 // pred_check
          %p209 = pneg %p63
        $region14: #{_lambda_.5} parent=11 // pred_check_branch
          %211 = sbr.rel (%p209) target = $region16
        $region15: #{_lambda_.5} parent=11 // pred_region
          _
        $region16: #{_lambda_.5} parent=11 // pred_fallthru
          _
        // Predicated region
        $region17: #{_lambda_.5} parent=11 // pred_check
          %p212 = pneg %p84
        $region18: #{_lambda_.5} parent=11 // pred_check_branch
          %214 = sbr.rel (%p212) target = $region20
        $region19: #{_lambda_.5} parent=11 // pred_region
          _
        $region20: #{_lambda_.5} parent=11 // pred_fallthru
          _
        // Predicated region
        $region21: #{_lambda_.5} parent=11 // pred_check
          %p215 = pneg %p105
        $region22: #{_lambda_.5} parent=11 // pred_check_branch
          %217 = sbr.rel (%p215) target = $region24
        $region23: #{_lambda_.5} parent=11 // pred_region
          _
        $region24: #{_lambda_.5} parent=11 // pred_fallthru
          _
        // Predicated region
        $region25: #{_lambda_.5} parent=11 // pred_check
          %p218 = pneg %p126
        $region26: #{_lambda_.5} parent=11 // pred_check_branch
          %220 = sbr.rel (%p218) target = $region28
        $region27: #{_lambda_.5} parent=11 // pred_region
          _
        $region28: #{_lambda_.5} parent=11 // pred_fallthru
          _
        // Predicated region
        $region29: #{_lambda_.5} parent=11 // pred_check
          %p221 = pneg %p147
        $region30: #{_lambda_.5} parent=11 // pred_check_branch
          %223 = sbr.rel (%p221) target = $region32
        $region31: #{_lambda_.5} parent=11 // pred_region
          _
        $region32: #{_lambda_.5} parent=11 // pred_fallthru
          _
        // Predicated region
        $region33: #{_lambda_.5} parent=11 // pred_check
          %p224 = pneg %p168
        $region34: #{_lambda_.5} parent=11 // pred_check_branch
          %226 = sbr.rel (%p224) target = $region36
        $region35: #{_lambda_.5} parent=11 // pred_region
          _
        $region36: #{_lambda_.5} parent=11 // pred_fallthru
          _
      $region12: #{_lambda_.5} parent=5 // pred_fallthru
        _
      %p227 = scmp.lt.s32.totalorder %s16, 2
      // Predicated region
      $region37: #{_lambda_.5} parent=5 // pred_check
        %p228 = pneg %p227
      $region38: #{_lambda_.5} parent=5 // pred_check_branch
        %230 = sbr.rel (%p228) target = $region40
      $region39: #{_lambda_.5} parent=5 // pred_region
        // Predicated region
        $region41: #{_lambda_.5} parent=39 // pred_check
          %p231 = pneg %p36
        $region42: #{_lambda_.5} parent=39 // pred_check_branch
          %233 = sbr.rel (%p231) target = $region44
        $region43: #{_lambda_.5} parent=39 // pred_region
          %s234 = smul.u32 8, %s16
          %p235 = scmp.lt.s32.totalorder %s234, 15
          %s236 = scalar_select %p235, %s234, 15
          %s237 = smul.addr %s236, 8
          %s238 = scalar_lea.vmem %s0, %s237
          %s239 = smul.u32 8, %s16
        $region44: #{_lambda_.5} parent=39 // pred_fallthru
          _
      $region40: #{_lambda_.5} parent=5 // pred_fallthru
        _
      %p240 = scmp.le.s32.totalorder 1, %s16
      %p241 = scmp.lt.s32.totalorder %s16, 3
      %p242 = pnand %p240, %p241
      %p243 = pneg %p242
      // Predicated region
      $region45: #{_lambda_.5} parent=5 // pred_check
        _
      $region46: #{_lambda_.5} parent=5 // pred_check_branch
        %245 = sbr.rel (%p242) target = $region48
      $region47: #{_lambda_.5} parent=5 // pred_region
        %s246 = ssub.s32 %s16, 1
        %s247 = smul.u32 8, %s21
        %p248 = scmp.lt.s32.totalorder %s247, 15
        %s249 = scalar_select %p248, %s247, 15
        %s250 = smul.addr %s249, 8
        %s251 = scalar_lea.vmem %s0, %s250
        %p252 = pneg %p42
        %p253 = pneg %p39
        %p254 = pneg %p63
        %p255 = pneg %p60
        %p256 = pneg %p84
        %p257 = pneg %p81
        %p258 = pneg %p105
        %p259 = pneg %p102
        %p260 = pneg %p126
        %p261 = pneg %p123
        %p262 = pneg %p147
        %p263 = pneg %p144
        %p264 = pneg %p168
        %p265 = pneg %p165
        %p266 = pneg %p194
        %p267 = pneg %p191
        %s268 = sand.u32 %s181, 1
        %s269 = scalar_lea.sflag [#allocation3], %s268
        %s270 = sand.u32 %s181, 1
        %s271 = smul.addr %s270, 64
        %s272 = scalar_lea.vmem [#allocation2], %s271
        %s273 = smul.u32 8, %s21
        %p274 = scmp.lt.s32.totalorder %s273, 15
        %s275 = scalar_select %p274, %s273, 15
        %s276 = smul.addr %s275, 8
        %s277 = scalar_lea.vmem %s0, %s276
        %s278 = smul.u32 8, %s21
        %s279 = smul.u32 8, %s21
        %v281 = vld [vmem:[%s277] sm:$0xff]
        %v282 = vld [vmem:[%s277 + $0x8] sm:$0xff]
        %v283 = vld [vmem:[%s277 + $0x10] sm:$0xff]
        %v284 = vld [vmem:[%s277 + $0x18] sm:$0xff]
        %v285 = vld [vmem:[%s277 + $0x20] sm:$0xff]
        %v286 = vld [vmem:[%s277 + $0x28] sm:$0xff]
        %v287 = vld [vmem:[%s277 + $0x30] sm:$0xff]
        %v288 = vld [vmem:[%s277 + $0x38] sm:$0xff]
        %v289 = vpack.c.bf16 %v282, %v281
        %v290 = vpack.c.bf16 %v284, %v283
        %v291 = vpack.c.bf16 %v286, %v285
        %v292 = vpack.c.bf16 %v288, %v287
        %v293 = vld [vmem:[%s1] sm:$0xf]
        %v294 = vld [vmem:[%s1 + $0x4] sm:$0xf]
        %v295 = vld [vmem:[%s1 + $0x8] sm:$0xf]
        %v296 = vld [vmem:[%s1 + $0xc] sm:$0xf]
        %v297 = vld [vmem:[%s2] sm:$0x1]
        %v299 = vlaneseq
        %v300 = vshrl.u32 %v299, 7
        %v301 = vsub.s32 0, %v300
        %v302 = vrot.slane %v297, %v301
        %v308 = vunpack.c.l.b16 %v293
        %v309 = vunpack.c.l.b16 %v294
        %v310 = vunpack.c.l.b16 %v295
        %v311 = vunpack.c.l.b16 %v296
        %v312 = vpack.c.b16 %v309, %v308
        %v313 = vpack.c.b16 %v311, %v310
        %vm316 = vcmask 261120
        %v318 = vsel %vm316, %v289, 0
        %v321 = vsel %vm316, %v290, 0
        %v324 = vsel %vm316, %v291, 0
        %v327 = vsel %vm316, %v292, 0
        %329 = vmatprep.subr.bf16.mxu0 0
        %330 = vmatpush1.bf16.msra.mxu0 %v312
        %331 = vmatprep.subr.bf16.mxu0 0
        %332 = vmatpush1.bf16.msra.mxu0 %v313
        %333 = vmatprep.subr.bf16.mxu0 0
        %334 = vmatpush1.bf16.msra.mxu0 0
        %335 = vmatprep.subr.bf16.mxu0 0
        %336 = vmatpush1.bf16.msra.mxu0 0
        %337 = vmatprep.subr.bf16.mxu0 0
        %338 = vmatpush1.bf16.msra.mxu0 0
        %339 = vmatprep.subr.bf16.mxu0 0
        %340 = vmatpush1.bf16.msra.mxu0 0
        %341 = vmatprep.subr.bf16.mxu0 0
        %342 = vmatpush1.bf16.msra.mxu0 0
        %343 = vmatprep.subr.bf16.mxu0 0
        %344 = vmatpush1.bf16.msra.mxu0 0
        %345 = vmatprep.subr.bf16.mxu0 0
        %346 = vmatpush1.bf16.msra.mxu0 0
        %347 = vmatprep.subr.bf16.mxu0 0
        %348 = vmatpush1.bf16.msra.mxu0 0
        %349 = vmatprep.subr.bf16.mxu0 0
        %350 = vmatpush1.bf16.msra.mxu0 0
        %351 = vmatprep.subr.bf16.mxu0 0
        %352 = vmatpush1.bf16.msra.mxu0 0
        %353 = vmatprep.subr.bf16.mxu0 0
        %354 = vmatpush1.bf16.msra.mxu0 0
        %355 = vmatprep.subr.bf16.mxu0 0
        %356 = vmatpush1.bf16.msra.mxu0 0
        %357 = vmatprep.subr.bf16.mxu0 0
        %358 = vmatpush1.bf16.msra.mxu0 0
        %359 = vmatprep.subr.bf16.mxu0 0
        %360 = vmatpush1.bf16.msra.mxu0 0
        %361 = vmatprep.mubr.bf16.mxu0 0
        %362 = vmatmul.mubr.bf16.gmra.mrb[0].mxu0 %v318
        %v363 = vpop.f32.mrb[0].mxu0
        %v364 = vadd.f32 %v302, %v363
        %v365 = vpop.f32.mrb[0].mxu0
        %v366 = vpop.f32.mrb[0].mxu0
        %v367 = vadd.f32 %v302, %v366
        %v368 = vpop.f32.mrb[0].mxu0
        %369 = vmatprep.mubr.bf16.mxu0 0
        %370 = vmatmul.mubr.bf16.gmra.mrb[0].mxu0 %v321
        %v371 = vpop.f32.mrb[0].mxu0
        %v372 = vadd.f32 %v302, %v371
        %v373 = vpop.f32.mrb[0].mxu0
        %v374 = vpop.f32.mrb[0].mxu0
        %v375 = vadd.f32 %v302, %v374
        %v376 = vpop.f32.mrb[0].mxu0
        %377 = vmatprep.mubr.bf16.mxu0 0
        %378 = vmatmul.mubr.bf16.gmra.mrb[0].mxu0 %v324
        %v379 = vpop.f32.mrb[0].mxu0
        %v380 = vadd.f32 %v302, %v379
        %v381 = vpop.f32.mrb[0].mxu0
        %v382 = vpop.f32.mrb[0].mxu0
        %v383 = vadd.f32 %v302, %v382
        %v384 = vpop.f32.mrb[0].mxu0
        %385 = vmatprep.mubr.bf16.mxu0 0
        %386 = vmatmul.mubr.bf16.gmra.mrb[0].mxu0 %v327
        %v387 = vpop.f32.mrb[0].mxu0
        %v388 = vadd.f32 %v302, %v387
        %v389 = vpop.f32.mrb[0].mxu0
        %v390 = vpop.f32.mrb[0].mxu0
        %v391 = vadd.f32 %v302, %v390
        %v392 = vpop.f32.mrb[0].mxu0
        %393 = vdwg.mxu0
        %v394 = vmul.f32 %v364, 0.5
        %v395 = vmul.f32 %v367, 0.5
        %v396 = vmul.f32 %v372, 0.5
        %v397 = vmul.f32 %v375, 0.5
        %v398 = vmul.f32 %v380, 0.5
        %v399 = vmul.f32 %v383, 0.5
        %v400 = vmul.f32 %v388, 0.5
        %v401 = vmul.f32 %v391, 0.5
        %v402 = vmul.f32 %v364, 0.044715
        %v403 = vmul.f32 %v367, 0.044715
        %v404 = vmul.f32 %v372, 0.044715
        %v405 = vmul.f32 %v375, 0.044715
        %v406 = vmul.f32 %v380, 0.044715
        %v407 = vmul.f32 %v383, 0.044715
        %v408 = vmul.f32 %v388, 0.044715
        %v409 = vmul.f32 %v391, 0.044715
        %v410 = vmul.f32 %v402, %v364
        %v411 = vmul.f32 %v403, %v367
        %v412 = vmul.f32 %v404, %v372
        %v413 = vmul.f32 %v405, %v375
        %v414 = vmul.f32 %v406, %v380
        %v415 = vmul.f32 %v407, %v383
        %v416 = vmul.f32 %v408, %v388
        %v417 = vmul.f32 %v409, %v391
        %v418 = vmul.f32 %v410, %v364
        %v419 = vmul.f32 %v411, %v367
        %v420 = vmul.f32 %v412, %v372
        %v421 = vmul.f32 %v413, %v375
        %v422 = vmul.f32 %v414, %v380
        %v423 = vmul.f32 %v415, %v383
        %v424 = vmul.f32 %v416, %v388
        %v425 = vmul.f32 %v417, %v391
        %v426 = vadd.f32 %v364, %v418
        %v427 = vadd.f32 %v367, %v419
        %v428 = vadd.f32 %v372, %v420
        %v429 = vadd.f32 %v375, %v421
        %v430 = vadd.f32 %v380, %v422
        %v431 = vadd.f32 %v383, %v423
        %v432 = vadd.f32 %v388, %v424
        %v433 = vadd.f32 %v391, %v425
        %v434 = vmul.f32 %v426, 0.7978846
        %v435 = vmul.f32 %v427, 0.7978846
        %v436 = vmul.f32 %v428, 0.7978846
        %v437 = vmul.f32 %v429, 0.7978846
        %v438 = vmul.f32 %v430, 0.7978846
        %v439 = vmul.f32 %v431, 0.7978846
        %v440 = vmul.f32 %v432, 0.7978846
        %v441 = vmul.f32 %v433, 0.7978846
        %v442 = vtanh.pop %v434
        %v443 = vtanh.pop %v435
        %v444 = vtanh.pop %v436
        %v445 = vtanh.pop %v437
        %v446 = vtanh.pop %v438
        %v447 = vtanh.pop %v439
        %v448 = vtanh.pop %v440
        %v449 = vtanh.pop %v441
        %v450 = vadd.f32 %v442, 1.0
        %v451 = vadd.f32 %v443, 1.0
        %v452 = vadd.f32 %v444, 1.0
        %v453 = vadd.f32 %v445, 1.0
        %v454 = vadd.f32 %v446, 1.0
        %v455 = vadd.f32 %v447, 1.0
        %v456 = vadd.f32 %v448, 1.0
        %v457 = vadd.f32 %v449, 1.0
        %v458 = vmul.f32 %v394, %v450
        %v459 = vmul.f32 %v395, %v451
        %v460 = vmul.f32 %v396, %v452
        %v461 = vmul.f32 %v397, %v453
        %v462 = vmul.f32 %v398, %v454
        %v463 = vmul.f32 %v399, %v455
        %v464 = vmul.f32 %v400, %v456
        %v465 = vmul.f32 %v401, %v457
        %v466 = vpack.c.bf16 %v459, %v458
        %v467 = vpack.c.bf16 %v461, %v460
        %v468 = vpack.c.bf16 %v463, %v462
        %v469 = vpack.c.bf16 %v465, %v464
        %v470 = vld [vmem:[%s3] sm:$0xf]
        %v471 = vld [vmem:[%s3 + $0x4] sm:$0xf]
        %v472 = vld [vmem:[%s3 + $0x8] sm:$0xf]
        %v473 = vld [vmem:[%s3 + $0xc] sm:$0xf]
        %v474 = vld [vmem:[%s3 + $0x10] sm:$0xf]
        %v475 = vld [vmem:[%s3 + $0x14] sm:$0xf]
        %v476 = vld [vmem:[%s3 + $0x18] sm:$0xf]
        %v477 = vld [vmem:[%s3 + $0x1c] sm:$0xf]
        %v478 = vld [vmem:[%s4] sm:$0x1]
        %v480 = vlaneseq
        %v481 = vshrl.u32 %v480, 7
        %v482 = vsub.s32 0, %v481
        %v483 = vrot.slane %v478, %v482
        %v493 = vunpack.c.l.b16 %v470
        %v494 = vunpack.c.l.b16 %v471
        %v495 = vunpack.c.l.b16 %v472
        %v496 = vunpack.c.l.b16 %v473
        %v497 = vunpack.c.l.b16 %v474
        %v498 = vunpack.c.l.b16 %v475
        %v499 = vunpack.c.l.b16 %v476
        %v500 = vunpack.c.l.b16 %v477
        %v501 = vpack.c.b16 %v494, %v493
        %v502 = vpack.c.b16 %v496, %v495
        %v503 = vpack.c.b16 %v498, %v497
        %v504 = vpack.c.b16 %v500, %v499
        %vm509 = vcmask 523264
        %v511 = vsel %vm509, %v466, 0
        %v514 = vsel %vm509, %v467, 0
        %v517 = vsel %vm509, %v468, 0
        %v520 = vsel %vm509, %v469, 0
        %522 = vmatprep.subr.bf16.mxu0 0
        %523 = vmatpush1.bf16.msra.mxu0 %v501
        %524 = vmatprep.subr.bf16.mxu0 0
        %525 = vmatpush1.bf16.msra.mxu0 %v502
        %526 = vmatprep.subr.bf16.mxu0 0
        %527 = vmatpush1.bf16.msra.mxu0 %v503
        %528 = vmatprep.subr.bf16.mxu0 0
        %529 = vmatpush1.bf16.msra.mxu0 %v504
        %530 = vmatprep.subr.bf16.mxu0 0
        %531 = vmatpush1.bf16.msra.mxu0 0
        %532 = vmatprep.subr.bf16.mxu0 0
        %533 = vmatpush1.bf16.msra.mxu0 0
        %534 = vmatprep.subr.bf16.mxu0 0
        %535 = vmatpush1.bf16.msra.mxu0 0
        %536 = vmatprep.subr.bf16.mxu0 0
        %537 = vmatpush1.bf16.msra.mxu0 0
        %538 = vmatprep.subr.bf16.mxu0 0
        %539 = vmatpush1.bf16.msra.mxu0 0
        %540 = vmatprep.subr.bf16.mxu0 0
        %541 = vmatpush1.bf16.msra.mxu0 0
        %542 = vmatprep.subr.bf16.mxu0 0
        %543 = vmatpush1.bf16.msra.mxu0 0
        %544 = vmatprep.subr.bf16.mxu0 0
        %545 = vmatpush1.bf16.msra.mxu0 0
        %546 = vmatprep.subr.bf16.mxu0 0
        %547 = vmatpush1.bf16.msra.mxu0 0
        %548 = vmatprep.subr.bf16.mxu0 0
        %549 = vmatpush1.bf16.msra.mxu0 0
        %550 = vmatprep.subr.bf16.mxu0 0
        %551 = vmatpush1.bf16.msra.mxu0 0
        %552 = vmatprep.subr.bf16.mxu0 0
        %553 = vmatpush1.bf16.msra.mxu0 0
        %554 = vmatprep.mubr.bf16.mxu0 0
        %555 = vmatmul.mubr.bf16.gmra.mrb[0].mxu0 %v511
        %v556 = vpop.f32.mrb[0].mxu0
        %v557 = vadd.f32 %v483, %v556
        %v558 = vpop.f32.mrb[0].mxu0
        %v559 = vpop.f32.mrb[0].mxu0
        %v560 = vadd.f32 %v483, %v559
        %v561 = vpop.f32.mrb[0].mxu0
        %562 = vmatprep.mubr.bf16.mxu0 0
        %563 = vmatmul.mubr.bf16.gmra.mrb[0].mxu0 %v514
        %v564 = vpop.f32.mrb[0].mxu0
        %v565 = vadd.f32 %v483, %v564
        %v566 = vpop.f32.mrb[0].mxu0
        %v567 = vpop.f32.mrb[0].mxu0
        %v568 = vadd.f32 %v483, %v567
        %v569 = vpop.f32.mrb[0].mxu0
        %570 = vmatprep.mubr.bf16.mxu0 0
        %571 = vmatmul.mubr.bf16.gmra.mrb[0].mxu0 %v517
        %v572 = vpop.f32.mrb[0].mxu0
        %v573 = vadd.f32 %v483, %v572
        %v574 = vpop.f32.mrb[0].mxu0
        %v575 = vpop.f32.mrb[0].mxu0
        %v576 = vadd.f32 %v483, %v575
        %v577 = vpop.f32.mrb[0].mxu0
        %578 = vmatprep.mubr.bf16.mxu0 0
        %579 = vmatmul.mubr.bf16.gmra.mrb[0].mxu0 %v520
        %v580 = vpop.f32.mrb[0].mxu0
        %v581 = vadd.f32 %v483, %v580
        %v582 = vpop.f32.mrb[0].mxu0
        %v583 = vpop.f32.mrb[0].mxu0
        %v584 = vadd.f32 %v483, %v583
        %v585 = vpop.f32.mrb[0].mxu0
        %586 = vdwg.mxu0
        %v587 = vadd.f32 %v557, %v281
        %v588 = vadd.f32 %v560, %v282
        %v589 = vadd.f32 %v565, %v283
        %v590 = vadd.f32 %v568, %v284
        %v591 = vadd.f32 %v573, %v285
        %v592 = vadd.f32 %v576, %v286
        %v593 = vadd.f32 %v581, %v287
        %v594 = vadd.f32 %v584, %v288
        %v595 = vld [vmem:[%s5] sm:$0x1]
        %v597 = vlaneseq
        %v598 = vshrl.u32 %v597, 7
        %v599 = vsub.s32 0, %v598
        %v600 = vrot.slane %v595, %v599
        %v602 = vmul.f32 %v587, %v600
        %v603 = vmul.f32 %v588, %v600
        %v604 = vmul.f32 %v589, %v600
        %v605 = vmul.f32 %v590, %v600
        %v606 = vmul.f32 %v591, %v600
        %v607 = vmul.f32 %v592, %v600
        %v608 = vmul.f32 %v593, %v600
        %v609 = vmul.f32 %v594, %v600
        %v610 = vld [vmem:[%s6] sm:$0x1]
        %v612 = vlaneseq
        %v613 = vshrl.u32 %v612, 7
        %v614 = vsub.s32 0, %v613
        %v615 = vrot.slane %v610, %v614
        %v617 = vadd.f32 %v602, %v615
        %v618 = vadd.f32 %v603, %v615
        %v619 = vadd.f32 %v604, %v615
        %v620 = vadd.f32 %v605, %v615
        %v621 = vadd.f32 %v606, %v615
        %v622 = vadd.f32 %v607, %v615
        %v623 = vadd.f32 %v608, %v615
        %v624 = vadd.f32 %v609, %v615
        %625 = vst.msk [vmem:[%s272] sm:$0xff] %vm316, %v617
        %626 = vst.msk [vmem:[%s272 + $0x8] sm:$0xff] %vm316, %v618
        %627 = vst.msk [vmem:[%s272 + $0x10] sm:$0xff] %vm316, %v619
        %628 = vst.msk [vmem:[%s272 + $0x18] sm:$0xff] %vm316, %v620
        %629 = vst.msk [vmem:[%s272 + $0x20] sm:$0xff] %vm316, %v621
        %630 = vst.msk [vmem:[%s272 + $0x28] sm:$0xff] %vm316, %v622
        %631 = vst.msk [vmem:[%s272 + $0x30] sm:$0xff] %vm316, %v623
        %632 = vst.msk [vmem:[%s272 + $0x38] sm:$0xff] %vm316, %v624
        %s633 = sand.u32 %s181, 1
        %s634 = scalar_lea.sflag [#allocation3], %s633
        %s635 = sand.u32 %s181, 1
        %s636 = smul.addr %s635, 64
        %s637 = scalar_lea.vmem [#allocation2], %s636
        // Predicated region
        $region49: #{_lambda_.5} parent=47 // pred_check
          %p638 = pneg %p191
        $region50: #{_lambda_.5} parent=47 // pred_check_branch
          %640 = sbr.rel (%p638) target = $region52
        $region51: #{_lambda_.5} parent=47 // pred_region
          %s641 = smul.u32 8, %s21
          %s643 = ssub.s32 1024, 1024
          %644 = vsyncadd %s634, %s643
          %s645 = smul.addr %s641, 128
          %s646 = scalar_lea.hbm %s7, %s645
          %s647 = sshll.u32 %s637, 4
          %s648 = int_to_ptr.vmem [resolvable:$true] %s647
          %653 = dma.vmem_to_hbm [thread:$0]  %s648, 1024, %s646, %s634, 128, 128, 8
        $region52: #{_lambda_.5} parent=47 // pred_fallthru
          _
      $region48: #{_lambda_.5} parent=5 // pred_fallthru
        _
      %p654 = scmp.le.s32.totalorder 2, %s16
      // Predicated region
      $region53: #{_lambda_.5} parent=5 // pred_check
        %p655 = pneg %p654
      $region54: #{_lambda_.5} parent=5 // pred_check_branch
        %657 = sbr.rel (%p655) target = $region56
      $region55: #{_lambda_.5} parent=5 // pred_region
        %s658 = ssub.s32 %s16, 2
        // Predicated region
        $region57: #{_lambda_.5} parent=55 // pred_check
          %p659 = pneg %p197
        $region58: #{_lambda_.5} parent=55 // pred_check_branch
          %661 = sbr.rel (%p659) target = $region60
        $region59: #{_lambda_.5} parent=55 // pred_region
          %s662 = sand.u32 %s182, 1
          %s663 = scalar_lea.sflag [#allocation3], %s662
          %s664 = sand.u32 %s182, 1
          %s665 = smul.addr %s664, 64
          %s666 = scalar_lea.vmem [#allocation2], %s665
          %667 = dma.done %s663, 1024
        $region60: #{_lambda_.5} parent=55 // pred_fallthru
          _
      $region56: #{_lambda_.5} parent=5 // pred_fallthru
        _
    $region6: #{_lambda_.5} parent=1 // loop_footer
      %s20 = sadd.s32 1, %s16
    $region7: #{_lambda_.5} parent=1 // loop_footer_branch
      %15 = sbr.rel target = $region3
    $region8: #{_lambda_.5} parent=1 // loop_exit
      _
    %668 = vsyncpa [#allocation3], 1
    %s669 = scalar_lea.sflag [#allocation3], 1
    %670 = vsyncpa %s669, 1

// kernel: _lambda_.4
$region0: #{_lambda_.4}
  #allocation0 [shape = 'u32[]', space=smem, size = 0x4, offset = 0x4, fixed_abs, tag = 'smem constant byte address 0x4 - core index']
  #allocation1 [shape = 'u32[144,128]{1,0:T(1,128)}', space=vmem, size = 0x12000, scoped, tag = 'internal scratch']
  %s0 = inlined_call_operand.vmem [shape: f32[2,4,512], index: 0, kind: input, shape index: {}]
  %s1 = inlined_call_operand.vmem [shape: bf16[512,96], index: 1, kind: input, shape index: {}]
  %s2 = inlined_call_operand.vmem [shape: f32[1,96], index: 2, kind: input, shape index: {}]
  %s3 = inlined_call_operand.vmem [shape: bf16[32,512], index: 3, kind: input, shape index: {}]
  %s4 = inlined_call_operand.vmem [shape: f32[1,512], index: 4, kind: input, shape index: {}]
  %s5 = inlined_call_operand.vmem [shape: f32[2,4,512], index: 5, kind: input, shape index: {}]
  %s6 = inlined_call_operand.vmem [shape: f32[1,512], index: 6, kind: input, shape index: {}]
  %s7 = inlined_call_operand.vmem [shape: f32[1,512], index: 7, kind: input, shape index: {}]
  %s8 = inlined_call_operand.vmem [shape: f32[2,4,512], index: 8, kind: output, shape index: {}]
  %s9 = sld [smem:[#allocation0]]
  $region65: #{_lambda_.4} parent=0
    _
  %s11 = ssub.s32 1, %s9
  %s12 = scalar_select 0, %s11, %s9
  loop: start=0, step=1, limit=4
  $region2: #{_lambda_.4} parent=0 // loop_pre_header
    _
  $region3: #{_lambda_.4} parent=0 // loop_header
    %s14 = sphi 0, %s18
    %p15 = scmp.ge.s32.totalorder %s14, 4
    %s24 = sphi 0, %s26
    %s27 = sphi 0, %s24
    %s28 = sphi 0, %s27
    %s44 = sphi 0, %s28
    %s48 = sphi 0, %s48
    %s50 = sphi 0, %s48
    %s51 = sphi 0, %s50
    %s65 = sphi 0, %s51
    %s69 = sphi 0, %s69
    %s71 = sphi 0, %s69
    %s72 = sphi 0, %s71
    %s86 = sphi 0, %s72
    %s90 = sphi 0, %s90
    %s92 = sphi 0, %s90
    %s93 = sphi 0, %s92
    %s107 = sphi 0, %s93
    %s111 = sphi 0, %s111
    %s113 = sphi 0, %s111
    %s114 = sphi 0, %s113
    %s128 = sphi 0, %s114
    %s134 = sphi 0, %s136
    %s137 = sphi 0, %s134
    %s138 = sphi 0, %s137
    %s154 = sphi 0, %s138
    %s158 = sphi 0, %s158
    %s160 = sphi 0, %s158
    %s161 = sphi 0, %s160
    %s175 = sphi 0, %s161
    %s179 = sphi 0, %s179
    %s181 = sphi 0, %s179
    %s182 = sphi 0, %s181
    %s196 = sphi 0, %s182
    %s202 = sphi 0, %s204
    %s205 = sphi 0, %s202
    %s206 = sphi 0, %s205
    %s222 = sphi 0, %s206
  $region4: #{_lambda_.4} parent=0 // loop_header_branch
    %17 = sbr.rel (%p15) target = $region8
  $region5: #{_lambda_.4} parent=0 // loop_body
    %s19 = ssub.s32 %s14, 1
    %s20 = ssub.s32 %s14, 2
    %s21 = sadd.s32 %s14, 1
    %s22 = ssub.s32 %s14, %s21
    %p23 = scmp.eq.s32.totalorder %s22, 0
    %s25 = sadd.s32 %s24, 1
    %s26 = scalar_select %p23, %s24, %s25
    %p29 = pneg %p23
    %p30 = scmp.eq.s32.totalorder %s14, 1
    %p31 = por %p29, %p30
    %p32 = scmp.ne.s32.totalorder %s24, %s27
    %p33 = scmp.eq.s32.totalorder %s14, 0
    %p34 = por %p32, %p33
    %p35 = scmp.ne.s32.totalorder %s24, %s27
    %p36 = scmp.eq.s32.totalorder %s19, 1
    %p37 = por %p35, %p36
    %p38 = scmp.ne.s32.totalorder %s27, %s28
    %p39 = scmp.eq.s32.totalorder %s19, 0
    %p40 = por %p38, %p39
    %p41 = scmp.ne.s32.totalorder %s27, %s28
    %p42 = scmp.eq.s32.totalorder %s20, 1
    %p43 = por %p41, %p42
    %p45 = scmp.ne.s32.totalorder %s28, %s44
    %p46 = scmp.eq.s32.totalorder %s20, 0
    %p47 = por %p45, %p46
    %s49 = sadd.s32 %s48, 1
    %p52 = scmp.eq.s32.totalorder %s14, 1
    %p53 = scmp.ne.s32.totalorder %s48, %s50
    %p54 = scmp.eq.s32.totalorder %s14, 0
    %p55 = por %p53, %p54
    %p56 = scmp.ne.s32.totalorder %s48, %s50
    %p57 = scmp.eq.s32.totalorder %s19, 1
    %p58 = por %p56, %p57
    %p59 = scmp.ne.s32.totalorder %s50, %s51
    %p60 = scmp.eq.s32.totalorder %s19, 0
    %p61 = por %p59, %p60
    %p62 = scmp.ne.s32.totalorder %s50, %s51
    %p63 = scmp.eq.s32.totalorder %s20, 1
    %p64 = por %p62, %p63
    %p66 = scmp.ne.s32.totalorder %s51, %s65
    %p67 = scmp.eq.s32.totalorder %s20, 0
    %p68 = por %p66, %p67
    %s70 = sadd.s32 %s69, 1
    %p73 = scmp.eq.s32.totalorder %s14, 1
    %p74 = scmp.ne.s32.totalorder %s69, %s71
    %p75 = scmp.eq.s32.totalorder %s14, 0
    %p76 = por %p74, %p75
    %p77 = scmp.ne.s32.totalorder %s69, %s71
    %p78 = scmp.eq.s32.totalorder %s19, 1
    %p79 = por %p77, %p78
    %p80 = scmp.ne.s32.totalorder %s71, %s72
    %p81 = scmp.eq.s32.totalorder %s19, 0
    %p82 = por %p80, %p81
    %p83 = scmp.ne.s32.totalorder %s71, %s72
    %p84 = scmp.eq.s32.totalorder %s20, 1
    %p85 = por %p83, %p84
    %p87 = scmp.ne.s32.totalorder %s72, %s86
    %p88 = scmp.eq.s32.totalorder %s20, 0
    %p89 = por %p87, %p88
    %s91 = sadd.s32 %s90, 1
    %p94 = scmp.eq.s32.totalorder %s14, 1
    %p95 = scmp.ne.s32.totalorder %s90, %s92
    %p96 = scmp.eq.s32.totalorder %s14, 0
    %p97 = por %p95, %p96
    %p98 = scmp.ne.s32.totalorder %s90, %s92
    %p99 = scmp.eq.s32.totalorder %s19, 1
    %p100 = por %p98, %p99
    %p101 = scmp.ne.s32.totalorder %s92, %s93
    %p102 = scmp.eq.s32.totalorder %s19, 0
    %p103 = por %p101, %p102
    %p104 = scmp.ne.s32.totalorder %s92, %s93
    %p105 = scmp.eq.s32.totalorder %s20, 1
    %p106 = por %p104, %p105
    %p108 = scmp.ne.s32.totalorder %s93, %s107
    %p109 = scmp.eq.s32.totalorder %s20, 0
    %p110 = por %p108, %p109
    %s112 = sadd.s32 %s111, 1
    %p115 = scmp.eq.s32.totalorder %s14, 1
    %p116 = scmp.ne.s32.totalorder %s111, %s113
    %p117 = scmp.eq.s32.totalorder %s14, 0
    %p118 = por %p116, %p117
    %p119 = scmp.ne.s32.totalorder %s111, %s113
    %p120 = scmp.eq.s32.totalorder %s19, 1
    %p121 = por %p119, %p120
    %p122 = scmp.ne.s32.totalorder %s113, %s114
    %p123 = scmp.eq.s32.totalorder %s19, 0
    %p124 = por %p122, %p123
    %p125 = scmp.ne.s32.totalorder %s113, %s114
    %p126 = scmp.eq.s32.totalorder %s20, 1
    %p127 = por %p125, %p126
    %p129 = scmp.ne.s32.totalorder %s114, %s128
    %p130 = scmp.eq.s32.totalorder %s20, 0
    %p131 = por %p129, %p130
    %s132 = ssub.s32 %s14, %s21
    %p133 = scmp.eq.s32.totalorder %s132, 0
    %s135 = sadd.s32 %s134, 1
    %s136 = scalar_select %p133, %s134, %s135
    %p139 = pneg %p133
    %p140 = scmp.eq.s32.totalorder %s14, 1
    %p141 = por %p139, %p140
    %p142 = scmp.ne.s32.totalorder %s134, %s137
    %p143 = scmp.eq.s32.totalorder %s14, 0
    %p144 = por %p142, %p143
    %p145 = scmp.ne.s32.totalorder %s134, %s137
    %p146 = scmp.eq.s32.totalorder %s19, 1
    %p147 = por %p145, %p146
    %p148 = scmp.ne.s32.totalorder %s137, %s138
    %p149 = scmp.eq.s32.totalorder %s19, 0
    %p150 = por %p148, %p149
    %p151 = scmp.ne.s32.totalorder %s137, %s138
    %p152 = scmp.eq.s32.totalorder %s20, 1
    %p153 = por %p151, %p152
    %p155 = scmp.ne.s32.totalorder %s138, %s154
    %p156 = scmp.eq.s32.totalorder %s20, 0
    %p157 = por %p155, %p156
    %s159 = sadd.s32 %s158, 1
    %p162 = scmp.eq.s32.totalorder %s14, 1
    %p163 = scmp.ne.s32.totalorder %s158, %s160
    %p164 = scmp.eq.s32.totalorder %s14, 0
    %p165 = por %p163, %p164
    %p166 = scmp.ne.s32.totalorder %s158, %s160
    %p167 = scmp.eq.s32.totalorder %s19, 1
    %p168 = por %p166, %p167
    %p169 = scmp.ne.s32.totalorder %s160, %s161
    %p170 = scmp.eq.s32.totalorder %s19, 0
    %p171 = por %p169, %p170
    %p172 = scmp.ne.s32.totalorder %s160, %s161
    %p173 = scmp.eq.s32.totalorder %s20, 1
    %p174 = por %p172, %p173
    %p176 = scmp.ne.s32.totalorder %s161, %s175
    %p177 = scmp.eq.s32.totalorder %s20, 0
    %p178 = por %p176, %p177
    %s180 = sadd.s32 %s179, 1
    %p183 = scmp.eq.s32.totalorder %s14, 1
    %p184 = scmp.ne.s32.totalorder %s179, %s181
    %p185 = scmp.eq.s32.totalorder %s14, 0
    %p186 = por %p184, %p185
    %p187 = scmp.ne.s32.totalorder %s179, %s181
    %p188 = scmp.eq.s32.totalorder %s19, 1
    %p189 = por %p187, %p188
    %p190 = scmp.ne.s32.totalorder %s181, %s182
    %p191 = scmp.eq.s32.totalorder %s19, 0
    %p192 = por %p190, %p191
    %p193 = scmp.ne.s32.totalorder %s181, %s182
    %p194 = scmp.eq.s32.totalorder %s20, 1
    %p195 = por %p193, %p194
    %p197 = scmp.ne.s32.totalorder %s182, %s196
    %p198 = scmp.eq.s32.totalorder %s20, 0
    %p199 = por %p197, %p198
    %s200 = ssub.s32 %s14, %s21
    %p201 = scmp.eq.s32.totalorder %s200, 0
    %s203 = sadd.s32 %s202, 1
    %s204 = scalar_select %p201, %s202, %s203
    %p207 = pneg %p201
    %p208 = scmp.eq.s32.totalorder %s14, 1
    %p209 = por %p207, %p208
    %p210 = scmp.ne.s32.totalorder %s202, %s205
    %p211 = scmp.eq.s32.totalorder %s14, 0
    %p212 = por %p210, %p211
    %p213 = scmp.ne.s32.totalorder %s202, %s205
    %p214 = scmp.eq.s32.totalorder %s19, 1
    %p215 = por %p213, %p214
    %p216 = scmp.ne.s32.totalorder %s205, %s206
    %p217 = scmp.eq.s32.totalorder %s19, 0
    %p218 = por %p216, %p217
    %p219 = scmp.ne.s32.totalorder %s205, %s206
    %p220 = scmp.eq.s32.totalorder %s20, 1
    %p221 = por %p219, %p220
    %p223 = scmp.ne.s32.totalorder %s206, %s222
    %p224 = scmp.eq.s32.totalorder %s20, 0
    %p225 = por %p223, %p224
    %p226 = scmp.le.s32.totalorder 1, %s14
    %p227 = scmp.lt.s32.totalorder %s14, 3
    %p228 = pnand %p226, %p227
    %p229 = pneg %p228
    // Predicated region
    $region9: #{_lambda_.4} parent=5 // pred_check
      _
    $region10: #{_lambda_.4} parent=5 // pred_check_branch
      %231 = sbr.rel (%p228) target = $region12
    $region11: #{_lambda_.4} parent=5 // pred_region
      %s232 = ssub.s32 %s14, 1
      // Predicated region
      $region13: #{_lambda_.4} parent=11 // pred_check
        %p233 = pneg %p61
      $region14: #{_lambda_.4} parent=11 // pred_check_branch
        %235 = sbr.rel (%p233) target = $region16
      $region15: #{_lambda_.4} parent=11 // pred_region
        _
      $region16: #{_lambda_.4} parent=11 // pred_fallthru
        _
      // Predicated region
      $region17: #{_lambda_.4} parent=11 // pred_check
        %p236 = pneg %p82
      $region18: #{_lambda_.4} parent=11 // pred_check_branch
        %238 = sbr.rel (%p236) target = $region20
      $region19: #{_lambda_.4} parent=11 // pred_region
        _
      $region20: #{_lambda_.4} parent=11 // pred_fallthru
        _
      // Predicated region
      $region21: #{_lambda_.4} parent=11 // pred_check
        %p239 = pneg %p103
      $region22: #{_lambda_.4} parent=11 // pred_check_branch
        %241 = sbr.rel (%p239) target = $region24
      $region23: #{_lambda_.4} parent=11 // pred_region
        _
      $region24: #{_lambda_.4} parent=11 // pred_fallthru
        _
      // Predicated region
      $region25: #{_lambda_.4} parent=11 // pred_check
        %p242 = pneg %p124
      $region26: #{_lambda_.4} parent=11 // pred_check_branch
        %244 = sbr.rel (%p242) target = $region28
      $region27: #{_lambda_.4} parent=11 // pred_region
        _
      $region28: #{_lambda_.4} parent=11 // pred_fallthru
        _
      // Predicated region
      $region29: #{_lambda_.4} parent=11 // pred_check
        %p245 = pneg %p171
      $region30: #{_lambda_.4} parent=11 // pred_check_branch
        %247 = sbr.rel (%p245) target = $region32
      $region31: #{_lambda_.4} parent=11 // pred_region
        _
      $region32: #{_lambda_.4} parent=11 // pred_fallthru
        _
      // Predicated region
      $region33: #{_lambda_.4} parent=11 // pred_check
        %p248 = pneg %p192
      $region34: #{_lambda_.4} parent=11 // pred_check_branch
        %250 = sbr.rel (%p248) target = $region36
      $region35: #{_lambda_.4} parent=11 // pred_region
        _
      $region36: #{_lambda_.4} parent=11 // pred_fallthru
        _
    $region12: #{_lambda_.4} parent=5 // pred_fallthru
      _
    %p251 = scmp.lt.s32.totalorder %s14, 2
    // Predicated region
    $region37: #{_lambda_.4} parent=5 // pred_check
      %p252 = pneg %p251
    $region38: #{_lambda_.4} parent=5 // pred_check_branch
      %254 = sbr.rel (%p252) target = $region40
    $region39: #{_lambda_.4} parent=5 // pred_region
      // Predicated region
      $region41: #{_lambda_.4} parent=39 // pred_check
        %p255 = pneg %p34
      $region42: #{_lambda_.4} parent=39 // pred_check_branch
        %257 = sbr.rel (%p255) target = $region44
      $region43: #{_lambda_.4} parent=39 // pred_region
        %p258 = scmp.lt.s32.totalorder %s14, 1
        %s259 = scalar_select %p258, %s14, 1
        %s260 = smul.addr %s259, 4
        %s261 = smul.addr %s260, 4
        %s262 = scalar_lea.vmem %s0, %s261
      $region44: #{_lambda_.4} parent=39 // pred_fallthru
        _
      // Predicated region
      $region45: #{_lambda_.4} parent=39 // pred_check
        %p263 = pneg %p144
      $region46: #{_lambda_.4} parent=39 // pred_check_branch
        %265 = sbr.rel (%p263) target = $region48
      $region47: #{_lambda_.4} parent=39 // pred_region
        %p266 = scmp.lt.s32.totalorder %s14, 1
        %s267 = scalar_select %p266, %s14, 1
        %s268 = smul.addr %s267, 4
        %s269 = smul.addr %s268, 4
        %s270 = scalar_lea.vmem %s5, %s269
      $region48: #{_lambda_.4} parent=39 // pred_fallthru
        _
    $region40: #{_lambda_.4} parent=5 // pred_fallthru
      _
    %p271 = scmp.le.s32.totalorder 1, %s14
    %p272 = scmp.lt.s32.totalorder %s14, 3
    %p273 = pnand %p271, %p272
    %p274 = pneg %p273
    // Predicated region
    $region49: #{_lambda_.4} parent=5 // pred_check
      _
    $region50: #{_lambda_.4} parent=5 // pred_check_branch
      %276 = sbr.rel (%p273) target = $region52
    $region51: #{_lambda_.4} parent=5 // pred_region
      %s277 = ssub.s32 %s14, 1
      %p278 = scmp.lt.s32.totalorder %s19, 1
      %s279 = scalar_select %p278, %s19, 1
      %s280 = smul.addr %s279, 4
      %s281 = smul.addr %s280, 4
      %s282 = scalar_lea.vmem %s0, %s281
      %p283 = pneg %p40
      %p284 = pneg %p37
      %p285 = pneg %p61
      %p286 = pneg %p58
      %p287 = pneg %p82
      %p288 = pneg %p79
      %p289 = pneg %p103
      %p290 = pneg %p100
      %p291 = pneg %p124
      %p292 = pneg %p121
      %p293 = scmp.lt.s32.totalorder %s19, 1
      %s294 = scalar_select %p293, %s19, 1
      %s295 = smul.addr %s294, 4
      %s296 = smul.addr %s295, 4
      %s297 = scalar_lea.vmem %s5, %s296
      %p298 = pneg %p150
      %p299 = pneg %p147
      %p300 = pneg %p171
      %p301 = pneg %p168
      %p302 = pneg %p192
      %p303 = pneg %p189
      %p304 = pneg %p218
      %p305 = pneg %p215
      %p306 = scmp.lt.s32.totalorder %s19, 1
      %s307 = scalar_select %p306, %s19, 1
      %s308 = smul.addr %s307, 4
      %s309 = smul.addr %s308, 4
      %s310 = scalar_lea.vmem %s8, %s309
      %p311 = scmp.lt.s32.totalorder %s19, 1
      %s312 = scalar_select %p311, %s19, 1
      %s313 = smul.addr %s312, 4
      %s314 = smul.addr %s313, 4
      %s315 = scalar_lea.vmem %s0, %s314
      %p316 = scmp.lt.s32.totalorder %s19, 1
      %s317 = scalar_select %p316, %s19, 1
      %s318 = smul.addr %s317, 4
      %s319 = smul.addr %s318, 4
      %s320 = scalar_lea.vmem %s5, %s319
      %p321 = scmp.lt.s32.totalorder %s19, 1
      %s322 = scalar_select %p321, %s19, 1
      %s323 = smul.addr %s322, 4
      %s324 = smul.addr %s323, 4
      %s325 = scalar_lea.vmem %s8, %s324
      %v327 = vld [vmem:[%s315] sm:$0xff]
      %v328 = vld [vmem:[%s315 + $0x8] sm:$0xff]
      %v331 = vcombine.high %v327, %v327
      %v332 = vcombine.high %v328, %v328
      %v335 = vpack.c.bf16 %v327, %v327
      %v336 = vpack.c.bf16 %v331, %v331
      %v337 = vpack.c.bf16 %v328, %v328
      %v338 = vpack.c.bf16 %v332, %v332
      %v339 = vld [vmem:[%s1] sm:$0xf]
      %v340 = vld [vmem:[%s1 + $0x4] sm:$0xf]
      %v341 = vld [vmem:[%s1 + $0x8] sm:$0xf]
      %v342 = vld [vmem:[%s1 + $0xc] sm:$0xf]
      %v343 = vld [vmem:[%s1 + $0x10] sm:$0xf]
      %v344 = vld [vmem:[%s1 + $0x14] sm:$0xf]
      %v345 = vld [vmem:[%s1 + $0x18] sm:$0xf]
      %v346 = vld [vmem:[%s1 + $0x1c] sm:$0xf]
      %v347 = vld [vmem:[%s1 + $0x20] sm:$0xf]
      %v348 = vld [vmem:[%s1 + $0x24] sm:$0xf]
      %v349 = vld [vmem:[%s1 + $0x28] sm:$0xf]
      %v350 = vld [vmem:[%s1 + $0x2c] sm:$0xf]
      %v351 = vld [vmem:[%s1 + $0x30] sm:$0xf]
      %v352 = vld [vmem:[%s1 + $0x34] sm:$0xf]
      %v353 = vld [vmem:[%s1 + $0x38] sm:$0xf]
      %v354 = vld [vmem:[%s1 + $0x3c] sm:$0xf]
      %v355 = vld [vmem:[%s1 + $0x40] sm:$0xf]
      %v356 = vld [vmem:[%s1 + $0x44] sm:$0xf]
      %v357 = vld [vmem:[%s1 + $0x48] sm:$0xf]
      %v358 = vld [vmem:[%s1 + $0x4c] sm:$0xf]
      %v359 = vld [vmem:[%s1 + $0x50] sm:$0xf]
      %v360 = vld [vmem:[%s1 + $0x54] sm:$0xf]
      %v361 = vld [vmem:[%s1 + $0x58] sm:$0xf]
      %v362 = vld [vmem:[%s1 + $0x5c] sm:$0xf]
      %v363 = vld [vmem:[%s1 + $0x60] sm:$0xf]
      %v364 = vld [vmem:[%s1 + $0x64] sm:$0xf]
      %v365 = vld [vmem:[%s1 + $0x68] sm:$0xf]
      %v366 = vld [vmem:[%s1 + $0x6c] sm:$0xf]
      %v367 = vld [vmem:[%s1 + $0x70] sm:$0xf]
      %v368 = vld [vmem:[%s1 + $0x74] sm:$0xf]
      %v369 = vld [vmem:[%s1 + $0x78] sm:$0xf]
      %v370 = vld [vmem:[%s1 + $0x7c] sm:$0xf]
      %v371 = vld [vmem:[%s1 + $0x80] sm:$0xf]
      %v372 = vld [vmem:[%s1 + $0x84] sm:$0xf]
      %v373 = vld [vmem:[%s1 + $0x88] sm:$0xf]
      %v374 = vld [vmem:[%s1 + $0x8c] sm:$0xf]
      %v375 = vld [vmem:[%s1 + $0x90] sm:$0xf]
      %v376 = vld [vmem:[%s1 + $0x94] sm:$0xf]
      %v377 = vld [vmem:[%s1 + $0x98] sm:$0xf]
      %v378 = vld [vmem:[%s1 + $0x9c] sm:$0xf]
      %v379 = vld [vmem:[%s1 + $0xa0] sm:$0xf]
      %v380 = vld [vmem:[%s1 + $0xa4] sm:$0xf]
      %v381 = vld [vmem:[%s1 + $0xa8] sm:$0xf]
      %v382 = vld [vmem:[%s1 + $0xac] sm:$0xf]
      %v383 = vld [vmem:[%s1 + $0xb0] sm:$0xf]
      %v384 = vld [vmem:[%s1 + $0xb4] sm:$0xf]
      %v385 = vld [vmem:[%s1 + $0xb8] sm:$0xf]
      %v386 = vld [vmem:[%s1 + $0xbc] sm:$0xf]
      %v387 = vld [vmem:[%s1 + $0xc0] sm:$0xf]
      %v388 = vld [vmem:[%s1 + $0xc4] sm:$0xf]
      %v389 = vld [vmem:[%s1 + $0xc8] sm:$0xf]
      %v390 = vld [vmem:[%s1 + $0xcc] sm:$0xf]
      %v391 = vld [vmem:[%s1 + $0xd0] sm:$0xf]
      %v392 = vld [vmem:[%s1 + $0xd4] sm:$0xf]
      %v393 = vld [vmem:[%s1 + $0xd8] sm:$0xf]
      %v394 = vld [vmem:[%s1 + $0xdc] sm:$0xf]
      %v395 = vld [vmem:[%s1 + $0xe0] sm:$0xf]
      %v396 = vld [vmem:[%s1 + $0xe4] sm:$0xf]
      %v397 = vld [vmem:[%s1 + $0xe8] sm:$0xf]
      %v398 = vld [vmem:[%s1 + $0xec] sm:$0xf]
      %v399 = vld [vmem:[%s1 + $0xf0] sm:$0xf]
      %v400 = vld [vmem:[%s1 + $0xf4] sm:$0xf]
      %v401 = vld [vmem:[%s1 + $0xf8] sm:$0xf]
      %v402 = vld [vmem:[%s1 + $0xfc] sm:$0xf]
      %v403 = vld [vmem:[%s2] sm:$0x1]
      %v405 = vlaneseq
      %v406 = vshrl.u32 %v405, 7
      %v407 = vsub.s32 0, %v406
      %v408 = vrot.slane %v403, %v407
      %v474 = vunpack.c.l.b16 %v339
      %v475 = vunpack.c.l.b16 %v340
      %v476 = vunpack.c.l.b16 %v341
      %v477 = vunpack.c.l.b16 %v342
      %v478 = vunpack.c.l.b16 %v343
      %v479 = vunpack.c.l.b16 %v344
      %v480 = vunpack.c.l.b16 %v345
      %v481 = vunpack.c.l.b16 %v346
      %v482 = vunpack.c.l.b16 %v347
      %v483 = vunpack.c.l.b16 %v348
      %v484 = vunpack.c.l.b16 %v349
      %v485 = vunpack.c.l.b16 %v350
      %v486 = vunpack.c.l.b16 %v351
      %v487 = vunpack.c.l.b16 %v352
      %v488 = vunpack.c.l.b16 %v353
      %v489 = vunpack.c.l.b16 %v354
      %v490 = vunpack.c.l.b16 %v355
      %v491 = vunpack.c.l.b16 %v356
      %v492 = vunpack.c.l.b16 %v357
      %v493 = vunpack.c.l.b16 %v358
      %v494 = vunpack.c.l.b16 %v359
      %v495 = vunpack.c.l.b16 %v360
      %v496 = vunpack.c.l.b16 %v361
      %v497 = vunpack.c.l.b16 %v362
      %v498 = vunpack.c.l.b16 %v363
      %v499 = vunpack.c.l.b16 %v364
      %v500 = vunpack.c.l.b16 %v365
      %v501 = vunpack.c.l.b16 %v366
      %v502 = vunpack.c.l.b16 %v367
      %v503 = vunpack.c.l.b16 %v368
      %v504 = vunpack.c.l.b16 %v369
      %v505 = vunpack.c.l.b16 %v370
      %v506 = vunpack.c.l.b16 %v371
      %v507 = vunpack.c.l.b16 %v372
      %v508 = vunpack.c.l.b16 %v373
      %v509 = vunpack.c.l.b16 %v374
      %v510 = vunpack.c.l.b16 %v375
      %v511 = vunpack.c.l.b16 %v376
      %v512 = vunpack.c.l.b16 %v377
      %v513 = vunpack.c.l.b16 %v378
      %v514 = vunpack.c.l.b16 %v379
      %v515 = vunpack.c.l.b16 %v380
      %v516 = vunpack.c.l.b16 %v381
      %v517 = vunpack.c.l.b16 %v382
      %v518 = vunpack.c.l.b16 %v383
      %v519 = vunpack.c.l.b16 %v384
      %v520 = vunpack.c.l.b16 %v385
      %v521 = vunpack.c.l.b16 %v386
      %v522 = vunpack.c.l.b16 %v387
      %v523 = vunpack.c.l.b16 %v388
      %v524 = vunpack.c.l.b16 %v389
      %v525 = vunpack.c.l.b16 %v390
      %v526 = vunpack.c.l.b16 %v391
      %v527 = vunpack.c.l.b16 %v392
      %v528 = vunpack.c.l.b16 %v393
      %v529 = vunpack.c.l.b16 %v394
      %v530 = vunpack.c.l.b16 %v395
      %v531 = vunpack.c.l.b16 %v396
      %v532 = vunpack.c.l.b16 %v397
      %v533 = vunpack.c.l.b16 %v398
      %v534 = vunpack.c.l.b16 %v399
      %v535 = vunpack.c.l.b16 %v400
      %v536 = vunpack.c.l.b16 %v401
      %v537 = vunpack.c.l.b16 %v402
      %v538 = vpack.c.b16 %v475, %v474
      %v539 = vpack.c.b16 %v477, %v476
      %v540 = vpack.c.b16 %v479, %v478
      %v541 = vpack.c.b16 %v481, %v480
      %v542 = vpack.c.b16 %v483, %v482
      %v543 = vpack.c.b16 %v485, %v484
      %v544 = vpack.c.b16 %v487, %v486
      %v545 = vpack.c.b16 %v489, %v488
      %v546 = vpack.c.b16 %v491, %v490
      %v547 = vpack.c.b16 %v493, %v492
      %v548 = vpack.c.b16 %v495, %v494
      %v549 = vpack.c.b16 %v497, %v496
      %v550 = vpack.c.b16 %v499, %v498
      %v551 = vpack.c.b16 %v501, %v500
      %v552 = vpack.c.b16 %v503, %v502
      %v553 = vpack.c.b16 %v505, %v504
      %v554 = vpack.c.b16 %v507, %v506
      %v555 = vpack.c.b16 %v509, %v508
      %v556 = vpack.c.b16 %v511, %v510
      %v557 = vpack.c.b16 %v513, %v512
      %v558 = vpack.c.b16 %v515, %v514
      %v559 = vpack.c.b16 %v517, %v516
      %v560 = vpack.c.b16 %v519, %v518
      %v561 = vpack.c.b16 %v521, %v520
      %v562 = vpack.c.b16 %v523, %v522
      %v563 = vpack.c.b16 %v525, %v524
      %v564 = vpack.c.b16 %v527, %v526
      %v565 = vpack.c.b16 %v529, %v528
      %v566 = vpack.c.b16 %v531, %v530
      %v567 = vpack.c.b16 %v533, %v532
      %v568 = vpack.c.b16 %v535, %v534
      %v569 = vpack.c.b16 %v537, %v536
      %602 = vmatprep.subr.bf16.mxu0 0
      %603 = vmatpush1.bf16.msra.mxu0 %v538
      %604 = vmatprep.subr.bf16.mxu0 0
      %605 = vmatpush1.bf16.msra.mxu0 %v539
      %606 = vmatprep.subr.bf16.mxu0 0
      %607 = vmatpush1.bf16.msra.mxu0 %v540
      %608 = vmatprep.subr.bf16.mxu0 0
      %609 = vmatpush1.bf16.msra.mxu0 %v541
      %610 = vmatprep.subr.bf16.mxu0 0
      %611 = vmatpush1.bf16.msra.mxu0 %v542
      %612 = vmatprep.subr.bf16.mxu0 0
      %613 = vmatpush1.bf16.msra.mxu0 %v543
      %614 = vmatprep.subr.bf16.mxu0 0
      %615 = vmatpush1.bf16.msra.mxu0 %v544
      %616 = vmatprep.subr.bf16.mxu0 0
      %617 = vmatpush1.bf16.msra.mxu0 %v545
      %618 = vmatprep.subr.bf16.mxu0 0
      %619 = vmatpush1.bf16.msra.mxu0 %v546
      %620 = vmatprep.subr.bf16.mxu0 0
      %621 = vmatpush1.bf16.msra.mxu0 %v547
      %622 = vmatprep.subr.bf16.mxu0 0
      %623 = vmatpush1.bf16.msra.mxu0 %v548
      %624 = vmatprep.subr.bf16.mxu0 0
      %625 = vmatpush1.bf16.msra.mxu0 %v549
      %626 = vmatprep.subr.bf16.mxu0 0
      %627 = vmatpush1.bf16.msra.mxu0 %v550
      %628 = vmatprep.subr.bf16.mxu0 0
      %629 = vmatpush1.bf16.msra.mxu0 %v551
      %630 = vmatprep.subr.bf16.mxu0 0
      %631 = vmatpush1.bf16.msra.mxu0 %v552
      %632 = vmatprep.subr.bf16.mxu0 0
      %633 = vmatpush1.bf16.msra.mxu0 %v553
      %634 = vmatprep.mubr.bf16.mxu0 %v336
      %635 = vmatmul.mubr.bf16.gmra.mrb[0].mxu0 %v335
      %v636 = vpop.f32.mrb[0].mxu0
      %v637 = vadd.f32 %v408, %v636
      %v638 = vpop.f32.mrb[0].mxu0
      %v639 = vpop.f32.mrb[0].mxu0
      %v640 = vpop.f32.mrb[0].mxu0
      %641 = vdwg.mxu0
      %642 = vmatprep.subr.bf16.mxu0 0
      %643 = vmatpush1.bf16.msra.mxu0 %v554
      %644 = vmatprep.subr.bf16.mxu0 0
      %645 = vmatpush1.bf16.msra.mxu0 %v555
      %646 = vmatprep.subr.bf16.mxu0 0
      %647 = vmatpush1.bf16.msra.mxu0 %v556
      %648 = vmatprep.subr.bf16.mxu0 0
      %649 = vmatpush1.bf16.msra.mxu0 %v557
      %650 = vmatprep.subr.bf16.mxu0 0
      %651 = vmatpush1.bf16.msra.mxu0 %v558
      %652 = vmatprep.subr.bf16.mxu0 0
      %653 = vmatpush1.bf16.msra.mxu0 %v559
      %654 = vmatprep.subr.bf16.mxu0 0
      %655 = vmatpush1.bf16.msra.mxu0 %v560
      %656 = vmatprep.subr.bf16.mxu0 0
      %657 = vmatpush1.bf16.msra.mxu0 %v561
      %658 = vmatprep.subr.bf16.mxu0 0
      %659 = vmatpush1.bf16.msra.mxu0 %v562
      %660 = vmatprep.subr.bf16.mxu0 0
      %661 = vmatpush1.bf16.msra.mxu0 %v563
      %662 = vmatprep.subr.bf16.mxu0 0
      %663 = vmatpush1.bf16.msra.mxu0 %v564
      %664 = vmatprep.subr.bf16.mxu0 0
      %665 = vmatpush1.bf16.msra.mxu0 %v565
      %666 = vmatprep.subr.bf16.mxu0 0
      %667 = vmatpush1.bf16.msra.mxu0 %v566
      %668 = vmatprep.subr.bf16.mxu0 0
      %669 = vmatpush1.bf16.msra.mxu0 %v567
      %670 = vmatprep.subr.bf16.mxu0 0
      %671 = vmatpush1.bf16.msra.mxu0 %v568
      %672 = vmatprep.subr.bf16.mxu0 0
      %673 = vmatpush1.bf16.msra.mxu0 %v569
      %674 = vmatprep.mubr.bf16.mxu0 %v338
      %675 = vmatmul.mubr.bf16.gmra.mrb[0].mxu0 %v337
      %v676 = vpop.f32.mrb[0].mxu0
      %v677 = vadd.f32 %v637, %v676
      %v678 = vpop.f32.mrb[0].mxu0
      %v679 = vpop.f32.mrb[0].mxu0
      %v680 = vpop.f32.mrb[0].mxu0
      %681 = vdwg.mxu0
      %v682 = vld [vmem:[%s3] sm:$0xff]
      %v683 = vld [vmem:[%s3 + $0x8] sm:$0xff]
      %v684 = vld [vmem:[%s3 + $0x10] sm:$0xff]
      %v685 = vld [vmem:[%s3 + $0x18] sm:$0xff]
      %v686 = vld [vmem:[%s3 + $0x20] sm:$0xff]
      %v687 = vld [vmem:[%s3 + $0x28] sm:$0xff]
      %v688 = vld [vmem:[%s3 + $0x30] sm:$0xff]
      %v689 = vld [vmem:[%s3 + $0x38] sm:$0xff]
      %v690 = vpack.c.bf16 %v677, %v677
      %692 = vrot.lane.b32.xlu0 %v690, 96
      %v693 = vpop.permute.xlu0 %692
      %vm694 = vcmask 64512
      %v696 = vsel %vm694, %v690, 0
      %v699 = vsel %vm694, %v693, 0
      %701 = vmatprep.subr.bf16.mxu0 0
      %702 = vmatpush1.bf16.xpose.msra.mxu0 %v699
      %703 = vmatprep.subr.bf16.mxu0 0
      %704 = vmatpush1.bf16.xpose.msra.mxu0 0
      %705 = vmatprep.subr.bf16.mxu0 0
      %706 = vmatpush1.bf16.xpose.msra.mxu0 0
      %707 = vmatprep.subr.bf16.mxu0 0
      %708 = vmatpush1.bf16.xpose.msra.mxu0 0
      %709 = vmatprep.subr.bf16.mxu0 0
      %710 = vmatpush1.bf16.xpose.msra.mxu0 0
      %711 = vmatprep.subr.bf16.mxu0 0
      %712 = vmatpush1.bf16.xpose.msra.mxu0 0
      %713 = vmatprep.subr.bf16.mxu0 0
      %714 = vmatpush1.bf16.xpose.msra.mxu0 0
      %715 = vmatprep.subr.bf16.mxu0 0
      %716 = vmatpush1.bf16.xpose.msra.mxu0 0
      %717 = vmatprep.subr.bf16.mxu0 0
      %718 = vmatpush1.bf16.xpose.msra.mxu0 0
      %719 = vmatprep.subr.bf16.mxu0 0
      %720 = vmatpush1.bf16.xpose.msra.mxu0 0
      %721 = vmatprep.subr.bf16.mxu0 0
      %722 = vmatpush1.bf16.xpose.msra.mxu0 0
      %723 = vmatprep.subr.bf16.mxu0 0
      %724 = vmatpush1.bf16.xpose.msra.mxu0 0
      %725 = vmatprep.subr.bf16.mxu0 0
      %726 = vmatpush1.bf16.xpose.msra.mxu0 0
      %727 = vmatprep.subr.bf16.mxu0 0
      %728 = vmatpush1.bf16.xpose.msra.mxu0 0
      %729 = vmatprep.subr.bf16.mxu0 0
      %730 = vmatpush1.bf16.xpose.msra.mxu0 0
      %731 = vmatprep.subr.bf16.mxu0 0
      %732 = vmatpush1.bf16.xpose.msra.mxu0 0
      %733 = vmatprep.mubr.bf16.mxu0 0
      %734 = vmatmul.mubr.bf16.gmra.mrb[0].mxu0 %v696
      %v735 = vpop.f32.mrb[0].mxu0
      %v736 = vadd.f32 0.0, %v735
      %v737 = vpop.f32.mrb[0].mxu0
      %v738 = vpop.f32.mrb[0].mxu0
      %v739 = vpop.f32.mrb[0].mxu0
      %740 = vdwg.mxu0
      %v741 = vmul.f32 %v736, 0.35355338
      %vm742 = vcmask 27648
      %v743 = vsel %vm742, %v741, -inf
      %744 = vmax.xlane.f32.xlu0 %v743
      %v745 = vpop.xlane.xlu0 %744
      %v746 = vsub.f32 %v741, %v745
      %v747 = vmul.f32 %v746, 1.442695
      %v748 = vpow.pop %v747
      %v749 = vsel %vm742, %v748, 0.0
      %750 = vadd.xlane.f32.xlu0 %v749
      %v751 = vpop.xlane.xlu0 %750
      %v752 = vrcp.pop %v751
      %v753 = vmul.f32 %v748, %v752
      %v754 = vpack.c.bf16 %v753, %v753
      %755 = vrot.lane.b32.xlu0 %v690, 64
      %v756 = vpop.permute.xlu0 %755
      %vm757 = vcmask 31744
      %v759 = vsel %vm757, %v754, 0
      %vm761 = vcmask 1041408
      %v763 = vsel %vm761, %v756, 0
      %765 = vmatprep.subr.bf16.mxu0 0
      %766 = vmatpush1.bf16.msra.mxu0 %v763
      %767 = vmatprep.subr.bf16.mxu0 0
      %768 = vmatpush1.bf16.msra.mxu0 0
      %769 = vmatprep.subr.bf16.mxu0 0
      %770 = vmatpush1.bf16.msra.mxu0 0
      %771 = vmatprep.subr.bf16.mxu0 0
      %772 = vmatpush1.bf16.msra.mxu0 0
      %773 = vmatprep.subr.bf16.mxu0 0
      %774 = vmatpush1.bf16.msra.mxu0 0
      %775 = vmatprep.subr.bf16.mxu0 0
      %776 = vmatpush1.bf16.msra.mxu0 0
      %777 = vmatprep.subr.bf16.mxu0 0
      %778 = vmatpush1.bf16.msra.mxu0 0
      %779 = vmatprep.subr.bf16.mxu0 0
      %780 = vmatpush1.bf16.msra.mxu0 0
      %781 = vmatprep.subr.bf16.mxu0 0
      %782 = vmatpush1.bf16.msra.mxu0 0
      %783 = vmatprep.subr.bf16.mxu0 0
      %784 = vmatpush1.bf16.msra.mxu0 0
      %785 = vmatprep.subr.bf16.mxu0 0
      %786 = vmatpush1.bf16.msra.mxu0 0
      %787 = vmatprep.subr.bf16.mxu0 0
      %788 = vmatpush1.bf16.msra.mxu0 0
      %789 = vmatprep.subr.bf16.mxu0 0
      %790 = vmatpush1.bf16.msra.mxu0 0
      %791 = vmatprep.subr.bf16.mxu0 0
      %792 = vmatpush1.bf16.msra.mxu0 0
      %793 = vmatprep.subr.bf16.mxu0 0
      %794 = vmatpush1.bf16.msra.mxu0 0
      %795 = vmatprep.subr.bf16.mxu0 0
      %796 = vmatpush1.bf16.msra.mxu0 0
      %797 = vmatprep.mubr.bf16.mxu0 0
      %798 = vmatmul.mubr.bf16.gmra.mrb[0].mxu0 %v759
      %v799 = vpop.f32.mrb[0].mxu0
      %v800 = vadd.f32 0.0, %v799
      %v801 = vpop.f32.mrb[0].mxu0
      %v802 = vpop.f32.mrb[0].mxu0
      %v803 = vpop.f32.mrb[0].mxu0
      %804 = vdwg.mxu0
      %v805 = vpack.c.bf16 %v800, %v800
      %806 = vrot.lane.b32.xlu0 %v690, 120
      %v807 = vpop.permute.xlu0 %806
      %808 = vrot.lane.b32.xlu0 %v690, 88
      %v809 = vpop.permute.xlu0 %808
      %v811 = vsel %vm694, %v807, 0
      %v814 = vsel %vm694, %v809, 0
      %816 = vmatprep.subr.bf16.mxu0 0
      %817 = vmatpush1.bf16.xpose.msra.mxu0 %v814
      %818 = vmatprep.subr.bf16.mxu0 0
      %819 = vmatpush1.bf16.xpose.msra.mxu0 0
      %820 = vmatprep.subr.bf16.mxu0 0
      %821 = vmatpush1.bf16.xpose.msra.mxu0 0
      %822 = vmatprep.subr.bf16.mxu0 0
      %823 = vmatpush1.bf16.xpose.msra.mxu0 0
      %824 = vmatprep.subr.bf16.mxu0 0
      %825 = vmatpush1.bf16.xpose.msra.mxu0 0
      %826 = vmatprep.subr.bf16.mxu0 0
      %827 = vmatpush1.bf16.xpose.msra.mxu0 0
      %828 = vmatprep.subr.bf16.mxu0 0
      %829 = vmatpush1.bf16.xpose.msra.mxu0 0
      %830 = vmatprep.subr.bf16.mxu0 0
      %831 = vmatpush1.bf16.xpose.msra.mxu0 0
      %832 = vmatprep.subr.bf16.mxu0 0
      %833 = vmatpush1.bf16.xpose.msra.mxu0 0
      %834 = vmatprep.subr.bf16.mxu0 0
      %835 = vmatpush1.bf16.xpose.msra.mxu0 0
      %836 = vmatprep.subr.bf16.mxu0 0
      %837 = vmatpush1.bf16.xpose.msra.mxu0 0
      %838 = vmatprep.subr.bf16.mxu0 0
      %839 = vmatpush1.bf16.xpose.msra.mxu0 0
      %840 = vmatprep.subr.bf16.mxu0 0
      %841 = vmatpush1.bf16.xpose.msra.mxu0 0
      %842 = vmatprep.subr.bf16.mxu0 0
      %843 = vmatpush1.bf16.xpose.msra.mxu0 0
      %844 = vmatprep.subr.bf16.mxu0 0
      %845 = vmatpush1.bf16.xpose.msra.mxu0 0
      %846 = vmatprep.subr.bf16.mxu0 0
      %847 = vmatpush1.bf16.xpose.msra.mxu0 0
      %848 = vmatprep.mubr.bf16.mxu0 0
      %849 = vmatmul.mubr.bf16.gmra.mrb[0].mxu0 %v811
      %v850 = vpop.f32.mrb[0].mxu0
      %v851 = vadd.f32 0.0, %v850
      %v852 = vpop.f32.mrb[0].mxu0
      %v853 = vpop.f32.mrb[0].mxu0
      %v854 = vpop.f32.mrb[0].mxu0
      %855 = vdwg.mxu0
      %v856 = vmul.f32 %v851, 0.35355338
      %v857 = vsel %vm742, %v856, -inf
      %858 = vmax.xlane.f32.xlu0 %v857
      %v859 = vpop.xlane.xlu0 %858
      %v860 = vsub.f32 %v856, %v859
      %v861 = vmul.f32 %v860, 1.442695
      %v862 = vpow.pop %v861
      %v863 = vsel %vm742, %v862, 0.0
      %864 = vadd.xlane.f32.xlu0 %v863
      %v865 = vpop.xlane.xlu0 %864
      %v866 = vrcp.pop %v865
      %v867 = vmul.f32 %v862, %v866
      %v868 = vpack.c.bf16 %v867, %v867
      %869 = vrot.lane.b32.xlu0 %v690, 56
      %v870 = vpop.permute.xlu0 %869
      %v872 = vsel %vm757, %v868, 0
      %v875 = vsel %vm761, %v870, 0
      %877 = vmatprep.subr.bf16.mxu0 0
      %878 = vmatpush1.bf16.msra.mxu0 %v875
      %879 = vmatprep.subr.bf16.mxu0 0
      %880 = vmatpush1.bf16.msra.mxu0 0
      %881 = vmatprep.subr.bf16.mxu0 0
      %882 = vmatpush1.bf16.msra.mxu0 0
      %883 = vmatprep.subr.bf16.mxu0 0
      %884 = vmatpush1.bf16.msra.mxu0 0
      %885 = vmatprep.subr.bf16.mxu0 0
      %886 = vmatpush1.bf16.msra.mxu0 0
      %887 = vmatprep.subr.bf16.mxu0 0
      %888 = vmatpush1.bf16.msra.mxu0 0
      %889 = vmatprep.subr.bf16.mxu0 0
      %890 = vmatpush1.bf16.msra.mxu0 0
      %891 = vmatprep.subr.bf16.mxu0 0
      %892 = vmatpush1.bf16.msra.mxu0 0
      %893 = vmatprep.subr.bf16.mxu0 0
      %894 = vmatpush1.bf16.msra.mxu0 0
      %895 = vmatprep.subr.bf16.mxu0 0
      %896 = vmatpush1.bf16.msra.mxu0 0
      %897 = vmatprep.subr.bf16.mxu0 0
      %898 = vmatpush1.bf16.msra.mxu0 0
      %899 = vmatprep.subr.bf16.mxu0 0
      %900 = vmatpush1.bf16.msra.mxu0 0
      %901 = vmatprep.subr.bf16.mxu0 0
      %902 = vmatpush1.bf16.msra.mxu0 0
      %903 = vmatprep.subr.bf16.mxu0 0
      %904 = vmatpush1.bf16.msra.mxu0 0
      %905 = vmatprep.subr.bf16.mxu0 0
      %906 = vmatpush1.bf16.msra.mxu0 0
      %907 = vmatprep.subr.bf16.mxu0 0
      %908 = vmatpush1.bf16.msra.mxu0 0
      %909 = vmatprep.mubr.bf16.mxu0 0
      %910 = vmatmul.mubr.bf16.gmra.mrb[0].mxu0 %v872
      %v911 = vpop.f32.mrb[0].mxu0
      %v912 = vadd.f32 0.0, %v911
      %v913 = vpop.f32.mrb[0].mxu0
      %v914 = vpop.f32.mrb[0].mxu0
      %v915 = vpop.f32.mrb[0].mxu0
      %916 = vdwg.mxu0
      %v917 = vpack.c.bf16 %v912, %v912
      %v920 = vunpack.c.l.b16 %v684
      %v921 = vunpack.c.h.b16 %v684
      %v922 = vunpack.c.l.b16 %v685
      %v923 = vunpack.c.h.b16 %v685
      %v924 = vpack.c.b16 %v920, %v920
      %v925 = vpack.c.b16 %v921, %v921
      %v926 = vpack.c.b16 %v922, %v922
      %v927 = vpack.c.b16 %v923, %v923
      %v929 = vsel %vm694, %v917, 0
      %vm931 = vcmask 1043456
      %v933 = vsel %vm931, %v924, 0
      %v936 = vsel %vm931, %v925, 0
      %v939 = vsel %vm931, %v926, 0
      %v942 = vsel %vm931, %v927, 0
      %944 = vmatprep.subr.bf16.mxu0 %v936
      %945 = vmatpush1.bf16.msra.mxu0 %v933
      %946 = vmatprep.subr.bf16.mxu0 0
      %947 = vmatpush1.bf16.msra.mxu0 0
      %948 = vmatprep.subr.bf16.mxu0 0
      %949 = vmatpush1.bf16.msra.mxu0 0
      %950 = vmatprep.subr.bf16.mxu0 0
      %951 = vmatpush1.bf16.msra.mxu0 0
      %952 = vmatprep.subr.bf16.mxu0 0
      %953 = vmatpush1.bf16.msra.mxu0 0
      %954 = vmatprep.subr.bf16.mxu0 0
      %955 = vmatpush1.bf16.msra.mxu0 0
      %956 = vmatprep.subr.bf16.mxu0 0
      %957 = vmatpush1.bf16.msra.mxu0 0
      %958 = vmatprep.subr.bf16.mxu0 0
      %959 = vmatpush1.bf16.msra.mxu0 0
      %960 = vmatprep.subr.bf16.mxu0 0
      %961 = vmatpush1.bf16.msra.mxu0 0
      %962 = vmatprep.subr.bf16.mxu0 0
      %963 = vmatpush1.bf16.msra.mxu0 0
      %964 = vmatprep.subr.bf16.mxu0 0
      %965 = vmatpush1.bf16.msra.mxu0 0
      %966 = vmatprep.subr.bf16.mxu0 0
      %967 = vmatpush1.bf16.msra.mxu0 0
      %968 = vmatprep.subr.bf16.mxu0 0
      %969 = vmatpush1.bf16.msra.mxu0 0
      %970 = vmatprep.subr.bf16.mxu0 0
      %971 = vmatpush1.bf16.msra.mxu0 0
      %972 = vmatprep.subr.bf16.mxu0 0
      %973 = vmatpush1.bf16.msra.mxu0 0
      %974 = vmatprep.subr.bf16.mxu0 0
      %975 = vmatpush1.bf16.msra.mxu0 0
      %976 = vmatprep.mubr.bf16.mxu0 0
      %977 = vmatmul.mubr.bf16.gmra.mrb[0].mxu0 %v929
      %v978 = vpop.f32.mrb[0].mxu0
      %v979 = vadd.f32 0.0, %v978
      %v980 = vpop.f32.mrb[0].mxu0
      %v981 = vadd.f32 0.0, %v980
      %v982 = vpop.f32.mrb[0].mxu0
      %v983 = vpop.f32.mrb[0].mxu0
      %984 = vdwg.mxu0
      %985 = vmatprep.subr.bf16.mxu0 %v942
      %986 = vmatpush1.bf16.msra.mxu0 %v939
      %987 = vmatprep.subr.bf16.mxu0 0
      %988 = vmatpush1.bf16.msra.mxu0 0
      %989 = vmatprep.subr.bf16.mxu0 0
      %990 = vmatpush1.bf16.msra.mxu0 0
      %991 = vmatprep.subr.bf16.mxu0 0
      %992 = vmatpush1.bf16.msra.mxu0 0
      %993 = vmatprep.subr.bf16.mxu0 0
      %994 = vmatpush1.bf16.msra.mxu0 0
      %995 = vmatprep.subr.bf16.mxu0 0
      %996 = vmatpush1.bf16.msra.mxu0 0
      %997 = vmatprep.subr.bf16.mxu0 0
      %998 = vmatpush1.bf16.msra.mxu0 0
      %999 = vmatprep.subr.bf16.mxu0 0
      %1000 = vmatpush1.bf16.msra.mxu0 0
      %1001 = vmatprep.subr.bf16.mxu0 0
      %1002 = vmatpush1.bf16.msra.mxu0 0
      %1003 = vmatprep.subr.bf16.mxu0 0
      %1004 = vmatpush1.bf16.msra.mxu0 0
      %1005 = vmatprep.subr.bf16.mxu0 0
      %1006 = vmatpush1.bf16.msra.mxu0 0
      %1007 = vmatprep.subr.bf16.mxu0 0
      %1008 = vmatpush1.bf16.msra.mxu0 0
      %1009 = vmatprep.subr.bf16.mxu0 0
      %1010 = vmatpush1.bf16.msra.mxu0 0
      %1011 = vmatprep.subr.bf16.mxu0 0
      %1012 = vmatpush1.bf16.msra.mxu0 0
      %1013 = vmatprep.subr.bf16.mxu0 0
      %1014 = vmatpush1.bf16.msra.mxu0 0
      %1015 = vmatprep.subr.bf16.mxu0 0
      %1016 = vmatpush1.bf16.msra.mxu0 0
      %1017 = vmatprep.mubr.bf16.mxu0 0
      %1018 = vmatmul.mubr.bf16.gmra.mrb[0].mxu0 %v929
      %v1019 = vpop.f32.mrb[0].mxu0
      %v1020 = vadd.f32 0.0, %v1019
      %v1021 = vpop.f32.mrb[0].mxu0
      %v1022 = vadd.f32 0.0, %v1021
      %v1023 = vpop.f32.mrb[0].mxu0
      %v1024 = vpop.f32.mrb[0].mxu0
      %1025 = vdwg.mxu0
      %v1028 = vunpack.c.l.b16 %v682
      %v1029 = vunpack.c.h.b16 %v682
      %v1030 = vunpack.c.l.b16 %v683
      %v1031 = vunpack.c.h.b16 %v683
      %v1032 = vpack.c.b16 %v1028, %v1028
      %v1033 = vpack.c.b16 %v1029, %v1029
      %v1034 = vpack.c.b16 %v1030, %v1030
      %v1035 = vpack.c.b16 %v1031, %v1031
      %v1037 = vsel %vm694, %v805, 0
      %v1040 = vsel %vm931, %v1032, 0
      %v1043 = vsel %vm931, %v1033, 0
      %v1046 = vsel %vm931, %v1034, 0
      %v1049 = vsel %vm931, %v1035, 0
      %1051 = vmatprep.subr.bf16.mxu0 %v1043
      %1052 = vmatpush1.bf16.msra.mxu0 %v1040
      %1053 = vmatprep.subr.bf16.mxu0 0
      %1054 = vmatpush1.bf16.msra.mxu0 0
      %1055 = vmatprep.subr.bf16.mxu0 0
      %1056 = vmatpush1.bf16.msra.mxu0 0
      %1057 = vmatprep.subr.bf16.mxu0 0
      %1058 = vmatpush1.bf16.msra.mxu0 0
      %1059 = vmatprep.subr.bf16.mxu0 0
      %1060 = vmatpush1.bf16.msra.mxu0 0
      %1061 = vmatprep.subr.bf16.mxu0 0
      %1062 = vmatpush1.bf16.msra.mxu0 0
      %1063 = vmatprep.subr.bf16.mxu0 0
      %1064 = vmatpush1.bf16.msra.mxu0 0
      %1065 = vmatprep.subr.bf16.mxu0 0
      %1066 = vmatpush1.bf16.msra.mxu0 0
      %1067 = vmatprep.subr.bf16.mxu0 0
      %1068 = vmatpush1.bf16.msra.mxu0 0
      %1069 = vmatprep.subr.bf16.mxu0 0
      %1070 = vmatpush1.bf16.msra.mxu0 0
      %1071 = vmatprep.subr.bf16.mxu0 0
      %1072 = vmatpush1.bf16.msra.mxu0 0
      %1073 = vmatprep.subr.bf16.mxu0 0
      %1074 = vmatpush1.bf16.msra.mxu0 0
      %1075 = vmatprep.subr.bf16.mxu0 0
      %1076 = vmatpush1.bf16.msra.mxu0 0
      %1077 = vmatprep.subr.bf16.mxu0 0
      %1078 = vmatpush1.bf16.msra.mxu0 0
      %1079 = vmatprep.subr.bf16.mxu0 0
      %1080 = vmatpush1.bf16.msra.mxu0 0
      %1081 = vmatprep.subr.bf16.mxu0 0
      %1082 = vmatpush1.bf16.msra.mxu0 0
      %1083 = vmatprep.mubr.bf16.mxu0 0
      %1084 = vmatmul.mubr.bf16.gmra.mrb[0].mxu0 %v1037
      %v1085 = vpop.f32.mrb[0].mxu0
      %v1086 = vadd.f32 %v979, %v1085
      %v1087 = vpop.f32.mrb[0].mxu0
      %v1088 = vadd.f32 %v981, %v1087
      %v1089 = vpop.f32.mrb[0].mxu0
      %v1090 = vpop.f32.mrb[0].mxu0
      %1091 = vdwg.mxu0
      %1092 = vmatprep.subr.bf16.mxu0 %v1049
      %1093 = vmatpush1.bf16.msra.mxu0 %v1046
      %1094 = vmatprep.subr.bf16.mxu0 0
      %1095 = vmatpush1.bf16.msra.mxu0 0
      %1096 = vmatprep.subr.bf16.mxu0 0
      %1097 = vmatpush1.bf16.msra.mxu0 0
      %1098 = vmatprep.subr.bf16.mxu0 0
      %1099 = vmatpush1.bf16.msra.mxu0 0
      %1100 = vmatprep.subr.bf16.mxu0 0
      %1101 = vmatpush1.bf16.msra.mxu0 0
      %1102 = vmatprep.subr.bf16.mxu0 0
      %1103 = vmatpush1.bf16.msra.mxu0 0
      %1104 = vmatprep.subr.bf16.mxu0 0
      %1105 = vmatpush1.bf16.msra.mxu0 0
      %1106 = vmatprep.subr.bf16.mxu0 0
      %1107 = vmatpush1.bf16.msra.mxu0 0
      %1108 = vmatprep.subr.bf16.mxu0 0
      %1109 = vmatpush1.bf16.msra.mxu0 0
      %1110 = vmatprep.subr.bf16.mxu0 0
      %1111 = vmatpush1.bf16.msra.mxu0 0
      %1112 = vmatprep.subr.bf16.mxu0 0
      %1113 = vmatpush1.bf16.msra.mxu0 0
      %1114 = vmatprep.subr.bf16.mxu0 0
      %1115 = vmatpush1.bf16.msra.mxu0 0
      %1116 = vmatprep.subr.bf16.mxu0 0
      %1117 = vmatpush1.bf16.msra.mxu0 0
      %1118 = vmatprep.subr.bf16.mxu0 0
      %1119 = vmatpush1.bf16.msra.mxu0 0
      %1120 = vmatprep.subr.bf16.mxu0 0
      %1121 = vmatpush1.bf16.msra.mxu0 0
      %1122 = vmatprep.subr.bf16.mxu0 0
      %1123 = vmatpush1.bf16.msra.mxu0 0
      %1124 = vmatprep.mubr.bf16.mxu0 0
      %1125 = vmatmul.mubr.bf16.gmra.mrb[0].mxu0 %v1037
      %v1126 = vpop.f32.mrb[0].mxu0
      %v1127 = vadd.f32 %v1020, %v1126
      %v1128 = vpop.f32.mrb[0].mxu0
      %v1129 = vadd.f32 %v1022, %v1128
      %v1130 = vpop.f32.mrb[0].mxu0
      %v1131 = vpop.f32.mrb[0].mxu0
      %1132 = vdwg.mxu0
      %1133 = vrot.lane.b32.xlu0 %v690, 112
      %v1134 = vpop.permute.xlu0 %1133
      %1135 = vrot.lane.b32.xlu0 %v690, 80
      %v1136 = vpop.permute.xlu0 %1135
      %v1138 = vsel %vm694, %v1134, 0
      %v1141 = vsel %vm694, %v1136, 0
      %1143 = vmatprep.subr.bf16.mxu0 0
      %1144 = vmatpush1.bf16.xpose.msra.mxu0 %v1141
      %1145 = vmatprep.subr.bf16.mxu0 0
      %1146 = vmatpush1.bf16.xpose.msra.mxu0 0
      %1147 = vmatprep.subr.bf16.mxu0 0
      %1148 = vmatpush1.bf16.xpose.msra.mxu0 0
      %1149 = vmatprep.subr.bf16.mxu0 0
      %1150 = vmatpush1.bf16.xpose.msra.mxu0 0
      %1151 = vmatprep.subr.bf16.mxu0 0
      %1152 = vmatpush1.bf16.xpose.msra.mxu0 0
      %1153 = vmatprep.subr.bf16.mxu0 0
      %1154 = vmatpush1.bf16.xpose.msra.mxu0 0
      %1155 = vmatprep.subr.bf16.mxu0 0
      %1156 = vmatpush1.bf16.xpose.msra.mxu0 0
      %1157 = vmatprep.subr.bf16.mxu0 0
      %1158 = vmatpush1.bf16.xpose.msra.mxu0 0
      %1159 = vmatprep.subr.bf16.mxu0 0
      %1160 = vmatpush1.bf16.xpose.msra.mxu0 0
      %1161 = vmatprep.subr.bf16.mxu0 0
      %1162 = vmatpush1.bf16.xpose.msra.mxu0 0
      %1163 = vmatprep.subr.bf16.mxu0 0
      %1164 = vmatpush1.bf16.xpose.msra.mxu0 0
      %1165 = vmatprep.subr.bf16.mxu0 0
      %1166 = vmatpush1.bf16.xpose.msra.mxu0 0
      %1167 = vmatprep.subr.bf16.mxu0 0
      %1168 = vmatpush1.bf16.xpose.msra.mxu0 0
      %1169 = vmatprep.subr.bf16.mxu0 0
      %1170 = vmatpush1.bf16.xpose.msra.mxu0 0
      %1171 = vmatprep.subr.bf16.mxu0 0
      %1172 = vmatpush1.bf16.xpose.msra.mxu0 0
      %1173 = vmatprep.subr.bf16.mxu0 0
      %1174 = vmatpush1.bf16.xpose.msra.mxu0 0
      %1175 = vmatprep.mubr.bf16.mxu0 0
      %1176 = vmatmul.mubr.bf16.gmra.mrb[0].mxu0 %v1138
      %v1177 = vpop.f32.mrb[0].mxu0
      %v1178 = vadd.f32 0.0, %v1177
      %v1179 = vpop.f32.mrb[0].mxu0
      %v1180 = vpop.f32.mrb[0].mxu0
      %v1181 = vpop.f32.mrb[0].mxu0
      %1182 = vdwg.mxu0
      %v1183 = vmul.f32 %v1178, 0.35355338
      %v1184 = vsel %vm742, %v1183, -inf
      %1185 = vmax.xlane.f32.xlu0 %v1184
      %v1186 = vpop.xlane.xlu0 %1185
      %v1187 = vsub.f32 %v1183, %v1186
      %v1188 = vmul.f32 %v1187, 1.442695
      %v1189 = vpow.pop %v1188
      %v1190 = vsel %vm742, %v1189, 0.0
      %1191 = vadd.xlane.f32.xlu0 %v1190
      %v1192 = vpop.xlane.xlu0 %1191
      %v1193 = vrcp.pop %v1192
      %v1194 = vmul.f32 %v1189, %v1193
      %v1195 = vpack.c.bf16 %v1194, %v1194
      %1196 = vrot.lane.b32.xlu0 %v690, 48
      %v1197 = vpop.permute.xlu0 %1196
      %v1199 = vsel %vm757, %v1195, 0
      %v1202 = vsel %vm761, %v1197, 0
      %1204 = vmatprep.subr.bf16.mxu0 0
      %1205 = vmatpush1.bf16.msra.mxu0 %v1202
      %1206 = vmatprep.subr.bf16.mxu0 0
      %1207 = vmatpush1.bf16.msra.mxu0 0
      %1208 = vmatprep.subr.bf16.mxu0 0
      %1209 = vmatpush1.bf16.msra.mxu0 0
      %1210 = vmatprep.subr.bf16.mxu0 0
      %1211 = vmatpush1.bf16.msra.mxu0 0
      %1212 = vmatprep.subr.bf16.mxu0 0
      %1213 = vmatpush1.bf16.msra.mxu0 0
      %1214 = vmatprep.subr.bf16.mxu0 0
      %1215 = vmatpush1.bf16.msra.mxu0 0
      %1216 = vmatprep.subr.bf16.mxu0 0
      %1217 = vmatpush1.bf16.msra.mxu0 0
      %1218 = vmatprep.subr.bf16.mxu0 0
      %1219 = vmatpush1.bf16.msra.mxu0 0
      %1220 = vmatprep.subr.bf16.mxu0 0
      %1221 = vmatpush1.bf16.msra.mxu0 0
      %1222 = vmatprep.subr.bf16.mxu0 0
      %1223 = vmatpush1.bf16.msra.mxu0 0
      %1224 = vmatprep.subr.bf16.mxu0 0
      %1225 = vmatpush1.bf16.msra.mxu0 0
      %1226 = vmatprep.subr.bf16.mxu0 0
      %1227 = vmatpush1.bf16.msra.mxu0 0
      %1228 = vmatprep.subr.bf16.mxu0 0
      %1229 = vmatpush1.bf16.msra.mxu0 0
      %1230 = vmatprep.subr.bf16.mxu0 0
      %1231 = vmatpush1.bf16.msra.mxu0 0
      %1232 = vmatprep.subr.bf16.mxu0 0
      %1233 = vmatpush1.bf16.msra.mxu0 0
      %1234 = vmatprep.subr.bf16.mxu0 0
      %1235 = vmatpush1.bf16.msra.mxu0 0
      %1236 = vmatprep.mubr.bf16.mxu0 0
      %1237 = vmatmul.mubr.bf16.gmra.mrb[0].mxu0 %v1199
      %v1238 = vpop.f32.mrb[0].mxu0
      %v1239 = vadd.f32 0.0, %v1238
      %v1240 = vpop.f32.mrb[0].mxu0
      %v1241 = vpop.f32.mrb[0].mxu0
      %v1242 = vpop.f32.mrb[0].mxu0
      %1243 = vdwg.mxu0
      %v1244 = vpack.c.bf16 %v1239, %v1239
      %v1247 = vunpack.c.l.b16 %v686
      %v1248 = vunpack.c.h.b16 %v686
      %v1249 = vunpack.c.l.b16 %v687
      %v1250 = vunpack.c.h.b16 %v687
      %v1251 = vpack.c.b16 %v1247, %v1247
      %v1252 = vpack.c.b16 %v1248, %v1248
      %v1253 = vpack.c.b16 %v1249, %v1249
      %v1254 = vpack.c.b16 %v1250, %v1250
      %v1256 = vsel %vm694, %v1244, 0
      %v1259 = vsel %vm931, %v1251, 0
      %v1262 = vsel %vm931, %v1252, 0
      %v1265 = vsel %vm931, %v1253, 0
      %v1268 = vsel %vm931, %v1254, 0
      %1270 = vmatprep.subr.bf16.mxu0 %v1262
      %1271 = vmatpush1.bf16.msra.mxu0 %v1259
      %1272 = vmatprep.subr.bf16.mxu0 0
      %1273 = vmatpush1.bf16.msra.mxu0 0
      %1274 = vmatprep.subr.bf16.mxu0 0
      %1275 = vmatpush1.bf16.msra.mxu0 0
      %1276 = vmatprep.subr.bf16.mxu0 0
      %1277 = vmatpush1.bf16.msra.mxu0 0
      %1278 = vmatprep.subr.bf16.mxu0 0
      %1279 = vmatpush1.bf16.msra.mxu0 0
      %1280 = vmatprep.subr.bf16.mxu0 0
      %1281 = vmatpush1.bf16.msra.mxu0 0
      %1282 = vmatprep.subr.bf16.mxu0 0
      %1283 = vmatpush1.bf16.msra.mxu0 0
      %1284 = vmatprep.subr.bf16.mxu0 0
      %1285 = vmatpush1.bf16.msra.mxu0 0
      %1286 = vmatprep.subr.bf16.mxu0 0
      %1287 = vmatpush1.bf16.msra.mxu0 0
      %1288 = vmatprep.subr.bf16.mxu0 0
      %1289 = vmatpush1.bf16.msra.mxu0 0
      %1290 = vmatprep.subr.bf16.mxu0 0
      %1291 = vmatpush1.bf16.msra.mxu0 0
      %1292 = vmatprep.subr.bf16.mxu0 0
      %1293 = vmatpush1.bf16.msra.mxu0 0
      %1294 = vmatprep.subr.bf16.mxu0 0
      %1295 = vmatpush1.bf16.msra.mxu0 0
      %1296 = vmatprep.subr.bf16.mxu0 0
      %1297 = vmatpush1.bf16.msra.mxu0 0
      %1298 = vmatprep.subr.bf16.mxu0 0
      %1299 = vmatpush1.bf16.msra.mxu0 0
      %1300 = vmatprep.subr.bf16.mxu0 0
      %1301 = vmatpush1.bf16.msra.mxu0 0
      %1302 = vmatprep.mubr.bf16.mxu0 0
      %1303 = vmatmul.mubr.bf16.gmra.mrb[0].mxu0 %v1256
      %v1304 = vpop.f32.mrb[0].mxu0
      %v1305 = vadd.f32 0.0, %v1304
      %v1306 = vpop.f32.mrb[0].mxu0
      %v1307 = vadd.f32 0.0, %v1306
      %v1308 = vpop.f32.mrb[0].mxu0
      %v1309 = vpop.f32.mrb[0].mxu0
      %1310 = vdwg.mxu0
      %1311 = vmatprep.subr.bf16.mxu0 %v1268
      %1312 = vmatpush1.bf16.msra.mxu0 %v1265
      %1313 = vmatprep.subr.bf16.mxu0 0
      %1314 = vmatpush1.bf16.msra.mxu0 0
      %1315 = vmatprep.subr.bf16.mxu0 0
      %1316 = vmatpush1.bf16.msra.mxu0 0
      %1317 = vmatprep.subr.bf16.mxu0 0
      %1318 = vmatpush1.bf16.msra.mxu0 0
      %1319 = vmatprep.subr.bf16.mxu0 0
      %1320 = vmatpush1.bf16.msra.mxu0 0
      %1321 = vmatprep.subr.bf16.mxu0 0
      %1322 = vmatpush1.bf16.msra.mxu0 0
      %1323 = vmatprep.subr.bf16.mxu0 0
      %1324 = vmatpush1.bf16.msra.mxu0 0
      %1325 = vmatprep.subr.bf16.mxu0 0
      %1326 = vmatpush1.bf16.msra.mxu0 0
      %1327 = vmatprep.subr.bf16.mxu0 0
      %1328 = vmatpush1.bf16.msra.mxu0 0
      %1329 = vmatprep.subr.bf16.mxu0 0
      %1330 = vmatpush1.bf16.msra.mxu0 0
      %1331 = vmatprep.subr.bf16.mxu0 0
      %1332 = vmatpush1.bf16.msra.mxu0 0
      %1333 = vmatprep.subr.bf16.mxu0 0
      %1334 = vmatpush1.bf16.msra.mxu0 0
      %1335 = vmatprep.subr.bf16.mxu0 0
      %1336 = vmatpush1.bf16.msra.mxu0 0
      %1337 = vmatprep.subr.bf16.mxu0 0
      %1338 = vmatpush1.bf16.msra.mxu0 0
      %1339 = vmatprep.subr.bf16.mxu0 0
      %1340 = vmatpush1.bf16.msra.mxu0 0
      %1341 = vmatprep.subr.bf16.mxu0 0
      %1342 = vmatpush1.bf16.msra.mxu0 0
      %1343 = vmatprep.mubr.bf16.mxu0 0
      %1344 = vmatmul.mubr.bf16.gmra.mrb[0].mxu0 %v1256
      %v1345 = vpop.f32.mrb[0].mxu0
      %v1346 = vadd.f32 0.0, %v1345
      %v1347 = vpop.f32.mrb[0].mxu0
      %v1348 = vadd.f32 0.0, %v1347
      %v1349 = vpop.f32.mrb[0].mxu0
      %v1350 = vpop.f32.mrb[0].mxu0
      %1351 = vdwg.mxu0
      %v1352 = vadd.f32 %v1086, %v1305
      %v1353 = vadd.f32 %v1088, %v1307
      %v1354 = vadd.f32 %v1127, %v1346
      %v1355 = vadd.f32 %v1129, %v1348
      %1356 = vrot.lane.b32.xlu0 %v690, 104
      %v1357 = vpop.permute.xlu0 %1356
      %1358 = vrot.lane.b32.xlu0 %v690, 72
      %v1359 = vpop.permute.xlu0 %1358
      %v1361 = vsel %vm694, %v1357, 0
      %v1364 = vsel %vm694, %v1359, 0
      %1366 = vmatprep.subr.bf16.mxu0 0
      %1367 = vmatpush1.bf16.xpose.msra.mxu0 %v1364
      %1368 = vmatprep.subr.bf16.mxu0 0
      %1369 = vmatpush1.bf16.xpose.msra.mxu0 0
      %1370 = vmatprep.subr.bf16.mxu0 0
      %1371 = vmatpush1.bf16.xpose.msra.mxu0 0
      %1372 = vmatprep.subr.bf16.mxu0 0
      %1373 = vmatpush1.bf16.xpose.msra.mxu0 0
      %1374 = vmatprep.subr.bf16.mxu0 0
      %1375 = vmatpush1.bf16.xpose.msra.mxu0 0
      %1376 = vmatprep.subr.bf16.mxu0 0
      %1377 = vmatpush1.bf16.xpose.msra.mxu0 0
      %1378 = vmatprep.subr.bf16.mxu0 0
      %1379 = vmatpush1.bf16.xpose.msra.mxu0 0
      %1380 = vmatprep.subr.bf16.mxu0 0
      %1381 = vmatpush1.bf16.xpose.msra.mxu0 0
      %1382 = vmatprep.subr.bf16.mxu0 0
      %1383 = vmatpush1.bf16.xpose.msra.mxu0 0
      %1384 = vmatprep.subr.bf16.mxu0 0
      %1385 = vmatpush1.bf16.xpose.msra.mxu0 0
      %1386 = vmatprep.subr.bf16.mxu0 0
      %1387 = vmatpush1.bf16.xpose.msra.mxu0 0
      %1388 = vmatprep.subr.bf16.mxu0 0
      %1389 = vmatpush1.bf16.xpose.msra.mxu0 0
      %1390 = vmatprep.subr.bf16.mxu0 0
      %1391 = vmatpush1.bf16.xpose.msra.mxu0 0
      %1392 = vmatprep.subr.bf16.mxu0 0
      %1393 = vmatpush1.bf16.xpose.msra.mxu0 0
      %1394 = vmatprep.subr.bf16.mxu0 0
      %1395 = vmatpush1.bf16.xpose.msra.mxu0 0
      %1396 = vmatprep.subr.bf16.mxu0 0
      %1397 = vmatpush1.bf16.xpose.msra.mxu0 0
      %1398 = vmatprep.mubr.bf16.mxu0 0
      %1399 = vmatmul.mubr.bf16.gmra.mrb[0].mxu0 %v1361
      %v1400 = vpop.f32.mrb[0].mxu0
      %v1401 = vadd.f32 0.0, %v1400
      %v1402 = vpop.f32.mrb[0].mxu0
      %v1403 = vpop.f32.mrb[0].mxu0
      %v1404 = vpop.f32.mrb[0].mxu0
      %1405 = vdwg.mxu0
      %v1406 = vmul.f32 %v1401, 0.35355338
      %v1407 = vsel %vm742, %v1406, -inf
      %1408 = vmax.xlane.f32.xlu0 %v1407
      %v1409 = vpop.xlane.xlu0 %1408
      %v1410 = vsub.f32 %v1406, %v1409
      %v1411 = vmul.f32 %v1410, 1.442695
      %v1412 = vpow.pop %v1411
      %v1413 = vsel %vm742, %v1412, 0.0
      %1414 = vadd.xlane.f32.xlu0 %v1413
      %v1415 = vpop.xlane.xlu0 %1414
      %v1416 = vrcp.pop %v1415
      %v1417 = vmul.f32 %v1412, %v1416
      %v1418 = vpack.c.bf16 %v1417, %v1417
      %1419 = vrot.lane.b32.xlu0 %v690, 40
      %v1420 = vpop.permute.xlu0 %1419
      %v1422 = vsel %vm757, %v1418, 0
      %v1425 = vsel %vm761, %v1420, 0
      %1427 = vmatprep.subr.bf16.mxu0 0
      %1428 = vmatpush1.bf16.msra.mxu0 %v1425
      %1429 = vmatprep.subr.bf16.mxu0 0
      %1430 = vmatpush1.bf16.msra.mxu0 0
      %1431 = vmatprep.subr.bf16.mxu0 0
      %1432 = vmatpush1.bf16.msra.mxu0 0
      %1433 = vmatprep.subr.bf16.mxu0 0
      %1434 = vmatpush1.bf16.msra.mxu0 0
      %1435 = vmatprep.subr.bf16.mxu0 0
      %1436 = vmatpush1.bf16.msra.mxu0 0
      %1437 = vmatprep.subr.bf16.mxu0 0
      %1438 = vmatpush1.bf16.msra.mxu0 0
      %1439 = vmatprep.subr.bf16.mxu0 0
      %1440 = vmatpush1.bf16.msra.mxu0 0
      %1441 = vmatprep.subr.bf16.mxu0 0
      %1442 = vmatpush1.bf16.msra.mxu0 0
      %1443 = vmatprep.subr.bf16.mxu0 0
      %1444 = vmatpush1.bf16.msra.mxu0 0
      %1445 = vmatprep.subr.bf16.mxu0 0
      %1446 = vmatpush1.bf16.msra.mxu0 0
      %1447 = vmatprep.subr.bf16.mxu0 0
      %1448 = vmatpush1.bf16.msra.mxu0 0
      %1449 = vmatprep.subr.bf16.mxu0 0
      %1450 = vmatpush1.bf16.msra.mxu0 0
      %1451 = vmatprep.subr.bf16.mxu0 0
      %1452 = vmatpush1.bf16.msra.mxu0 0
      %1453 = vmatprep.subr.bf16.mxu0 0
      %1454 = vmatpush1.bf16.msra.mxu0 0
      %1455 = vmatprep.subr.bf16.mxu0 0
      %1456 = vmatpush1.bf16.msra.mxu0 0
      %1457 = vmatprep.subr.bf16.mxu0 0
      %1458 = vmatpush1.bf16.msra.mxu0 0
      %1459 = vmatprep.mubr.bf16.mxu0 0
      %1460 = vmatmul.mubr.bf16.gmra.mrb[0].mxu0 %v1422
      %v1461 = vpop.f32.mrb[0].mxu0
      %v1462 = vadd.f32 0.0, %v1461
      %v1463 = vpop.f32.mrb[0].mxu0
      %v1464 = vpop.f32.mrb[0].mxu0
      %v1465 = vpop.f32.mrb[0].mxu0
      %1466 = vdwg.mxu0
      %v1467 = vpack.c.bf16 %v1462, %v1462
      %v1470 = vunpack.c.l.b16 %v688
      %v1471 = vunpack.c.h.b16 %v688
      %v1472 = vunpack.c.l.b16 %v689
      %v1473 = vunpack.c.h.b16 %v689
      %v1474 = vpack.c.b16 %v1470, %v1470
      %v1475 = vpack.c.b16 %v1471, %v1471
      %v1476 = vpack.c.b16 %v1472, %v1472
      %v1477 = vpack.c.b16 %v1473, %v1473
      %v1479 = vsel %vm694, %v1467, 0
      %v1482 = vsel %vm931, %v1474, 0
      %v1485 = vsel %vm931, %v1475, 0
      %v1488 = vsel %vm931, %v1476, 0
      %v1491 = vsel %vm931, %v1477, 0
      %1493 = vmatprep.subr.bf16.mxu0 %v1485
      %1494 = vmatpush1.bf16.msra.mxu0 %v1482
      %1495 = vmatprep.subr.bf16.mxu0 0
      %1496 = vmatpush1.bf16.msra.mxu0 0
      %1497 = vmatprep.subr.bf16.mxu0 0
      %1498 = vmatpush1.bf16.msra.mxu0 0
      %1499 = vmatprep.subr.bf16.mxu0 0
      %1500 = vmatpush1.bf16.msra.mxu0 0
      %1501 = vmatprep.subr.bf16.mxu0 0
      %1502 = vmatpush1.bf16.msra.mxu0 0
      %1503 = vmatprep.subr.bf16.mxu0 0
      %1504 = vmatpush1.bf16.msra.mxu0 0
      %1505 = vmatprep.subr.bf16.mxu0 0
      %1506 = vmatpush1.bf16.msra.mxu0 0
      %1507 = vmatprep.subr.bf16.mxu0 0
      %1508 = vmatpush1.bf16.msra.mxu0 0
      %1509 = vmatprep.subr.bf16.mxu0 0
      %1510 = vmatpush1.bf16.msra.mxu0 0
      %1511 = vmatprep.subr.bf16.mxu0 0
      %1512 = vmatpush1.bf16.msra.mxu0 0
      %1513 = vmatprep.subr.bf16.mxu0 0
      %1514 = vmatpush1.bf16.msra.mxu0 0
      %1515 = vmatprep.subr.bf16.mxu0 0
      %1516 = vmatpush1.bf16.msra.mxu0 0
      %1517 = vmatprep.subr.bf16.mxu0 0
      %1518 = vmatpush1.bf16.msra.mxu0 0
      %1519 = vmatprep.subr.bf16.mxu0 0
      %1520 = vmatpush1.bf16.msra.mxu0 0
      %1521 = vmatprep.subr.bf16.mxu0 0
      %1522 = vmatpush1.bf16.msra.mxu0 0
      %1523 = vmatprep.subr.bf16.mxu0 0
      %1524 = vmatpush1.bf16.msra.mxu0 0
      %1525 = vmatprep.mubr.bf16.mxu0 0
      %1526 = vmatmul.mubr.bf16.gmra.mrb[0].mxu0 %v1479
      %v1527 = vpop.f32.mrb[0].mxu0
      %v1528 = vadd.f32 0.0, %v1527
      %v1529 = vpop.f32.mrb[0].mxu0
      %v1530 = vadd.f32 0.0, %v1529
      %v1531 = vpop.f32.mrb[0].mxu0
      %v1532 = vpop.f32.mrb[0].mxu0
      %1533 = vdwg.mxu0
      %1534 = vmatprep.subr.bf16.mxu0 %v1491
      %1535 = vmatpush1.bf16.msra.mxu0 %v1488
      %1536 = vmatprep.subr.bf16.mxu0 0
      %1537 = vmatpush1.bf16.msra.mxu0 0
      %1538 = vmatprep.subr.bf16.mxu0 0
      %1539 = vmatpush1.bf16.msra.mxu0 0
      %1540 = vmatprep.subr.bf16.mxu0 0
      %1541 = vmatpush1.bf16.msra.mxu0 0
      %1542 = vmatprep.subr.bf16.mxu0 0
      %1543 = vmatpush1.bf16.msra.mxu0 0
      %1544 = vmatprep.subr.bf16.mxu0 0
      %1545 = vmatpush1.bf16.msra.mxu0 0
      %1546 = vmatprep.subr.bf16.mxu0 0
      %1547 = vmatpush1.bf16.msra.mxu0 0
      %1548 = vmatprep.subr.bf16.mxu0 0
      %1549 = vmatpush1.bf16.msra.mxu0 0
      %1550 = vmatprep.subr.bf16.mxu0 0
      %1551 = vmatpush1.bf16.msra.mxu0 0
      %1552 = vmatprep.subr.bf16.mxu0 0
      %1553 = vmatpush1.bf16.msra.mxu0 0
      %1554 = vmatprep.subr.bf16.mxu0 0
      %1555 = vmatpush1.bf16.msra.mxu0 0
      %1556 = vmatprep.subr.bf16.mxu0 0
      %1557 = vmatpush1.bf16.msra.mxu0 0
      %1558 = vmatprep.subr.bf16.mxu0 0
      %1559 = vmatpush1.bf16.msra.mxu0 0
      %1560 = vmatprep.subr.bf16.mxu0 0
      %1561 = vmatpush1.bf16.msra.mxu0 0
      %1562 = vmatprep.subr.bf16.mxu0 0
      %1563 = vmatpush1.bf16.msra.mxu0 0
      %1564 = vmatprep.subr.bf16.mxu0 0
      %1565 = vmatpush1.bf16.msra.mxu0 0
      %1566 = vmatprep.mubr.bf16.mxu0 0
      %1567 = vmatmul.mubr.bf16.gmra.mrb[0].mxu0 %v1479
      %v1568 = vpop.f32.mrb[0].mxu0
      %v1569 = vadd.f32 0.0, %v1568
      %v1570 = vpop.f32.mrb[0].mxu0
      %v1571 = vadd.f32 0.0, %v1570
      %v1572 = vpop.f32.mrb[0].mxu0
      %v1573 = vpop.f32.mrb[0].mxu0
      %1574 = vdwg.mxu0
      %v1575 = vadd.f32 %v1352, %v1528
      %v1576 = vadd.f32 %v1353, %v1530
      %v1577 = vadd.f32 %v1354, %v1569
      %v1578 = vadd.f32 %v1355, %v1571
      %v1579 = vld [vmem:[%s4] sm:$0xf]
      %v1581 = vlaneseq
      %v1582 = vshrl.u32 %v1581, 7
      %v1583 = vsub.s32 0, %v1582
      %v1584 = vrot.slane %v1579, %v1583
      %v1585 = vlaneseq
      %v1586 = vshrl.u32 %v1585, 7
      %v1587 = vsub.s32 1, %v1586
      %v1588 = vrot.slane %v1579, %v1587
      %v1589 = vlaneseq
      %v1590 = vshrl.u32 %v1589, 7
      %v1591 = vsub.s32 2, %v1590
      %v1592 = vrot.slane %v1579, %v1591
      %v1593 = vlaneseq
      %v1594 = vshrl.u32 %v1593, 7
      %v1595 = vsub.s32 3, %v1594
      %v1596 = vrot.slane %v1579, %v1595
      %v1601 = vadd.f32 %v1575, %v1584
      %v1602 = vadd.f32 %v1576, %v1588
      %v1603 = vadd.f32 %v1577, %v1592
      %v1604 = vadd.f32 %v1578, %v1596
      %v1605 = vld [vmem:[%s320] sm:$0xff]
      %v1606 = vld [vmem:[%s320 + $0x8] sm:$0xff]
      %v1609 = vcombine.high %v1605, %v1605
      %v1610 = vcombine.high %v1606, %v1606
      %v1613 = vadd.f32 %v1601, %v1605
      %v1614 = vadd.f32 %v1602, %v1609
      %v1615 = vadd.f32 %v1603, %v1606
      %v1616 = vadd.f32 %v1604, %v1610
      %v1617 = vld [vmem:[%s6] sm:$0xf]
      %v1619 = vlaneseq
      %v1620 = vshrl.u32 %v1619, 7
      %v1621 = vsub.s32 0, %v1620
      %v1622 = vrot.slane %v1617, %v1621
      %v1623 = vlaneseq
      %v1624 = vshrl.u32 %v1623, 7
      %v1625 = vsub.s32 1, %v1624
      %v1626 = vrot.slane %v1617, %v1625
      %v1627 = vlaneseq
      %v1628 = vshrl.u32 %v1627, 7
      %v1629 = vsub.s32 2, %v1628
      %v1630 = vrot.slane %v1617, %v1629
      %v1631 = vlaneseq
      %v1632 = vshrl.u32 %v1631, 7
      %v1633 = vsub.s32 3, %v1632
      %v1634 = vrot.slane %v1617, %v1633
      %v1639 = vmul.f32 %v1613, %v1622
      %v1640 = vmul.f32 %v1614, %v1626
      %v1641 = vmul.f32 %v1615, %v1630
      %v1642 = vmul.f32 %v1616, %v1634
      %v1643 = vld [vmem:[%s7] sm:$0xf]
      %v1645 = vlaneseq
      %v1646 = vshrl.u32 %v1645, 7
      %v1647 = vsub.s32 0, %v1646
      %v1648 = vrot.slane %v1643, %v1647
      %v1649 = vlaneseq
      %v1650 = vshrl.u32 %v1649, 7
      %v1651 = vsub.s32 1, %v1650
      %v1652 = vrot.slane %v1643, %v1651
      %v1653 = vlaneseq
      %v1654 = vshrl.u32 %v1653, 7
      %v1655 = vsub.s32 2, %v1654
      %v1656 = vrot.slane %v1643, %v1655
      %v1657 = vlaneseq
      %v1658 = vshrl.u32 %v1657, 7
      %v1659 = vsub.s32 3, %v1658
      %v1660 = vrot.slane %v1643, %v1659
      %v1665 = vadd.f32 %v1639, %v1648
      %v1666 = vadd.f32 %v1640, %v1652
      %v1667 = vadd.f32 %v1641, %v1656
      %v1668 = vadd.f32 %v1642, %v1660
      %v1673 = vcombine.low %v1665, %v1666
      %v1674 = vcombine.low %v1667, %v1668
      %1677 = vst [vmem:[%s325] sm:$0xff] %v1673
      %1678 = vst [vmem:[%s325 + $0x8] sm:$0xff] %v1674
      %p1679 = scmp.lt.s32.totalorder %s19, 1
      %s1680 = scalar_select %p1679, %s19, 1
      %s1681 = smul.addr %s1680, 4
      %s1682 = smul.addr %s1681, 4
      %s1683 = scalar_lea.vmem %s8, %s1682
      // Predicated region
      $region53: #{_lambda_.4} parent=51 // pred_check
        %p1684 = pneg %p215
      $region54: #{_lambda_.4} parent=51 // pred_check_branch
        %1686 = sbr.rel (%p1684) target = $region56
      $region55: #{_lambda_.4} parent=51 // pred_region
        _
      $region56: #{_lambda_.4} parent=51 // pred_fallthru
        _
    $region52: #{_lambda_.4} parent=5 // pred_fallthru
      _
    %p1687 = scmp.le.s32.totalorder 2, %s14
    // Predicated region
    $region57: #{_lambda_.4} parent=5 // pred_check
      %p1688 = pneg %p1687
    $region58: #{_lambda_.4} parent=5 // pred_check_branch
      %1690 = sbr.rel (%p1688) target = $region60
    $region59: #{_lambda_.4} parent=5 // pred_region
      %s1691 = ssub.s32 %s14, 2
      // Predicated region
      $region61: #{_lambda_.4} parent=59 // pred_check
        %p1692 = pneg %p221
      $region62: #{_lambda_.4} parent=59 // pred_check_branch
        %1694 = sbr.rel (%p1692) target = $region64
      $region63: #{_lambda_.4} parent=59 // pred_region
        %p1695 = scmp.lt.s32.totalorder %s20, 1
        %s1696 = scalar_select %p1695, %s20, 1
        %s1697 = smul.addr %s1696, 4
        %s1698 = smul.addr %s1697, 4
        %s1699 = scalar_lea.vmem %s8, %s1698
      $region64: #{_lambda_.4} parent=59 // pred_fallthru
        _
    $region60: #{_lambda_.4} parent=5 // pred_fallthru
      _
  $region6: #{_lambda_.4} parent=0 // loop_footer
    %s18 = sadd.s32 1, %s14
  $region7: #{_lambda_.4} parent=0 // loop_footer_branch
    %13 = sbr.rel target = $region3
  $region8: #{_lambda_.4} parent=0 // loop_exit
    _

// kernel: _lambda_.3
$region0: #{_lambda_.3}
  #allocation0 [shape = 'u32[]', space=smem, size = 0x4, offset = 0x4, fixed_abs, tag = 'smem constant byte address 0x4 - core index']
  #allocation1 [shape = 'u32[144,128]{1,0:T(1,128)}', space=vmem, size = 0x12000, scoped, tag = 'internal scratch']
  %s0 = inlined_call_operand.hbm [shape: f32[2,64,32], index: 0, kind: input, shape index: {}]
  %s1 = inlined_call_operand.vmem [shape: bf16[32,96], index: 1, kind: input, shape index: {}]
  %s2 = inlined_call_operand.vmem [shape: f32[1,96], index: 2, kind: input, shape index: {}]
  %s3 = inlined_call_operand.vmem [shape: bf16[32,32], index: 3, kind: input, shape index: {}]
  %s4 = inlined_call_operand.vmem [shape: f32[1,32], index: 4, kind: input, shape index: {}]
  %s5 = inlined_call_operand.vmem [shape: f32[2,64,32], index: 5, kind: output, shape index: {}]
  %s6 = sld [smem:[#allocation0]]
  $region57: #{_lambda_.3} parent=0
    _
  %s8 = ssub.s32 1, %s6
  %s9 = scalar_select 0, %s8, %s6
  $region1: #{_lambda_.3} parent=0
    #allocation2 [shape = 'u8[65536]{0}', space=vmem, size = 0x10000, scoped, tag = 'input window, operand 0']
    #allocation3 [shape = 's32[2]{0}', space=sflag, size = 0x8, scoped, tag = 'scoped memory for _lambda_.3']
    %10 = vsyncpa [#allocation3], 0
    %s11 = scalar_lea.sflag [#allocation3], 1
    %12 = vsyncpa %s11, 0
    loop: start=0, step=1, limit=4
    $region2: #{_lambda_.3} parent=1 // loop_pre_header
      _
    $region3: #{_lambda_.3} parent=1 // loop_header
      %s14 = sphi 0, %s18
      %p15 = scmp.ge.s32.totalorder %s14, 4
      %s24 = sphi 0, %s26
      %s27 = sphi 0, %s24
      %s28 = sphi 0, %s27
      %s44 = sphi 0, %s28
      %s48 = sphi 0, %s48
      %s50 = sphi 0, %s48
      %s51 = sphi 0, %s50
      %s65 = sphi 0, %s51
      %s69 = sphi 0, %s69
      %s71 = sphi 0, %s69
      %s72 = sphi 0, %s71
      %s86 = sphi 0, %s72
      %s90 = sphi 0, %s90
      %s92 = sphi 0, %s90
      %s93 = sphi 0, %s92
      %s107 = sphi 0, %s93
      %s111 = sphi 0, %s111
      %s113 = sphi 0, %s111
      %s114 = sphi 0, %s113
      %s128 = sphi 0, %s114
      %s134 = sphi 0, %s136
      %s137 = sphi 0, %s134
      %s138 = sphi 0, %s137
      %s154 = sphi 0, %s138
    $region4: #{_lambda_.3} parent=1 // loop_header_branch
      %17 = sbr.rel (%p15) target = $region8
    $region5: #{_lambda_.3} parent=1 // loop_body
      %s19 = ssub.s32 %s14, 1
      %s20 = ssub.s32 %s14, 2
      %s21 = sadd.s32 %s14, 1
      %s22 = ssub.s32 %s14, %s21
      %p23 = scmp.eq.s32.totalorder %s22, 0
      %s25 = sadd.s32 %s24, 1
      %s26 = scalar_select %p23, %s24, %s25
      %p29 = pneg %p23
      %p30 = scmp.eq.s32.totalorder %s14, 1
      %p31 = por %p29, %p30
      %p32 = scmp.ne.s32.totalorder %s24, %s27
      %p33 = scmp.eq.s32.totalorder %s14, 0
      %p34 = por %p32, %p33
      %p35 = scmp.ne.s32.totalorder %s24, %s27
      %p36 = scmp.eq.s32.totalorder %s19, 1
      %p37 = por %p35, %p36
      %p38 = scmp.ne.s32.totalorder %s27, %s28
      %p39 = scmp.eq.s32.totalorder %s19, 0
      %p40 = por %p38, %p39
      %p41 = scmp.ne.s32.totalorder %s27, %s28
      %p42 = scmp.eq.s32.totalorder %s20, 1
      %p43 = por %p41, %p42
      %p45 = scmp.ne.s32.totalorder %s28, %s44
      %p46 = scmp.eq.s32.totalorder %s20, 0
      %p47 = por %p45, %p46
      %s49 = sadd.s32 %s48, 1
      %p52 = scmp.eq.s32.totalorder %s14, 1
      %p53 = scmp.ne.s32.totalorder %s48, %s50
      %p54 = scmp.eq.s32.totalorder %s14, 0
      %p55 = por %p53, %p54
      %p56 = scmp.ne.s32.totalorder %s48, %s50
      %p57 = scmp.eq.s32.totalorder %s19, 1
      %p58 = por %p56, %p57
      %p59 = scmp.ne.s32.totalorder %s50, %s51
      %p60 = scmp.eq.s32.totalorder %s19, 0
      %p61 = por %p59, %p60
      %p62 = scmp.ne.s32.totalorder %s50, %s51
      %p63 = scmp.eq.s32.totalorder %s20, 1
      %p64 = por %p62, %p63
      %p66 = scmp.ne.s32.totalorder %s51, %s65
      %p67 = scmp.eq.s32.totalorder %s20, 0
      %p68 = por %p66, %p67
      %s70 = sadd.s32 %s69, 1
      %p73 = scmp.eq.s32.totalorder %s14, 1
      %p74 = scmp.ne.s32.totalorder %s69, %s71
      %p75 = scmp.eq.s32.totalorder %s14, 0
      %p76 = por %p74, %p75
      %p77 = scmp.ne.s32.totalorder %s69, %s71
      %p78 = scmp.eq.s32.totalorder %s19, 1
      %p79 = por %p77, %p78
      %p80 = scmp.ne.s32.totalorder %s71, %s72
      %p81 = scmp.eq.s32.totalorder %s19, 0
      %p82 = por %p80, %p81
      %p83 = scmp.ne.s32.totalorder %s71, %s72
      %p84 = scmp.eq.s32.totalorder %s20, 1
      %p85 = por %p83, %p84
      %p87 = scmp.ne.s32.totalorder %s72, %s86
      %p88 = scmp.eq.s32.totalorder %s20, 0
      %p89 = por %p87, %p88
      %s91 = sadd.s32 %s90, 1
      %p94 = scmp.eq.s32.totalorder %s14, 1
      %p95 = scmp.ne.s32.totalorder %s90, %s92
      %p96 = scmp.eq.s32.totalorder %s14, 0
      %p97 = por %p95, %p96
      %p98 = scmp.ne.s32.totalorder %s90, %s92
      %p99 = scmp.eq.s32.totalorder %s19, 1
      %p100 = por %p98, %p99
      %p101 = scmp.ne.s32.totalorder %s92, %s93
      %p102 = scmp.eq.s32.totalorder %s19, 0
      %p103 = por %p101, %p102
      %p104 = scmp.ne.s32.totalorder %s92, %s93
      %p105 = scmp.eq.s32.totalorder %s20, 1
      %p106 = por %p104, %p105
      %p108 = scmp.ne.s32.totalorder %s93, %s107
      %p109 = scmp.eq.s32.totalorder %s20, 0
      %p110 = por %p108, %p109
      %s112 = sadd.s32 %s111, 1
      %p115 = scmp.eq.s32.totalorder %s14, 1
      %p116 = scmp.ne.s32.totalorder %s111, %s113
      %p117 = scmp.eq.s32.totalorder %s14, 0
      %p118 = por %p116, %p117
      %p119 = scmp.ne.s32.totalorder %s111, %s113
      %p120 = scmp.eq.s32.totalorder %s19, 1
      %p121 = por %p119, %p120
      %p122 = scmp.ne.s32.totalorder %s113, %s114
      %p123 = scmp.eq.s32.totalorder %s19, 0
      %p124 = por %p122, %p123
      %p125 = scmp.ne.s32.totalorder %s113, %s114
      %p126 = scmp.eq.s32.totalorder %s20, 1
      %p127 = por %p125, %p126
      %p129 = scmp.ne.s32.totalorder %s114, %s128
      %p130 = scmp.eq.s32.totalorder %s20, 0
      %p131 = por %p129, %p130
      %s132 = ssub.s32 %s14, %s21
      %p133 = scmp.eq.s32.totalorder %s132, 0
      %s135 = sadd.s32 %s134, 1
      %s136 = scalar_select %p133, %s134, %s135
      %p139 = pneg %p133
      %p140 = scmp.eq.s32.totalorder %s14, 1
      %p141 = por %p139, %p140
      %p142 = scmp.ne.s32.totalorder %s134, %s137
      %p143 = scmp.eq.s32.totalorder %s14, 0
      %p144 = por %p142, %p143
      %p145 = scmp.ne.s32.totalorder %s134, %s137
      %p146 = scmp.eq.s32.totalorder %s19, 1
      %p147 = por %p145, %p146
      %p148 = scmp.ne.s32.totalorder %s137, %s138
      %p149 = scmp.eq.s32.totalorder %s19, 0
      %p150 = por %p148, %p149
      %p151 = scmp.ne.s32.totalorder %s137, %s138
      %p152 = scmp.eq.s32.totalorder %s20, 1
      %p153 = por %p151, %p152
      %p155 = scmp.ne.s32.totalorder %s138, %s154
      %p156 = scmp.eq.s32.totalorder %s20, 0
      %p157 = por %p155, %p156
      %p158 = scmp.le.s32.totalorder 1, %s14
      %p159 = scmp.lt.s32.totalorder %s14, 3
      %p160 = pnand %p158, %p159
      %p161 = pneg %p160
      // Predicated region
      $region9: #{_lambda_.3} parent=5 // pred_check
        _
      $region10: #{_lambda_.3} parent=5 // pred_check_branch
        %163 = sbr.rel (%p160) target = $region12
      $region11: #{_lambda_.3} parent=5 // pred_region
        %s164 = ssub.s32 %s14, 1
        // Predicated region
        $region13: #{_lambda_.3} parent=11 // pred_check
          %p165 = pneg %p61
        $region14: #{_lambda_.3} parent=11 // pred_check_branch
          %167 = sbr.rel (%p165) target = $region16
        $region15: #{_lambda_.3} parent=11 // pred_region
          _
        $region16: #{_lambda_.3} parent=11 // pred_fallthru
          _
        // Predicated region
        $region17: #{_lambda_.3} parent=11 // pred_check
          %p168 = pneg %p82
        $region18: #{_lambda_.3} parent=11 // pred_check_branch
          %170 = sbr.rel (%p168) target = $region20
        $region19: #{_lambda_.3} parent=11 // pred_region
          _
        $region20: #{_lambda_.3} parent=11 // pred_fallthru
          _
        // Predicated region
        $region21: #{_lambda_.3} parent=11 // pred_check
          %p171 = pneg %p103
        $region22: #{_lambda_.3} parent=11 // pred_check_branch
          %173 = sbr.rel (%p171) target = $region24
        $region23: #{_lambda_.3} parent=11 // pred_region
          _
        $region24: #{_lambda_.3} parent=11 // pred_fallthru
          _
        // Predicated region
        $region25: #{_lambda_.3} parent=11 // pred_check
          %p174 = pneg %p124
        $region26: #{_lambda_.3} parent=11 // pred_check_branch
          %176 = sbr.rel (%p174) target = $region28
        $region27: #{_lambda_.3} parent=11 // pred_region
          _
        $region28: #{_lambda_.3} parent=11 // pred_fallthru
          _
      $region12: #{_lambda_.3} parent=5 // pred_fallthru
        _
      %p177 = scmp.lt.s32.totalorder %s14, 2
      // Predicated region
      $region29: #{_lambda_.3} parent=5 // pred_check
        %p178 = pneg %p177
      $region30: #{_lambda_.3} parent=5 // pred_check_branch
        %180 = sbr.rel (%p178) target = $region32
      $region31: #{_lambda_.3} parent=5 // pred_region
        // Predicated region
        $region33: #{_lambda_.3} parent=31 // pred_check
          %p181 = pneg %p34
        $region34: #{_lambda_.3} parent=31 // pred_check_branch
          %183 = sbr.rel (%p181) target = $region36
        $region35: #{_lambda_.3} parent=31 // pred_region
          %s184 = sand.u32 %s24, 1
          %s185 = scalar_lea.sflag [#allocation3], %s184
          %s186 = sand.u32 %s24, 1
          %s187 = smul.addr %s186, 64
          %s188 = scalar_lea.vmem [#allocation2], %s187
          %s190 = ssub.s32 1024, 1024
          %191 = vsyncadd %s185, %s190
          %s192 = smul.addr %s14, 8
          %s193 = smul.addr %s192, 128
          %s194 = scalar_lea.hbm %s0, %s193
          %s195 = sshll.u32 %s188, 4
          %s196 = int_to_ptr.vmem [resolvable:$true] %s195
          %201 = dma.hbm_to_vmem [thread:$0]  %s194, 1024, %s196, %s185, 128, 128, 8
        $region36: #{_lambda_.3} parent=31 // pred_fallthru
          _
      $region32: #{_lambda_.3} parent=5 // pred_fallthru
        _
      %p202 = scmp.le.s32.totalorder 1, %s14
      %p203 = scmp.lt.s32.totalorder %s14, 3
      %p204 = pnand %p202, %p203
      %p205 = pneg %p204
      // Predicated region
      $region37: #{_lambda_.3} parent=5 // pred_check
        _
      $region38: #{_lambda_.3} parent=5 // pred_check_branch
        %207 = sbr.rel (%p204) target = $region40
      $region39: #{_lambda_.3} parent=5 // pred_region
        %s208 = ssub.s32 %s14, 1
        %s209 = sand.u32 %s27, 1
        %s210 = scalar_lea.sflag [#allocation3], %s209
        %s211 = sand.u32 %s27, 1
        %s212 = smul.addr %s211, 64
        %s213 = scalar_lea.vmem [#allocation2], %s212
        // Predicated region
        $region41: #{_lambda_.3} parent=39 // pred_check
          %p214 = pneg %p40
        $region42: #{_lambda_.3} parent=39 // pred_check_branch
          %216 = sbr.rel (%p214) target = $region44
        $region43: #{_lambda_.3} parent=39 // pred_region
          %217 = dma.done %s210, 1024
        $region44: #{_lambda_.3} parent=39 // pred_fallthru
          _
        %s218 = sand.u32 %s27, 1
        %s219 = scalar_lea.sflag [#allocation3], %s218
        %s220 = sand.u32 %s27, 1
        %s221 = smul.addr %s220, 64
        %s222 = scalar_lea.vmem [#allocation2], %s221
        %p223 = pneg %p40
        %p224 = pneg %p37
        %p225 = pneg %p61
        %p226 = pneg %p58
        %p227 = pneg %p82
        %p228 = pneg %p79
        %p229 = pneg %p103
        %p230 = pneg %p100
        %p231 = pneg %p124
        %p232 = pneg %p121
        %p233 = pneg %p150
        %p234 = pneg %p147
        %p235 = scmp.lt.s32.totalorder %s19, 1
        %s236 = scalar_select %p235, %s19, 1
        %s237 = smul.addr %s236, 8
        %s238 = smul.addr %s237, 8
        %s239 = scalar_lea.vmem %s5, %s238
        %p240 = scmp.lt.s32.totalorder %s19, 1
        %s241 = scalar_select %p240, %s19, 1
        %s242 = smul.addr %s241, 8
        %s243 = smul.addr %s242, 8
        %s244 = scalar_lea.vmem %s5, %s243
        %v246 = vld [vmem:[%s213] sm:$0xff]
        %v247 = vld [vmem:[%s213 + $0x8] sm:$0xff]
        %v248 = vld [vmem:[%s213 + $0x10] sm:$0xff]
        %v249 = vld [vmem:[%s213 + $0x18] sm:$0xff]
        %v250 = vld [vmem:[%s213 + $0x20] sm:$0xff]
        %v251 = vld [vmem:[%s213 + $0x28] sm:$0xff]
        %v252 = vld [vmem:[%s213 + $0x30] sm:$0xff]
        %v253 = vld [vmem:[%s213 + $0x38] sm:$0xff]
        %v254 = vpack.c.bf16 %v247, %v246
        %v255 = vpack.c.bf16 %v249, %v248
        %v256 = vpack.c.bf16 %v251, %v250
        %v257 = vpack.c.bf16 %v253, %v252
        %v258 = vld [vmem:[%s1] sm:$0xf]
        %v259 = vld [vmem:[%s1 + $0x4] sm:$0xf]
        %v260 = vld [vmem:[%s1 + $0x8] sm:$0xf]
        %v261 = vld [vmem:[%s1 + $0xc] sm:$0xf]
        %v262 = vld [vmem:[%s2] sm:$0x1]
        %v264 = vlaneseq
        %v265 = vshrl.u32 %v264, 7
        %v266 = vsub.s32 0, %v265
        %v267 = vrot.slane %v262, %v266
        %v273 = vunpack.c.l.b16 %v258
        %v274 = vunpack.c.l.b16 %v259
        %v275 = vunpack.c.l.b16 %v260
        %v276 = vunpack.c.l.b16 %v261
        %v277 = vpack.c.b16 %v274, %v273
        %v278 = vpack.c.b16 %v276, %v275
        %vm281 = vcmask 261120
        %v283 = vsel %vm281, %v254, 0
        %v286 = vsel %vm281, %v255, 0
        %v289 = vsel %vm281, %v256, 0
        %v292 = vsel %vm281, %v257, 0
        %294 = vmatprep.subr.bf16.mxu0 0
        %295 = vmatpush1.bf16.msra.mxu0 %v277
        %296 = vmatprep.subr.bf16.mxu0 0
        %297 = vmatpush1.bf16.msra.mxu0 %v278
        %298 = vmatprep.subr.bf16.mxu0 0
        %299 = vmatpush1.bf16.msra.mxu0 0
        %300 = vmatprep.subr.bf16.mxu0 0
        %301 = vmatpush1.bf16.msra.mxu0 0
        %302 = vmatprep.subr.bf16.mxu0 0
        %303 = vmatpush1.bf16.msra.mxu0 0
        %304 = vmatprep.subr.bf16.mxu0 0
        %305 = vmatpush1.bf16.msra.mxu0 0
        %306 = vmatprep.subr.bf16.mxu0 0
        %307 = vmatpush1.bf16.msra.mxu0 0
        %308 = vmatprep.subr.bf16.mxu0 0
        %309 = vmatpush1.bf16.msra.mxu0 0
        %310 = vmatprep.subr.bf16.mxu0 0
        %311 = vmatpush1.bf16.msra.mxu0 0
        %312 = vmatprep.subr.bf16.mxu0 0
        %313 = vmatpush1.bf16.msra.mxu0 0
        %314 = vmatprep.subr.bf16.mxu0 0
        %315 = vmatpush1.bf16.msra.mxu0 0
        %316 = vmatprep.subr.bf16.mxu0 0
        %317 = vmatpush1.bf16.msra.mxu0 0
        %318 = vmatprep.subr.bf16.mxu0 0
        %319 = vmatpush1.bf16.msra.mxu0 0
        %320 = vmatprep.subr.bf16.mxu0 0
        %321 = vmatpush1.bf16.msra.mxu0 0
        %322 = vmatprep.subr.bf16.mxu0 0
        %323 = vmatpush1.bf16.msra.mxu0 0
        %324 = vmatprep.subr.bf16.mxu0 0
        %325 = vmatpush1.bf16.msra.mxu0 0
        %326 = vmatprep.mubr.bf16.mxu0 0
        %327 = vmatmul.mubr.bf16.gmra.mrb[0].mxu0 %v283
        %v328 = vpop.f32.mrb[0].mxu0
        %v329 = vadd.f32 %v267, %v328
        %v330 = vpop.f32.mrb[0].mxu0
        %v331 = vpop.f32.mrb[0].mxu0
        %v332 = vadd.f32 %v267, %v331
        %v333 = vpop.f32.mrb[0].mxu0
        %334 = vmatprep.mubr.bf16.mxu0 0
        %335 = vmatmul.mubr.bf16.gmra.mrb[0].mxu0 %v286
        %v336 = vpop.f32.mrb[0].mxu0
        %v337 = vadd.f32 %v267, %v336
        %v338 = vpop.f32.mrb[0].mxu0
        %v339 = vpop.f32.mrb[0].mxu0
        %v340 = vadd.f32 %v267, %v339
        %v341 = vpop.f32.mrb[0].mxu0
        %342 = vmatprep.mubr.bf16.mxu0 0
        %343 = vmatmul.mubr.bf16.gmra.mrb[0].mxu0 %v289
        %v344 = vpop.f32.mrb[0].mxu0
        %v345 = vadd.f32 %v267, %v344
        %v346 = vpop.f32.mrb[0].mxu0
        %v347 = vpop.f32.mrb[0].mxu0
        %v348 = vadd.f32 %v267, %v347
        %v349 = vpop.f32.mrb[0].mxu0
        %350 = vmatprep.mubr.bf16.mxu0 0
        %351 = vmatmul.mubr.bf16.gmra.mrb[0].mxu0 %v292
        %v352 = vpop.f32.mrb[0].mxu0
        %v353 = vadd.f32 %v267, %v352
        %v354 = vpop.f32.mrb[0].mxu0
        %v355 = vpop.f32.mrb[0].mxu0
        %v356 = vadd.f32 %v267, %v355
        %v357 = vpop.f32.mrb[0].mxu0
        %358 = vdwg.mxu0
        %v359 = vld [vmem:[%s3] sm:$0xf]
        %v360 = vld [vmem:[%s3 + $0x4] sm:$0xf]
        %v361 = vld [vmem:[%s3 + $0x8] sm:$0xf]
        %v362 = vld [vmem:[%s3 + $0xc] sm:$0xf]
        %v363 = vpack.c.bf16 %v332, %v329
        %v364 = vpack.c.bf16 %v340, %v337
        %v365 = vpack.c.bf16 %v348, %v345
        %v366 = vpack.c.bf16 %v356, %v353
        %368 = vrot.lane.b32.xlu0 %v363, 96
        %v369 = vpop.permute.xlu0 %368
        %vm370 = vcmask 64512
        %v372 = vsel %vm370, %v363, 0
        %v375 = vsel %vm370, %v369, 0
        %377 = vmatprep.subr.bf16.mxu0 0
        %378 = vmatpush1.bf16.xpose.msra.mxu0 %v375
        %379 = vmatprep.subr.bf16.mxu0 0
        %380 = vmatpush1.bf16.xpose.msra.mxu0 0
        %381 = vmatprep.subr.bf16.mxu0 0
        %382 = vmatpush1.bf16.xpose.msra.mxu0 0
        %383 = vmatprep.subr.bf16.mxu0 0
        %384 = vmatpush1.bf16.xpose.msra.mxu0 0
        %385 = vmatprep.subr.bf16.mxu0 0
        %386 = vmatpush1.bf16.xpose.msra.mxu0 0
        %387 = vmatprep.subr.bf16.mxu0 0
        %388 = vmatpush1.bf16.xpose.msra.mxu0 0
        %389 = vmatprep.subr.bf16.mxu0 0
        %390 = vmatpush1.bf16.xpose.msra.mxu0 0
        %391 = vmatprep.subr.bf16.mxu0 0
        %392 = vmatpush1.bf16.xpose.msra.mxu0 0
        %393 = vmatprep.subr.bf16.mxu0 0
        %394 = vmatpush1.bf16.xpose.msra.mxu0 0
        %395 = vmatprep.subr.bf16.mxu0 0
        %396 = vmatpush1.bf16.xpose.msra.mxu0 0
        %397 = vmatprep.subr.bf16.mxu0 0
        %398 = vmatpush1.bf16.xpose.msra.mxu0 0
        %399 = vmatprep.subr.bf16.mxu0 0
        %400 = vmatpush1.bf16.xpose.msra.mxu0 0
        %401 = vmatprep.subr.bf16.mxu0 0
        %402 = vmatpush1.bf16.xpose.msra.mxu0 0
        %403 = vmatprep.subr.bf16.mxu0 0
        %404 = vmatpush1.bf16.xpose.msra.mxu0 0
        %405 = vmatprep.subr.bf16.mxu0 0
        %406 = vmatpush1.bf16.xpose.msra.mxu0 0
        %407 = vmatprep.subr.bf16.mxu0 0
        %408 = vmatpush1.bf16.xpose.msra.mxu0 0
        %409 = vmatprep.mubr.bf16.mxu0 0
        %410 = vmatmul.mubr.bf16.gmra.mrb[0].mxu0 %v372
        %v411 = vpop.f32.mrb[0].mxu0
        %v412 = vadd.f32 0.0, %v411
        %v413 = vpop.f32.mrb[0].mxu0
        %v414 = vpop.f32.mrb[0].mxu0
        %v415 = vadd.f32 0.0, %v414
        %v416 = vpop.f32.mrb[0].mxu0
        %417 = vdwg.mxu0
        %419 = vrot.lane.b32.xlu0 %v364, 96
        %v420 = vpop.permute.xlu0 %419
        %v422 = vsel %vm370, %v364, 0
        %v425 = vsel %vm370, %v420, 0
        %427 = vmatprep.subr.bf16.mxu0 0
        %428 = vmatpush1.bf16.xpose.msra.mxu0 %v425
        %429 = vmatprep.subr.bf16.mxu0 0
        %430 = vmatpush1.bf16.xpose.msra.mxu0 0
        %431 = vmatprep.subr.bf16.mxu0 0
        %432 = vmatpush1.bf16.xpose.msra.mxu0 0
        %433 = vmatprep.subr.bf16.mxu0 0
        %434 = vmatpush1.bf16.xpose.msra.mxu0 0
        %435 = vmatprep.subr.bf16.mxu0 0
        %436 = vmatpush1.bf16.xpose.msra.mxu0 0
        %437 = vmatprep.subr.bf16.mxu0 0
        %438 = vmatpush1.bf16.xpose.msra.mxu0 0
        %439 = vmatprep.subr.bf16.mxu0 0
        %440 = vmatpush1.bf16.xpose.msra.mxu0 0
        %441 = vmatprep.subr.bf16.mxu0 0
        %442 = vmatpush1.bf16.xpose.msra.mxu0 0
        %443 = vmatprep.subr.bf16.mxu0 0
        %444 = vmatpush1.bf16.xpose.msra.mxu0 0
        %445 = vmatprep.subr.bf16.mxu0 0
        %446 = vmatpush1.bf16.xpose.msra.mxu0 0
        %447 = vmatprep.subr.bf16.mxu0 0
        %448 = vmatpush1.bf16.xpose.msra.mxu0 0
        %449 = vmatprep.subr.bf16.mxu0 0
        %450 = vmatpush1.bf16.xpose.msra.mxu0 0
        %451 = vmatprep.subr.bf16.mxu0 0
        %452 = vmatpush1.bf16.xpose.msra.mxu0 0
        %453 = vmatprep.subr.bf16.mxu0 0
        %454 = vmatpush1.bf16.xpose.msra.mxu0 0
        %455 = vmatprep.subr.bf16.mxu0 0
        %456 = vmatpush1.bf16.xpose.msra.mxu0 0
        %457 = vmatprep.subr.bf16.mxu0 0
        %458 = vmatpush1.bf16.xpose.msra.mxu0 0
        %459 = vmatprep.mubr.bf16.mxu0 0
        %460 = vmatmul.mubr.bf16.gmra.mrb[0].mxu0 %v422
        %v461 = vpop.f32.mrb[0].mxu0
        %v462 = vadd.f32 0.0, %v461
        %v463 = vpop.f32.mrb[0].mxu0
        %v464 = vpop.f32.mrb[0].mxu0
        %v465 = vadd.f32 0.0, %v464
        %v466 = vpop.f32.mrb[0].mxu0
        %467 = vdwg.mxu0
        %469 = vrot.lane.b32.xlu0 %v365, 96
        %v470 = vpop.permute.xlu0 %469
        %v472 = vsel %vm370, %v365, 0
        %v475 = vsel %vm370, %v470, 0
        %477 = vmatprep.subr.bf16.mxu0 0
        %478 = vmatpush1.bf16.xpose.msra.mxu0 %v475
        %479 = vmatprep.subr.bf16.mxu0 0
        %480 = vmatpush1.bf16.xpose.msra.mxu0 0
        %481 = vmatprep.subr.bf16.mxu0 0
        %482 = vmatpush1.bf16.xpose.msra.mxu0 0
        %483 = vmatprep.subr.bf16.mxu0 0
        %484 = vmatpush1.bf16.xpose.msra.mxu0 0
        %485 = vmatprep.subr.bf16.mxu0 0
        %486 = vmatpush1.bf16.xpose.msra.mxu0 0
        %487 = vmatprep.subr.bf16.mxu0 0
        %488 = vmatpush1.bf16.xpose.msra.mxu0 0
        %489 = vmatprep.subr.bf16.mxu0 0
        %490 = vmatpush1.bf16.xpose.msra.mxu0 0
        %491 = vmatprep.subr.bf16.mxu0 0
        %492 = vmatpush1.bf16.xpose.msra.mxu0 0
        %493 = vmatprep.subr.bf16.mxu0 0
        %494 = vmatpush1.bf16.xpose.msra.mxu0 0
        %495 = vmatprep.subr.bf16.mxu0 0
        %496 = vmatpush1.bf16.xpose.msra.mxu0 0
        %497 = vmatprep.subr.bf16.mxu0 0
        %498 = vmatpush1.bf16.xpose.msra.mxu0 0
        %499 = vmatprep.subr.bf16.mxu0 0
        %500 = vmatpush1.bf16.xpose.msra.mxu0 0
        %501 = vmatprep.subr.bf16.mxu0 0
        %502 = vmatpush1.bf16.xpose.msra.mxu0 0
        %503 = vmatprep.subr.bf16.mxu0 0
        %504 = vmatpush1.bf16.xpose.msra.mxu0 0
        %505 = vmatprep.subr.bf16.mxu0 0
        %506 = vmatpush1.bf16.xpose.msra.mxu0 0
        %507 = vmatprep.subr.bf16.mxu0 0
        %508 = vmatpush1.bf16.xpose.msra.mxu0 0
        %509 = vmatprep.mubr.bf16.mxu0 0
        %510 = vmatmul.mubr.bf16.gmra.mrb[0].mxu0 %v472
        %v511 = vpop.f32.mrb[0].mxu0
        %v512 = vadd.f32 0.0, %v511
        %v513 = vpop.f32.mrb[0].mxu0
        %v514 = vpop.f32.mrb[0].mxu0
        %v515 = vadd.f32 0.0, %v514
        %v516 = vpop.f32.mrb[0].mxu0
        %517 = vdwg.mxu0
        %519 = vrot.lane.b32.xlu0 %v366, 96
        %v520 = vpop.permute.xlu0 %519
        %v522 = vsel %vm370, %v366, 0
        %v525 = vsel %vm370, %v520, 0
        %527 = vmatprep.subr.bf16.mxu0 0
        %528 = vmatpush1.bf16.xpose.msra.mxu0 %v525
        %529 = vmatprep.subr.bf16.mxu0 0
        %530 = vmatpush1.bf16.xpose.msra.mxu0 0
        %531 = vmatprep.subr.bf16.mxu0 0
        %532 = vmatpush1.bf16.xpose.msra.mxu0 0
        %533 = vmatprep.subr.bf16.mxu0 0
        %534 = vmatpush1.bf16.xpose.msra.mxu0 0
        %535 = vmatprep.subr.bf16.mxu0 0
        %536 = vmatpush1.bf16.xpose.msra.mxu0 0
        %537 = vmatprep.subr.bf16.mxu0 0
        %538 = vmatpush1.bf16.xpose.msra.mxu0 0
        %539 = vmatprep.subr.bf16.mxu0 0
        %540 = vmatpush1.bf16.xpose.msra.mxu0 0
        %541 = vmatprep.subr.bf16.mxu0 0
        %542 = vmatpush1.bf16.xpose.msra.mxu0 0
        %543 = vmatprep.subr.bf16.mxu0 0
        %544 = vmatpush1.bf16.xpose.msra.mxu0 0
        %545 = vmatprep.subr.bf16.mxu0 0
        %546 = vmatpush1.bf16.xpose.msra.mxu0 0
        %547 = vmatprep.subr.bf16.mxu0 0
        %548 = vmatpush1.bf16.xpose.msra.mxu0 0
        %549 = vmatprep.subr.bf16.mxu0 0
        %550 = vmatpush1.bf16.xpose.msra.mxu0 0
        %551 = vmatprep.subr.bf16.mxu0 0
        %552 = vmatpush1.bf16.xpose.msra.mxu0 0
        %553 = vmatprep.subr.bf16.mxu0 0
        %554 = vmatpush1.bf16.xpose.msra.mxu0 0
        %555 = vmatprep.subr.bf16.mxu0 0
        %556 = vmatpush1.bf16.xpose.msra.mxu0 0
        %557 = vmatprep.subr.bf16.mxu0 0
        %558 = vmatpush1.bf16.xpose.msra.mxu0 0
        %559 = vmatprep.mubr.bf16.mxu0 0
        %560 = vmatmul.mubr.bf16.gmra.mrb[0].mxu0 %v522
        %v561 = vpop.f32.mrb[0].mxu0
        %v562 = vadd.f32 0.0, %v561
        %v563 = vpop.f32.mrb[0].mxu0
        %v564 = vpop.f32.mrb[0].mxu0
        %v565 = vadd.f32 0.0, %v564
        %v566 = vpop.f32.mrb[0].mxu0
        %567 = vdwg.mxu0
        %v568 = vmul.f32 %v412, 0.35355338
        %v569 = vmul.f32 %v415, 0.35355338
        %v570 = vmul.f32 %v462, 0.35355338
        %v571 = vmul.f32 %v465, 0.35355338
        %v572 = vmul.f32 %v512, 0.35355338
        %v573 = vmul.f32 %v515, 0.35355338
        %v574 = vmul.f32 %v562, 0.35355338
        %v575 = vmul.f32 %v565, 0.35355338
        %vm576 = vcmask 130048
        %v577 = vsel %vm576, %v568, -inf
        %578 = vmax.xlane.f32.xlu0 %v577
        %v579 = vpop.xlane.xlu0 %578
        %v580 = vsel %vm576, %v569, -inf
        %581 = vmax.xlane.f32.xlu0 %v580
        %v582 = vpop.xlane.xlu0 %581
        %v583 = vsel %vm576, %v570, -inf
        %584 = vmax.xlane.f32.xlu0 %v583
        %v585 = vpop.xlane.xlu0 %584
        %v586 = vsel %vm576, %v571, -inf
        %587 = vmax.xlane.f32.xlu0 %v586
        %v588 = vpop.xlane.xlu0 %587
        %v589 = vsel %vm576, %v572, -inf
        %590 = vmax.xlane.f32.xlu0 %v589
        %v591 = vpop.xlane.xlu0 %590
        %v592 = vsel %vm576, %v573, -inf
        %593 = vmax.xlane.f32.xlu0 %v592
        %v594 = vpop.xlane.xlu0 %593
        %v595 = vsel %vm576, %v574, -inf
        %596 = vmax.xlane.f32.xlu0 %v595
        %v597 = vpop.xlane.xlu0 %596
        %v598 = vsel %vm576, %v575, -inf
        %599 = vmax.xlane.f32.xlu0 %v598
        %v600 = vpop.xlane.xlu0 %599
        %v601 = vsub.f32 %v568, %v579
        %v602 = vsub.f32 %v569, %v582
        %v603 = vsub.f32 %v570, %v585
        %v604 = vsub.f32 %v571, %v588
        %v605 = vsub.f32 %v572, %v591
        %v606 = vsub.f32 %v573, %v594
        %v607 = vsub.f32 %v574, %v597
        %v608 = vsub.f32 %v575, %v600
        %v609 = vmul.f32 %v601, 1.442695
        %v610 = vpow.pop %v609
        %v611 = vmul.f32 %v602, 1.442695
        %v612 = vpow.pop %v611
        %v613 = vmul.f32 %v603, 1.442695
        %v614 = vpow.pop %v613
        %v615 = vmul.f32 %v604, 1.442695
        %v616 = vpow.pop %v615
        %v617 = vmul.f32 %v605, 1.442695
        %v618 = vpow.pop %v617
        %v619 = vmul.f32 %v606, 1.442695
        %v620 = vpow.pop %v619
        %v621 = vmul.f32 %v607, 1.442695
        %v622 = vpow.pop %v621
        %v623 = vmul.f32 %v608, 1.442695
        %v624 = vpow.pop %v623
        %v625 = vsel %vm576, %v610, 0.0
        %626 = vadd.xlane.f32.xlu0 %v625
        %v627 = vpop.xlane.xlu0 %626
        %v628 = vsel %vm576, %v612, 0.0
        %629 = vadd.xlane.f32.xlu0 %v628
        %v630 = vpop.xlane.xlu0 %629
        %v631 = vsel %vm576, %v614, 0.0
        %632 = vadd.xlane.f32.xlu0 %v631
        %v633 = vpop.xlane.xlu0 %632
        %v634 = vsel %vm576, %v616, 0.0
        %635 = vadd.xlane.f32.xlu0 %v634
        %v636 = vpop.xlane.xlu0 %635
        %v637 = vsel %vm576, %v618, 0.0
        %638 = vadd.xlane.f32.xlu0 %v637
        %v639 = vpop.xlane.xlu0 %638
        %v640 = vsel %vm576, %v620, 0.0
        %641 = vadd.xlane.f32.xlu0 %v640
        %v642 = vpop.xlane.xlu0 %641
        %v643 = vsel %vm576, %v622, 0.0
        %644 = vadd.xlane.f32.xlu0 %v643
        %v645 = vpop.xlane.xlu0 %644
        %v646 = vsel %vm576, %v624, 0.0
        %647 = vadd.xlane.f32.xlu0 %v646
        %v648 = vpop.xlane.xlu0 %647
        %v649 = vrcp.pop %v627
        %v650 = vrcp.pop %v630
        %v651 = vrcp.pop %v633
        %v652 = vrcp.pop %v636
        %v653 = vrcp.pop %v639
        %v654 = vrcp.pop %v642
        %v655 = vrcp.pop %v645
        %v656 = vrcp.pop %v648
        %v657 = vmul.f32 %v610, %v649
        %v658 = vmul.f32 %v612, %v650
        %v659 = vmul.f32 %v614, %v651
        %v660 = vmul.f32 %v616, %v652
        %v661 = vmul.f32 %v618, %v653
        %v662 = vmul.f32 %v620, %v654
        %v663 = vmul.f32 %v622, %v655
        %v664 = vmul.f32 %v624, %v656
        %v665 = vpack.c.bf16 %v658, %v657
        %v666 = vpack.c.bf16 %v660, %v659
        %v667 = vpack.c.bf16 %v662, %v661
        %v668 = vpack.c.bf16 %v664, %v663
        %669 = vrot.lane.b32.xlu0 %v363, 64
        %v670 = vpop.permute.xlu0 %669
        %v673 = vsel %vm576, %v665, 0
        %675 = vmatprep.subr.bf16.mxu0 0
        %676 = vmatpush1.bf16.msra.mxu0 %v670
        %677 = vmatprep.subr.bf16.mxu0 0
        %678 = vmatpush1.bf16.msra.mxu0 0
        %679 = vmatprep.subr.bf16.mxu0 0
        %680 = vmatpush1.bf16.msra.mxu0 0
        %681 = vmatprep.subr.bf16.mxu0 0
        %682 = vmatpush1.bf16.msra.mxu0 0
        %683 = vmatprep.subr.bf16.mxu0 0
        %684 = vmatpush1.bf16.msra.mxu0 0
        %685 = vmatprep.subr.bf16.mxu0 0
        %686 = vmatpush1.bf16.msra.mxu0 0
        %687 = vmatprep.subr.bf16.mxu0 0
        %688 = vmatpush1.bf16.msra.mxu0 0
        %689 = vmatprep.subr.bf16.mxu0 0
        %690 = vmatpush1.bf16.msra.mxu0 0
        %691 = vmatprep.subr.bf16.mxu0 0
        %692 = vmatpush1.bf16.msra.mxu0 0
        %693 = vmatprep.subr.bf16.mxu0 0
        %694 = vmatpush1.bf16.msra.mxu0 0
        %695 = vmatprep.subr.bf16.mxu0 0
        %696 = vmatpush1.bf16.msra.mxu0 0
        %697 = vmatprep.subr.bf16.mxu0 0
        %698 = vmatpush1.bf16.msra.mxu0 0
        %699 = vmatprep.subr.bf16.mxu0 0
        %700 = vmatpush1.bf16.msra.mxu0 0
        %701 = vmatprep.subr.bf16.mxu0 0
        %702 = vmatpush1.bf16.msra.mxu0 0
        %703 = vmatprep.subr.bf16.mxu0 0
        %704 = vmatpush1.bf16.msra.mxu0 0
        %705 = vmatprep.subr.bf16.mxu0 0
        %706 = vmatpush1.bf16.msra.mxu0 0
        %707 = vmatprep.mubr.bf16.mxu0 0
        %708 = vmatmul.mubr.bf16.gmra.mrb[0].mxu0 %v673
        %v709 = vpop.f32.mrb[0].mxu0
        %v710 = vadd.f32 0.0, %v709
        %v711 = vpop.f32.mrb[0].mxu0
        %v712 = vpop.f32.mrb[0].mxu0
        %v713 = vadd.f32 0.0, %v712
        %v714 = vpop.f32.mrb[0].mxu0
        %715 = vdwg.mxu0
        %716 = vrot.lane.b32.xlu0 %v364, 64
        %v717 = vpop.permute.xlu0 %716
        %v720 = vsel %vm576, %v666, 0
        %722 = vmatprep.subr.bf16.mxu0 0
        %723 = vmatpush1.bf16.msra.mxu0 %v717
        %724 = vmatprep.subr.bf16.mxu0 0
        %725 = vmatpush1.bf16.msra.mxu0 0
        %726 = vmatprep.subr.bf16.mxu0 0
        %727 = vmatpush1.bf16.msra.mxu0 0
        %728 = vmatprep.subr.bf16.mxu0 0
        %729 = vmatpush1.bf16.msra.mxu0 0
        %730 = vmatprep.subr.bf16.mxu0 0
        %731 = vmatpush1.bf16.msra.mxu0 0
        %732 = vmatprep.subr.bf16.mxu0 0
        %733 = vmatpush1.bf16.msra.mxu0 0
        %734 = vmatprep.subr.bf16.mxu0 0
        %735 = vmatpush1.bf16.msra.mxu0 0
        %736 = vmatprep.subr.bf16.mxu0 0
        %737 = vmatpush1.bf16.msra.mxu0 0
        %738 = vmatprep.subr.bf16.mxu0 0
        %739 = vmatpush1.bf16.msra.mxu0 0
        %740 = vmatprep.subr.bf16.mxu0 0
        %741 = vmatpush1.bf16.msra.mxu0 0
        %742 = vmatprep.subr.bf16.mxu0 0
        %743 = vmatpush1.bf16.msra.mxu0 0
        %744 = vmatprep.subr.bf16.mxu0 0
        %745 = vmatpush1.bf16.msra.mxu0 0
        %746 = vmatprep.subr.bf16.mxu0 0
        %747 = vmatpush1.bf16.msra.mxu0 0
        %748 = vmatprep.subr.bf16.mxu0 0
        %749 = vmatpush1.bf16.msra.mxu0 0
        %750 = vmatprep.subr.bf16.mxu0 0
        %751 = vmatpush1.bf16.msra.mxu0 0
        %752 = vmatprep.subr.bf16.mxu0 0
        %753 = vmatpush1.bf16.msra.mxu0 0
        %754 = vmatprep.mubr.bf16.mxu0 0
        %755 = vmatmul.mubr.bf16.gmra.mrb[0].mxu0 %v720
        %v756 = vpop.f32.mrb[0].mxu0
        %v757 = vadd.f32 0.0, %v756
        %v758 = vpop.f32.mrb[0].mxu0
        %v759 = vpop.f32.mrb[0].mxu0
        %v760 = vadd.f32 0.0, %v759
        %v761 = vpop.f32.mrb[0].mxu0
        %762 = vdwg.mxu0
        %763 = vrot.lane.b32.xlu0 %v365, 64
        %v764 = vpop.permute.xlu0 %763
        %v767 = vsel %vm576, %v667, 0
        %769 = vmatprep.subr.bf16.mxu0 0
        %770 = vmatpush1.bf16.msra.mxu0 %v764
        %771 = vmatprep.subr.bf16.mxu0 0
        %772 = vmatpush1.bf16.msra.mxu0 0
        %773 = vmatprep.subr.bf16.mxu0 0
        %774 = vmatpush1.bf16.msra.mxu0 0
        %775 = vmatprep.subr.bf16.mxu0 0
        %776 = vmatpush1.bf16.msra.mxu0 0
        %777 = vmatprep.subr.bf16.mxu0 0
        %778 = vmatpush1.bf16.msra.mxu0 0
        %779 = vmatprep.subr.bf16.mxu0 0
        %780 = vmatpush1.bf16.msra.mxu0 0
        %781 = vmatprep.subr.bf16.mxu0 0
        %782 = vmatpush1.bf16.msra.mxu0 0
        %783 = vmatprep.subr.bf16.mxu0 0
        %784 = vmatpush1.bf16.msra.mxu0 0
        %785 = vmatprep.subr.bf16.mxu0 0
        %786 = vmatpush1.bf16.msra.mxu0 0
        %787 = vmatprep.subr.bf16.mxu0 0
        %788 = vmatpush1.bf16.msra.mxu0 0
        %789 = vmatprep.subr.bf16.mxu0 0
        %790 = vmatpush1.bf16.msra.mxu0 0
        %791 = vmatprep.subr.bf16.mxu0 0
        %792 = vmatpush1.bf16.msra.mxu0 0
        %793 = vmatprep.subr.bf16.mxu0 0
        %794 = vmatpush1.bf16.msra.mxu0 0
        %795 = vmatprep.subr.bf16.mxu0 0
        %796 = vmatpush1.bf16.msra.mxu0 0
        %797 = vmatprep.subr.bf16.mxu0 0
        %798 = vmatpush1.bf16.msra.mxu0 0
        %799 = vmatprep.subr.bf16.mxu0 0
        %800 = vmatpush1.bf16.msra.mxu0 0
        %801 = vmatprep.mubr.bf16.mxu0 0
        %802 = vmatmul.mubr.bf16.gmra.mrb[0].mxu0 %v767
        %v803 = vpop.f32.mrb[0].mxu0
        %v804 = vadd.f32 0.0, %v803
        %v805 = vpop.f32.mrb[0].mxu0
        %v806 = vpop.f32.mrb[0].mxu0
        %v807 = vadd.f32 0.0, %v806
        %v808 = vpop.f32.mrb[0].mxu0
        %809 = vdwg.mxu0
        %810 = vrot.lane.b32.xlu0 %v366, 64
        %v811 = vpop.permute.xlu0 %810
        %v814 = vsel %vm576, %v668, 0
        %816 = vmatprep.subr.bf16.mxu0 0
        %817 = vmatpush1.bf16.msra.mxu0 %v811
        %818 = vmatprep.subr.bf16.mxu0 0
        %819 = vmatpush1.bf16.msra.mxu0 0
        %820 = vmatprep.subr.bf16.mxu0 0
        %821 = vmatpush1.bf16.msra.mxu0 0
        %822 = vmatprep.subr.bf16.mxu0 0
        %823 = vmatpush1.bf16.msra.mxu0 0
        %824 = vmatprep.subr.bf16.mxu0 0
        %825 = vmatpush1.bf16.msra.mxu0 0
        %826 = vmatprep.subr.bf16.mxu0 0
        %827 = vmatpush1.bf16.msra.mxu0 0
        %828 = vmatprep.subr.bf16.mxu0 0
        %829 = vmatpush1.bf16.msra.mxu0 0
        %830 = vmatprep.subr.bf16.mxu0 0
        %831 = vmatpush1.bf16.msra.mxu0 0
        %832 = vmatprep.subr.bf16.mxu0 0
        %833 = vmatpush1.bf16.msra.mxu0 0
        %834 = vmatprep.subr.bf16.mxu0 0
        %835 = vmatpush1.bf16.msra.mxu0 0
        %836 = vmatprep.subr.bf16.mxu0 0
        %837 = vmatpush1.bf16.msra.mxu0 0
        %838 = vmatprep.subr.bf16.mxu0 0
        %839 = vmatpush1.bf16.msra.mxu0 0
        %840 = vmatprep.subr.bf16.mxu0 0
        %841 = vmatpush1.bf16.msra.mxu0 0
        %842 = vmatprep.subr.bf16.mxu0 0
        %843 = vmatpush1.bf16.msra.mxu0 0
        %844 = vmatprep.subr.bf16.mxu0 0
        %845 = vmatpush1.bf16.msra.mxu0 0
        %846 = vmatprep.subr.bf16.mxu0 0
        %847 = vmatpush1.bf16.msra.mxu0 0
        %848 = vmatprep.mubr.bf16.mxu0 0
        %849 = vmatmul.mubr.bf16.gmra.mrb[0].mxu0 %v814
        %v850 = vpop.f32.mrb[0].mxu0
        %v851 = vadd.f32 0.0, %v850
        %v852 = vpop.f32.mrb[0].mxu0
        %v853 = vpop.f32.mrb[0].mxu0
        %v854 = vadd.f32 0.0, %v853
        %v855 = vpop.f32.mrb[0].mxu0
        %856 = vdwg.mxu0
        %v857 = vpack.c.bf16 %v713, %v710
        %v858 = vpack.c.bf16 %v760, %v757
        %v859 = vpack.c.bf16 %v807, %v804
        %v860 = vpack.c.bf16 %v854, %v851
        %861 = vrot.lane.b32.xlu0 %v363, 120
        %v862 = vpop.permute.xlu0 %861
        %863 = vrot.lane.b32.xlu0 %v363, 88
        %v864 = vpop.permute.xlu0 %863
        %v866 = vsel %vm370, %v862, 0
        %v869 = vsel %vm370, %v864, 0
        %871 = vmatprep.subr.bf16.mxu0 0
        %872 = vmatpush1.bf16.xpose.msra.mxu0 %v869
        %873 = vmatprep.subr.bf16.mxu0 0
        %874 = vmatpush1.bf16.xpose.msra.mxu0 0
        %875 = vmatprep.subr.bf16.mxu0 0
        %876 = vmatpush1.bf16.xpose.msra.mxu0 0
        %877 = vmatprep.subr.bf16.mxu0 0
        %878 = vmatpush1.bf16.xpose.msra.mxu0 0
        %879 = vmatprep.subr.bf16.mxu0 0
        %880 = vmatpush1.bf16.xpose.msra.mxu0 0
        %881 = vmatprep.subr.bf16.mxu0 0
        %882 = vmatpush1.bf16.xpose.msra.mxu0 0
        %883 = vmatprep.subr.bf16.mxu0 0
        %884 = vmatpush1.bf16.xpose.msra.mxu0 0
        %885 = vmatprep.subr.bf16.mxu0 0
        %886 = vmatpush1.bf16.xpose.msra.mxu0 0
        %887 = vmatprep.subr.bf16.mxu0 0
        %888 = vmatpush1.bf16.xpose.msra.mxu0 0
        %889 = vmatprep.subr.bf16.mxu0 0
        %890 = vmatpush1.bf16.xpose.msra.mxu0 0
        %891 = vmatprep.subr.bf16.mxu0 0
        %892 = vmatpush1.bf16.xpose.msra.mxu0 0
        %893 = vmatprep.subr.bf16.mxu0 0
        %894 = vmatpush1.bf16.xpose.msra.mxu0 0
        %895 = vmatprep.subr.bf16.mxu0 0
        %896 = vmatpush1.bf16.xpose.msra.mxu0 0
        %897 = vmatprep.subr.bf16.mxu0 0
        %898 = vmatpush1.bf16.xpose.msra.mxu0 0
        %899 = vmatprep.subr.bf16.mxu0 0
        %900 = vmatpush1.bf16.xpose.msra.mxu0 0
        %901 = vmatprep.subr.bf16.mxu0 0
        %902 = vmatpush1.bf16.xpose.msra.mxu0 0
        %903 = vmatprep.mubr.bf16.mxu0 0
        %904 = vmatmul.mubr.bf16.gmra.mrb[0].mxu0 %v866
        %v905 = vpop.f32.mrb[0].mxu0
        %v906 = vadd.f32 0.0, %v905
        %v907 = vpop.f32.mrb[0].mxu0
        %v908 = vpop.f32.mrb[0].mxu0
        %v909 = vadd.f32 0.0, %v908
        %v910 = vpop.f32.mrb[0].mxu0
        %911 = vdwg.mxu0
        %912 = vrot.lane.b32.xlu0 %v364, 120
        %v913 = vpop.permute.xlu0 %912
        %914 = vrot.lane.b32.xlu0 %v364, 88
        %v915 = vpop.permute.xlu0 %914
        %v917 = vsel %vm370, %v913, 0
        %v920 = vsel %vm370, %v915, 0
        %922 = vmatprep.subr.bf16.mxu0 0
        %923 = vmatpush1.bf16.xpose.msra.mxu0 %v920
        %924 = vmatprep.subr.bf16.mxu0 0
        %925 = vmatpush1.bf16.xpose.msra.mxu0 0
        %926 = vmatprep.subr.bf16.mxu0 0
        %927 = vmatpush1.bf16.xpose.msra.mxu0 0
        %928 = vmatprep.subr.bf16.mxu0 0
        %929 = vmatpush1.bf16.xpose.msra.mxu0 0
        %930 = vmatprep.subr.bf16.mxu0 0
        %931 = vmatpush1.bf16.xpose.msra.mxu0 0
        %932 = vmatprep.subr.bf16.mxu0 0
        %933 = vmatpush1.bf16.xpose.msra.mxu0 0
        %934 = vmatprep.subr.bf16.mxu0 0
        %935 = vmatpush1.bf16.xpose.msra.mxu0 0
        %936 = vmatprep.subr.bf16.mxu0 0
        %937 = vmatpush1.bf16.xpose.msra.mxu0 0
        %938 = vmatprep.subr.bf16.mxu0 0
        %939 = vmatpush1.bf16.xpose.msra.mxu0 0
        %940 = vmatprep.subr.bf16.mxu0 0
        %941 = vmatpush1.bf16.xpose.msra.mxu0 0
        %942 = vmatprep.subr.bf16.mxu0 0
        %943 = vmatpush1.bf16.xpose.msra.mxu0 0
        %944 = vmatprep.subr.bf16.mxu0 0
        %945 = vmatpush1.bf16.xpose.msra.mxu0 0
        %946 = vmatprep.subr.bf16.mxu0 0
        %947 = vmatpush1.bf16.xpose.msra.mxu0 0
        %948 = vmatprep.subr.bf16.mxu0 0
        %949 = vmatpush1.bf16.xpose.msra.mxu0 0
        %950 = vmatprep.subr.bf16.mxu0 0
        %951 = vmatpush1.bf16.xpose.msra.mxu0 0
        %952 = vmatprep.subr.bf16.mxu0 0
        %953 = vmatpush1.bf16.xpose.msra.mxu0 0
        %954 = vmatprep.mubr.bf16.mxu0 0
        %955 = vmatmul.mubr.bf16.gmra.mrb[0].mxu0 %v917
        %v956 = vpop.f32.mrb[0].mxu0
        %v957 = vadd.f32 0.0, %v956
        %v958 = vpop.f32.mrb[0].mxu0
        %v959 = vpop.f32.mrb[0].mxu0
        %v960 = vadd.f32 0.0, %v959
        %v961 = vpop.f32.mrb[0].mxu0
        %962 = vdwg.mxu0
        %963 = vrot.lane.b32.xlu0 %v365, 120
        %v964 = vpop.permute.xlu0 %963
        %965 = vrot.lane.b32.xlu0 %v365, 88
        %v966 = vpop.permute.xlu0 %965
        %v968 = vsel %vm370, %v964, 0
        %v971 = vsel %vm370, %v966, 0
        %973 = vmatprep.subr.bf16.mxu0 0
        %974 = vmatpush1.bf16.xpose.msra.mxu0 %v971
        %975 = vmatprep.subr.bf16.mxu0 0
        %976 = vmatpush1.bf16.xpose.msra.mxu0 0
        %977 = vmatprep.subr.bf16.mxu0 0
        %978 = vmatpush1.bf16.xpose.msra.mxu0 0
        %979 = vmatprep.subr.bf16.mxu0 0
        %980 = vmatpush1.bf16.xpose.msra.mxu0 0
        %981 = vmatprep.subr.bf16.mxu0 0
        %982 = vmatpush1.bf16.xpose.msra.mxu0 0
        %983 = vmatprep.subr.bf16.mxu0 0
        %984 = vmatpush1.bf16.xpose.msra.mxu0 0
        %985 = vmatprep.subr.bf16.mxu0 0
        %986 = vmatpush1.bf16.xpose.msra.mxu0 0
        %987 = vmatprep.subr.bf16.mxu0 0
        %988 = vmatpush1.bf16.xpose.msra.mxu0 0
        %989 = vmatprep.subr.bf16.mxu0 0
        %990 = vmatpush1.bf16.xpose.msra.mxu0 0
        %991 = vmatprep.subr.bf16.mxu0 0
        %992 = vmatpush1.bf16.xpose.msra.mxu0 0
        %993 = vmatprep.subr.bf16.mxu0 0
        %994 = vmatpush1.bf16.xpose.msra.mxu0 0
        %995 = vmatprep.subr.bf16.mxu0 0
        %996 = vmatpush1.bf16.xpose.msra.mxu0 0
        %997 = vmatprep.subr.bf16.mxu0 0
        %998 = vmatpush1.bf16.xpose.msra.mxu0 0
        %999 = vmatprep.subr.bf16.mxu0 0
        %1000 = vmatpush1.bf16.xpose.msra.mxu0 0
        %1001 = vmatprep.subr.bf16.mxu0 0
        %1002 = vmatpush1.bf16.xpose.msra.mxu0 0
        %1003 = vmatprep.subr.bf16.mxu0 0
        %1004 = vmatpush1.bf16.xpose.msra.mxu0 0
        %1005 = vmatprep.mubr.bf16.mxu0 0
        %1006 = vmatmul.mubr.bf16.gmra.mrb[0].mxu0 %v968
        %v1007 = vpop.f32.mrb[0].mxu0
        %v1008 = vadd.f32 0.0, %v1007
        %v1009 = vpop.f32.mrb[0].mxu0
        %v1010 = vpop.f32.mrb[0].mxu0
        %v1011 = vadd.f32 0.0, %v1010
        %v1012 = vpop.f32.mrb[0].mxu0
        %1013 = vdwg.mxu0
        %1014 = vrot.lane.b32.xlu0 %v366, 120
        %v1015 = vpop.permute.xlu0 %1014
        %1016 = vrot.lane.b32.xlu0 %v366, 88
        %v1017 = vpop.permute.xlu0 %1016
        %v1019 = vsel %vm370, %v1015, 0
        %v1022 = vsel %vm370, %v1017, 0
        %1024 = vmatprep.subr.bf16.mxu0 0
        %1025 = vmatpush1.bf16.xpose.msra.mxu0 %v1022
        %1026 = vmatprep.subr.bf16.mxu0 0
        %1027 = vmatpush1.bf16.xpose.msra.mxu0 0
        %1028 = vmatprep.subr.bf16.mxu0 0
        %1029 = vmatpush1.bf16.xpose.msra.mxu0 0
        %1030 = vmatprep.subr.bf16.mxu0 0
        %1031 = vmatpush1.bf16.xpose.msra.mxu0 0
        %1032 = vmatprep.subr.bf16.mxu0 0
        %1033 = vmatpush1.bf16.xpose.msra.mxu0 0
        %1034 = vmatprep.subr.bf16.mxu0 0
        %1035 = vmatpush1.bf16.xpose.msra.mxu0 0
        %1036 = vmatprep.subr.bf16.mxu0 0
        %1037 = vmatpush1.bf16.xpose.msra.mxu0 0
        %1038 = vmatprep.subr.bf16.mxu0 0
        %1039 = vmatpush1.bf16.xpose.msra.mxu0 0
        %1040 = vmatprep.subr.bf16.mxu0 0
        %1041 = vmatpush1.bf16.xpose.msra.mxu0 0
        %1042 = vmatprep.subr.bf16.mxu0 0
        %1043 = vmatpush1.bf16.xpose.msra.mxu0 0
        %1044 = vmatprep.subr.bf16.mxu0 0
        %1045 = vmatpush1.bf16.xpose.msra.mxu0 0
        %1046 = vmatprep.subr.bf16.mxu0 0
        %1047 = vmatpush1.bf16.xpose.msra.mxu0 0
        %1048 = vmatprep.subr.bf16.mxu0 0
        %1049 = vmatpush1.bf16.xpose.msra.mxu0 0
        %1050 = vmatprep.subr.bf16.mxu0 0
        %1051 = vmatpush1.bf16.xpose.msra.mxu0 0
        %1052 = vmatprep.subr.bf16.mxu0 0
        %1053 = vmatpush1.bf16.xpose.msra.mxu0 0
        %1054 = vmatprep.subr.bf16.mxu0 0
        %1055 = vmatpush1.bf16.xpose.msra.mxu0 0
        %1056 = vmatprep.mubr.bf16.mxu0 0
        %1057 = vmatmul.mubr.bf16.gmra.mrb[0].mxu0 %v1019
        %v1058 = vpop.f32.mrb[0].mxu0
        %v1059 = vadd.f32 0.0, %v1058
        %v1060 = vpop.f32.mrb[0].mxu0
        %v1061 = vpop.f32.mrb[0].mxu0
        %v1062 = vadd.f32 0.0, %v1061
        %v1063 = vpop.f32.mrb[0].mxu0
        %1064 = vdwg.mxu0
        %v1065 = vmul.f32 %v906, 0.35355338
        %v1066 = vmul.f32 %v909, 0.35355338
        %v1067 = vmul.f32 %v957, 0.35355338
        %v1068 = vmul.f32 %v960, 0.35355338
        %v1069 = vmul.f32 %v1008, 0.35355338
        %v1070 = vmul.f32 %v1011, 0.35355338
        %v1071 = vmul.f32 %v1059, 0.35355338
        %v1072 = vmul.f32 %v1062, 0.35355338
        %v1073 = vsel %vm576, %v1065, -inf
        %1074 = vmax.xlane.f32.xlu0 %v1073
        %v1075 = vpop.xlane.xlu0 %1074
        %v1076 = vsel %vm576, %v1066, -inf
        %1077 = vmax.xlane.f32.xlu0 %v1076
        %v1078 = vpop.xlane.xlu0 %1077
        %v1079 = vsel %vm576, %v1067, -inf
        %1080 = vmax.xlane.f32.xlu0 %v1079
        %v1081 = vpop.xlane.xlu0 %1080
        %v1082 = vsel %vm576, %v1068, -inf
        %1083 = vmax.xlane.f32.xlu0 %v1082
        %v1084 = vpop.xlane.xlu0 %1083
        %v1085 = vsel %vm576, %v1069, -inf
        %1086 = vmax.xlane.f32.xlu0 %v1085
        %v1087 = vpop.xlane.xlu0 %1086
        %v1088 = vsel %vm576, %v1070, -inf
        %1089 = vmax.xlane.f32.xlu0 %v1088
        %v1090 = vpop.xlane.xlu0 %1089
        %v1091 = vsel %vm576, %v1071, -inf
        %1092 = vmax.xlane.f32.xlu0 %v1091
        %v1093 = vpop.xlane.xlu0 %1092
        %v1094 = vsel %vm576, %v1072, -inf
        %1095 = vmax.xlane.f32.xlu0 %v1094
        %v1096 = vpop.xlane.xlu0 %1095
        %v1097 = vsub.f32 %v1065, %v1075
        %v1098 = vsub.f32 %v1066, %v1078
        %v1099 = vsub.f32 %v1067, %v1081
        %v1100 = vsub.f32 %v1068, %v1084
        %v1101 = vsub.f32 %v1069, %v1087
        %v1102 = vsub.f32 %v1070, %v1090
        %v1103 = vsub.f32 %v1071, %v1093
        %v1104 = vsub.f32 %v1072, %v1096
        %v1105 = vmul.f32 %v1097, 1.442695
        %v1106 = vpow.pop %v1105
        %v1107 = vmul.f32 %v1098, 1.442695
        %v1108 = vpow.pop %v1107
        %v1109 = vmul.f32 %v1099, 1.442695
        %v1110 = vpow.pop %v1109
        %v1111 = vmul.f32 %v1100, 1.442695
        %v1112 = vpow.pop %v1111
        %v1113 = vmul.f32 %v1101, 1.442695
        %v1114 = vpow.pop %v1113
        %v1115 = vmul.f32 %v1102, 1.442695
        %v1116 = vpow.pop %v1115
        %v1117 = vmul.f32 %v1103, 1.442695
        %v1118 = vpow.pop %v1117
        %v1119 = vmul.f32 %v1104, 1.442695
        %v1120 = vpow.pop %v1119
        %v1121 = vsel %vm576, %v1106, 0.0
        %1122 = vadd.xlane.f32.xlu0 %v1121
        %v1123 = vpop.xlane.xlu0 %1122
        %v1124 = vsel %vm576, %v1108, 0.0
        %1125 = vadd.xlane.f32.xlu0 %v1124
        %v1126 = vpop.xlane.xlu0 %1125
        %v1127 = vsel %vm576, %v1110, 0.0
        %1128 = vadd.xlane.f32.xlu0 %v1127
        %v1129 = vpop.xlane.xlu0 %1128
        %v1130 = vsel %vm576, %v1112, 0.0
        %1131 = vadd.xlane.f32.xlu0 %v1130
        %v1132 = vpop.xlane.xlu0 %1131
        %v1133 = vsel %vm576, %v1114, 0.0
        %1134 = vadd.xlane.f32.xlu0 %v1133
        %v1135 = vpop.xlane.xlu0 %1134
        %v1136 = vsel %vm576, %v1116, 0.0
        %1137 = vadd.xlane.f32.xlu0 %v1136
        %v1138 = vpop.xlane.xlu0 %1137
        %v1139 = vsel %vm576, %v1118, 0.0
        %1140 = vadd.xlane.f32.xlu0 %v1139
        %v1141 = vpop.xlane.xlu0 %1140
        %v1142 = vsel %vm576, %v1120, 0.0
        %1143 = vadd.xlane.f32.xlu0 %v1142
        %v1144 = vpop.xlane.xlu0 %1143
        %v1145 = vrcp.pop %v1123
        %v1146 = vrcp.pop %v1126
        %v1147 = vrcp.pop %v1129
        %v1148 = vrcp.pop %v1132
        %v1149 = vrcp.pop %v1135
        %v1150 = vrcp.pop %v1138
        %v1151 = vrcp.pop %v1141
        %v1152 = vrcp.pop %v1144
        %v1153 = vmul.f32 %v1106, %v1145
        %v1154 = vmul.f32 %v1108, %v1146
        %v1155 = vmul.f32 %v1110, %v1147
        %v1156 = vmul.f32 %v1112, %v1148
        %v1157 = vmul.f32 %v1114, %v1149
        %v1158 = vmul.f32 %v1116, %v1150
        %v1159 = vmul.f32 %v1118, %v1151
        %v1160 = vmul.f32 %v1120, %v1152
        %v1161 = vpack.c.bf16 %v1154, %v1153
        %v1162 = vpack.c.bf16 %v1156, %v1155
        %v1163 = vpack.c.bf16 %v1158, %v1157
        %v1164 = vpack.c.bf16 %v1160, %v1159
        %1165 = vrot.lane.b32.xlu0 %v363, 56
        %v1166 = vpop.permute.xlu0 %1165
        %v1169 = vsel %vm576, %v1161, 0
        %1171 = vmatprep.subr.bf16.mxu0 0
        %1172 = vmatpush1.bf16.msra.mxu0 %v1166
        %1173 = vmatprep.subr.bf16.mxu0 0
        %1174 = vmatpush1.bf16.msra.mxu0 0
        %1175 = vmatprep.subr.bf16.mxu0 0
        %1176 = vmatpush1.bf16.msra.mxu0 0
        %1177 = vmatprep.subr.bf16.mxu0 0
        %1178 = vmatpush1.bf16.msra.mxu0 0
        %1179 = vmatprep.subr.bf16.mxu0 0
        %1180 = vmatpush1.bf16.msra.mxu0 0
        %1181 = vmatprep.subr.bf16.mxu0 0
        %1182 = vmatpush1.bf16.msra.mxu0 0
        %1183 = vmatprep.subr.bf16.mxu0 0
        %1184 = vmatpush1.bf16.msra.mxu0 0
        %1185 = vmatprep.subr.bf16.mxu0 0
        %1186 = vmatpush1.bf16.msra.mxu0 0
        %1187 = vmatprep.subr.bf16.mxu0 0
        %1188 = vmatpush1.bf16.msra.mxu0 0
        %1189 = vmatprep.subr.bf16.mxu0 0
        %1190 = vmatpush1.bf16.msra.mxu0 0
        %1191 = vmatprep.subr.bf16.mxu0 0
        %1192 = vmatpush1.bf16.msra.mxu0 0
        %1193 = vmatprep.subr.bf16.mxu0 0
        %1194 = vmatpush1.bf16.msra.mxu0 0
        %1195 = vmatprep.subr.bf16.mxu0 0
        %1196 = vmatpush1.bf16.msra.mxu0 0
        %1197 = vmatprep.subr.bf16.mxu0 0
        %1198 = vmatpush1.bf16.msra.mxu0 0
        %1199 = vmatprep.subr.bf16.mxu0 0
        %1200 = vmatpush1.bf16.msra.mxu0 0
        %1201 = vmatprep.subr.bf16.mxu0 0
        %1202 = vmatpush1.bf16.msra.mxu0 0
        %1203 = vmatprep.mubr.bf16.mxu0 0
        %1204 = vmatmul.mubr.bf16.gmra.mrb[0].mxu0 %v1169
        %v1205 = vpop.f32.mrb[0].mxu0
        %v1206 = vadd.f32 0.0, %v1205
        %v1207 = vpop.f32.mrb[0].mxu0
        %v1208 = vpop.f32.mrb[0].mxu0
        %v1209 = vadd.f32 0.0, %v1208
        %v1210 = vpop.f32.mrb[0].mxu0
        %1211 = vdwg.mxu0
        %1212 = vrot.lane.b32.xlu0 %v364, 56
        %v1213 = vpop.permute.xlu0 %1212
        %v1216 = vsel %vm576, %v1162, 0
        %1218 = vmatprep.subr.bf16.mxu0 0
        %1219 = vmatpush1.bf16.msra.mxu0 %v1213
        %1220 = vmatprep.subr.bf16.mxu0 0
        %1221 = vmatpush1.bf16.msra.mxu0 0
        %1222 = vmatprep.subr.bf16.mxu0 0
        %1223 = vmatpush1.bf16.msra.mxu0 0
        %1224 = vmatprep.subr.bf16.mxu0 0
        %1225 = vmatpush1.bf16.msra.mxu0 0
        %1226 = vmatprep.subr.bf16.mxu0 0
        %1227 = vmatpush1.bf16.msra.mxu0 0
        %1228 = vmatprep.subr.bf16.mxu0 0
        %1229 = vmatpush1.bf16.msra.mxu0 0
        %1230 = vmatprep.subr.bf16.mxu0 0
        %1231 = vmatpush1.bf16.msra.mxu0 0
        %1232 = vmatprep.subr.bf16.mxu0 0
        %1233 = vmatpush1.bf16.msra.mxu0 0
        %1234 = vmatprep.subr.bf16.mxu0 0
        %1235 = vmatpush1.bf16.msra.mxu0 0
        %1236 = vmatprep.subr.bf16.mxu0 0
        %1237 = vmatpush1.bf16.msra.mxu0 0
        %1238 = vmatprep.subr.bf16.mxu0 0
        %1239 = vmatpush1.bf16.msra.mxu0 0
        %1240 = vmatprep.subr.bf16.mxu0 0
        %1241 = vmatpush1.bf16.msra.mxu0 0
        %1242 = vmatprep.subr.bf16.mxu0 0
        %1243 = vmatpush1.bf16.msra.mxu0 0
        %1244 = vmatprep.subr.bf16.mxu0 0
        %1245 = vmatpush1.bf16.msra.mxu0 0
        %1246 = vmatprep.subr.bf16.mxu0 0
        %1247 = vmatpush1.bf16.msra.mxu0 0
        %1248 = vmatprep.subr.bf16.mxu0 0
        %1249 = vmatpush1.bf16.msra.mxu0 0
        %1250 = vmatprep.mubr.bf16.mxu0 0
        %1251 = vmatmul.mubr.bf16.gmra.mrb[0].mxu0 %v1216
        %v1252 = vpop.f32.mrb[0].mxu0
        %v1253 = vadd.f32 0.0, %v1252
        %v1254 = vpop.f32.mrb[0].mxu0
        %v1255 = vpop.f32.mrb[0].mxu0
        %v1256 = vadd.f32 0.0, %v1255
        %v1257 = vpop.f32.mrb[0].mxu0
        %1258 = vdwg.mxu0
        %1259 = vrot.lane.b32.xlu0 %v365, 56
        %v1260 = vpop.permute.xlu0 %1259
        %v1263 = vsel %vm576, %v1163, 0
        %1265 = vmatprep.subr.bf16.mxu0 0
        %1266 = vmatpush1.bf16.msra.mxu0 %v1260
        %1267 = vmatprep.subr.bf16.mxu0 0
        %1268 = vmatpush1.bf16.msra.mxu0 0
        %1269 = vmatprep.subr.bf16.mxu0 0
        %1270 = vmatpush1.bf16.msra.mxu0 0
        %1271 = vmatprep.subr.bf16.mxu0 0
        %1272 = vmatpush1.bf16.msra.mxu0 0
        %1273 = vmatprep.subr.bf16.mxu0 0
        %1274 = vmatpush1.bf16.msra.mxu0 0
        %1275 = vmatprep.subr.bf16.mxu0 0
        %1276 = vmatpush1.bf16.msra.mxu0 0
        %1277 = vmatprep.subr.bf16.mxu0 0
        %1278 = vmatpush1.bf16.msra.mxu0 0
        %1279 = vmatprep.subr.bf16.mxu0 0
        %1280 = vmatpush1.bf16.msra.mxu0 0
        %1281 = vmatprep.subr.bf16.mxu0 0
        %1282 = vmatpush1.bf16.msra.mxu0 0
        %1283 = vmatprep.subr.bf16.mxu0 0
        %1284 = vmatpush1.bf16.msra.mxu0 0
        %1285 = vmatprep.subr.bf16.mxu0 0
        %1286 = vmatpush1.bf16.msra.mxu0 0
        %1287 = vmatprep.subr.bf16.mxu0 0
        %1288 = vmatpush1.bf16.msra.mxu0 0
        %1289 = vmatprep.subr.bf16.mxu0 0
        %1290 = vmatpush1.bf16.msra.mxu0 0
        %1291 = vmatprep.subr.bf16.mxu0 0
        %1292 = vmatpush1.bf16.msra.mxu0 0
        %1293 = vmatprep.subr.bf16.mxu0 0
        %1294 = vmatpush1.bf16.msra.mxu0 0
        %1295 = vmatprep.subr.bf16.mxu0 0
        %1296 = vmatpush1.bf16.msra.mxu0 0
        %1297 = vmatprep.mubr.bf16.mxu0 0
        %1298 = vmatmul.mubr.bf16.gmra.mrb[0].mxu0 %v1263
        %v1299 = vpop.f32.mrb[0].mxu0
        %v1300 = vadd.f32 0.0, %v1299
        %v1301 = vpop.f32.mrb[0].mxu0
        %v1302 = vpop.f32.mrb[0].mxu0
        %v1303 = vadd.f32 0.0, %v1302
        %v1304 = vpop.f32.mrb[0].mxu0
        %1305 = vdwg.mxu0
        %1306 = vrot.lane.b32.xlu0 %v366, 56
        %v1307 = vpop.permute.xlu0 %1306
        %v1310 = vsel %vm576, %v1164, 0
        %1312 = vmatprep.subr.bf16.mxu0 0
        %1313 = vmatpush1.bf16.msra.mxu0 %v1307
        %1314 = vmatprep.subr.bf16.mxu0 0
        %1315 = vmatpush1.bf16.msra.mxu0 0
        %1316 = vmatprep.subr.bf16.mxu0 0
        %1317 = vmatpush1.bf16.msra.mxu0 0
        %1318 = vmatprep.subr.bf16.mxu0 0
        %1319 = vmatpush1.bf16.msra.mxu0 0
        %1320 = vmatprep.subr.bf16.mxu0 0
        %1321 = vmatpush1.bf16.msra.mxu0 0
        %1322 = vmatprep.subr.bf16.mxu0 0
        %1323 = vmatpush1.bf16.msra.mxu0 0
        %1324 = vmatprep.subr.bf16.mxu0 0
        %1325 = vmatpush1.bf16.msra.mxu0 0
        %1326 = vmatprep.subr.bf16.mxu0 0
        %1327 = vmatpush1.bf16.msra.mxu0 0
        %1328 = vmatprep.subr.bf16.mxu0 0
        %1329 = vmatpush1.bf16.msra.mxu0 0
        %1330 = vmatprep.subr.bf16.mxu0 0
        %1331 = vmatpush1.bf16.msra.mxu0 0
        %1332 = vmatprep.subr.bf16.mxu0 0
        %1333 = vmatpush1.bf16.msra.mxu0 0
        %1334 = vmatprep.subr.bf16.mxu0 0
        %1335 = vmatpush1.bf16.msra.mxu0 0
        %1336 = vmatprep.subr.bf16.mxu0 0
        %1337 = vmatpush1.bf16.msra.mxu0 0
        %1338 = vmatprep.subr.bf16.mxu0 0
        %1339 = vmatpush1.bf16.msra.mxu0 0
        %1340 = vmatprep.subr.bf16.mxu0 0
        %1341 = vmatpush1.bf16.msra.mxu0 0
        %1342 = vmatprep.subr.bf16.mxu0 0
        %1343 = vmatpush1.bf16.msra.mxu0 0
        %1344 = vmatprep.mubr.bf16.mxu0 0
        %1345 = vmatmul.mubr.bf16.gmra.mrb[0].mxu0 %v1310
        %v1346 = vpop.f32.mrb[0].mxu0
        %v1347 = vadd.f32 0.0, %v1346
        %v1348 = vpop.f32.mrb[0].mxu0
        %v1349 = vpop.f32.mrb[0].mxu0
        %v1350 = vadd.f32 0.0, %v1349
        %v1351 = vpop.f32.mrb[0].mxu0
        %1352 = vdwg.mxu0
        %v1353 = vpack.c.bf16 %v1209, %v1206
        %v1354 = vpack.c.bf16 %v1256, %v1253
        %v1355 = vpack.c.bf16 %v1303, %v1300
        %v1356 = vpack.c.bf16 %v1350, %v1347
        %v1358 = vsel %vm370, %v1353, 0
        %v1361 = vsel %vm370, %v1354, 0
        %v1364 = vsel %vm370, %v1355, 0
        %v1367 = vsel %vm370, %v1356, 0
        %vm1369 = vcmask 1043456
        %v1371 = vsel %vm1369, %v360, 0
        %1373 = vmatprep.subr.bf16.mxu0 0
        %1374 = vmatpush1.bf16.msra.mxu0 %v1371
        %1375 = vmatprep.subr.bf16.mxu0 0
        %1376 = vmatpush1.bf16.msra.mxu0 0
        %1377 = vmatprep.subr.bf16.mxu0 0
        %1378 = vmatpush1.bf16.msra.mxu0 0
        %1379 = vmatprep.subr.bf16.mxu0 0
        %1380 = vmatpush1.bf16.msra.mxu0 0
        %1381 = vmatprep.subr.bf16.mxu0 0
        %1382 = vmatpush1.bf16.msra.mxu0 0
        %1383 = vmatprep.subr.bf16.mxu0 0
        %1384 = vmatpush1.bf16.msra.mxu0 0
        %1385 = vmatprep.subr.bf16.mxu0 0
        %1386 = vmatpush1.bf16.msra.mxu0 0
        %1387 = vmatprep.subr.bf16.mxu0 0
        %1388 = vmatpush1.bf16.msra.mxu0 0
        %1389 = vmatprep.subr.bf16.mxu0 0
        %1390 = vmatpush1.bf16.msra.mxu0 0
        %1391 = vmatprep.subr.bf16.mxu0 0
        %1392 = vmatpush1.bf16.msra.mxu0 0
        %1393 = vmatprep.subr.bf16.mxu0 0
        %1394 = vmatpush1.bf16.msra.mxu0 0
        %1395 = vmatprep.subr.bf16.mxu0 0
        %1396 = vmatpush1.bf16.msra.mxu0 0
        %1397 = vmatprep.subr.bf16.mxu0 0
        %1398 = vmatpush1.bf16.msra.mxu0 0
        %1399 = vmatprep.subr.bf16.mxu0 0
        %1400 = vmatpush1.bf16.msra.mxu0 0
        %1401 = vmatprep.subr.bf16.mxu0 0
        %1402 = vmatpush1.bf16.msra.mxu0 0
        %1403 = vmatprep.subr.bf16.mxu0 0
        %1404 = vmatpush1.bf16.msra.mxu0 0
        %1405 = vmatprep.mubr.bf16.mxu0 0
        %1406 = vmatmul.mubr.bf16.gmra.mrb[0].mxu0 %v1358
        %v1407 = vpop.f32.mrb[0].mxu0
        %v1408 = vadd.f32 0.0, %v1407
        %v1409 = vpop.f32.mrb[0].mxu0
        %v1410 = vpop.f32.mrb[0].mxu0
        %v1411 = vadd.f32 0.0, %v1410
        %v1412 = vpop.f32.mrb[0].mxu0
        %1413 = vmatprep.mubr.bf16.mxu0 0
        %1414 = vmatmul.mubr.bf16.gmra.mrb[0].mxu0 %v1361
        %v1415 = vpop.f32.mrb[0].mxu0
        %v1416 = vadd.f32 0.0, %v1415
        %v1417 = vpop.f32.mrb[0].mxu0
        %v1418 = vpop.f32.mrb[0].mxu0
        %v1419 = vadd.f32 0.0, %v1418
        %v1420 = vpop.f32.mrb[0].mxu0
        %1421 = vmatprep.mubr.bf16.mxu0 0
        %1422 = vmatmul.mubr.bf16.gmra.mrb[0].mxu0 %v1364
        %v1423 = vpop.f32.mrb[0].mxu0
        %v1424 = vadd.f32 0.0, %v1423
        %v1425 = vpop.f32.mrb[0].mxu0
        %v1426 = vpop.f32.mrb[0].mxu0
        %v1427 = vadd.f32 0.0, %v1426
        %v1428 = vpop.f32.mrb[0].mxu0
        %1429 = vmatprep.mubr.bf16.mxu0 0
        %1430 = vmatmul.mubr.bf16.gmra.mrb[0].mxu0 %v1367
        %v1431 = vpop.f32.mrb[0].mxu0
        %v1432 = vadd.f32 0.0, %v1431
        %v1433 = vpop.f32.mrb[0].mxu0
        %v1434 = vpop.f32.mrb[0].mxu0
        %v1435 = vadd.f32 0.0, %v1434
        %v1436 = vpop.f32.mrb[0].mxu0
        %1437 = vdwg.mxu0
        %v1439 = vsel %vm370, %v857, 0
        %v1442 = vsel %vm370, %v858, 0
        %v1445 = vsel %vm370, %v859, 0
        %v1448 = vsel %vm370, %v860, 0
        %v1451 = vsel %vm1369, %v359, 0
        %1453 = vmatprep.subr.bf16.mxu0 0
        %1454 = vmatpush1.bf16.msra.mxu0 %v1451
        %1455 = vmatprep.subr.bf16.mxu0 0
        %1456 = vmatpush1.bf16.msra.mxu0 0
        %1457 = vmatprep.subr.bf16.mxu0 0
        %1458 = vmatpush1.bf16.msra.mxu0 0
        %1459 = vmatprep.subr.bf16.mxu0 0
        %1460 = vmatpush1.bf16.msra.mxu0 0
        %1461 = vmatprep.subr.bf16.mxu0 0
        %1462 = vmatpush1.bf16.msra.mxu0 0
        %1463 = vmatprep.subr.bf16.mxu0 0
        %1464 = vmatpush1.bf16.msra.mxu0 0
        %1465 = vmatprep.subr.bf16.mxu0 0
        %1466 = vmatpush1.bf16.msra.mxu0 0
        %1467 = vmatprep.subr.bf16.mxu0 0
        %1468 = vmatpush1.bf16.msra.mxu0 0
        %1469 = vmatprep.subr.bf16.mxu0 0
        %1470 = vmatpush1.bf16.msra.mxu0 0
        %1471 = vmatprep.subr.bf16.mxu0 0
        %1472 = vmatpush1.bf16.msra.mxu0 0
        %1473 = vmatprep.subr.bf16.mxu0 0
        %1474 = vmatpush1.bf16.msra.mxu0 0
        %1475 = vmatprep.subr.bf16.mxu0 0
        %1476 = vmatpush1.bf16.msra.mxu0 0
        %1477 = vmatprep.subr.bf16.mxu0 0
        %1478 = vmatpush1.bf16.msra.mxu0 0
        %1479 = vmatprep.subr.bf16.mxu0 0
        %1480 = vmatpush1.bf16.msra.mxu0 0
        %1481 = vmatprep.subr.bf16.mxu0 0
        %1482 = vmatpush1.bf16.msra.mxu0 0
        %1483 = vmatprep.subr.bf16.mxu0 0
        %1484 = vmatpush1.bf16.msra.mxu0 0
        %1485 = vmatprep.mubr.bf16.mxu0 0
        %1486 = vmatmul.mubr.bf16.gmra.mrb[0].mxu0 %v1439
        %v1487 = vpop.f32.mrb[0].mxu0
        %v1488 = vadd.f32 %v1408, %v1487
        %v1489 = vpop.f32.mrb[0].mxu0
        %v1490 = vpop.f32.mrb[0].mxu0
        %v1491 = vadd.f32 %v1411, %v1490
        %v1492 = vpop.f32.mrb[0].mxu0
        %1493 = vmatprep.mubr.bf16.mxu0 0
        %1494 = vmatmul.mubr.bf16.gmra.mrb[0].mxu0 %v1442
        %v1495 = vpop.f32.mrb[0].mxu0
        %v1496 = vadd.f32 %v1416, %v1495
        %v1497 = vpop.f32.mrb[0].mxu0
        %v1498 = vpop.f32.mrb[0].mxu0
        %v1499 = vadd.f32 %v1419, %v1498
        %v1500 = vpop.f32.mrb[0].mxu0
        %1501 = vmatprep.mubr.bf16.mxu0 0
        %1502 = vmatmul.mubr.bf16.gmra.mrb[0].mxu0 %v1445
        %v1503 = vpop.f32.mrb[0].mxu0
        %v1504 = vadd.f32 %v1424, %v1503
        %v1505 = vpop.f32.mrb[0].mxu0
        %v1506 = vpop.f32.mrb[0].mxu0
        %v1507 = vadd.f32 %v1427, %v1506
        %v1508 = vpop.f32.mrb[0].mxu0
        %1509 = vmatprep.mubr.bf16.mxu0 0
        %1510 = vmatmul.mubr.bf16.gmra.mrb[0].mxu0 %v1448
        %v1511 = vpop.f32.mrb[0].mxu0
        %v1512 = vadd.f32 %v1432, %v1511
        %v1513 = vpop.f32.mrb[0].mxu0
        %v1514 = vpop.f32.mrb[0].mxu0
        %v1515 = vadd.f32 %v1435, %v1514
        %v1516 = vpop.f32.mrb[0].mxu0
        %1517 = vdwg.mxu0
        %1518 = vrot.lane.b32.xlu0 %v363, 112
        %v1519 = vpop.permute.xlu0 %1518
        %1520 = vrot.lane.b32.xlu0 %v363, 80
        %v1521 = vpop.permute.xlu0 %1520
        %v1523 = vsel %vm370, %v1519, 0
        %v1526 = vsel %vm370, %v1521, 0
        %1528 = vmatprep.subr.bf16.mxu0 0
        %1529 = vmatpush1.bf16.xpose.msra.mxu0 %v1526
        %1530 = vmatprep.subr.bf16.mxu0 0
        %1531 = vmatpush1.bf16.xpose.msra.mxu0 0
        %1532 = vmatprep.subr.bf16.mxu0 0
        %1533 = vmatpush1.bf16.xpose.msra.mxu0 0
        %1534 = vmatprep.subr.bf16.mxu0 0
        %1535 = vmatpush1.bf16.xpose.msra.mxu0 0
        %1536 = vmatprep.subr.bf16.mxu0 0
        %1537 = vmatpush1.bf16.xpose.msra.mxu0 0
        %1538 = vmatprep.subr.bf16.mxu0 0
        %1539 = vmatpush1.bf16.xpose.msra.mxu0 0
        %1540 = vmatprep.subr.bf16.mxu0 0
        %1541 = vmatpush1.bf16.xpose.msra.mxu0 0
        %1542 = vmatprep.subr.bf16.mxu0 0
        %1543 = vmatpush1.bf16.xpose.msra.mxu0 0
        %1544 = vmatprep.subr.bf16.mxu0 0
        %1545 = vmatpush1.bf16.xpose.msra.mxu0 0
        %1546 = vmatprep.subr.bf16.mxu0 0
        %1547 = vmatpush1.bf16.xpose.msra.mxu0 0
        %1548 = vmatprep.subr.bf16.mxu0 0
        %1549 = vmatpush1.bf16.xpose.msra.mxu0 0
        %1550 = vmatprep.subr.bf16.mxu0 0
        %1551 = vmatpush1.bf16.xpose.msra.mxu0 0
        %1552 = vmatprep.subr.bf16.mxu0 0
        %1553 = vmatpush1.bf16.xpose.msra.mxu0 0
        %1554 = vmatprep.subr.bf16.mxu0 0
        %1555 = vmatpush1.bf16.xpose.msra.mxu0 0
        %1556 = vmatprep.subr.bf16.mxu0 0
        %1557 = vmatpush1.bf16.xpose.msra.mxu0 0
        %1558 = vmatprep.subr.bf16.mxu0 0
        %1559 = vmatpush1.bf16.xpose.msra.mxu0 0
        %1560 = vmatprep.mubr.bf16.mxu0 0
        %1561 = vmatmul.mubr.bf16.gmra.mrb[0].mxu0 %v1523
        %v1562 = vpop.f32.mrb[0].mxu0
        %v1563 = vadd.f32 0.0, %v1562
        %v1564 = vpop.f32.mrb[0].mxu0
        %v1565 = vpop.f32.mrb[0].mxu0
        %v1566 = vadd.f32 0.0, %v1565
        %v1567 = vpop.f32.mrb[0].mxu0
        %1568 = vdwg.mxu0
        %1569 = vrot.lane.b32.xlu0 %v364, 112
        %v1570 = vpop.permute.xlu0 %1569
        %1571 = vrot.lane.b32.xlu0 %v364, 80
        %v1572 = vpop.permute.xlu0 %1571
        %v1574 = vsel %vm370, %v1570, 0
        %v1577 = vsel %vm370, %v1572, 0
        %1579 = vmatprep.subr.bf16.mxu0 0
        %1580 = vmatpush1.bf16.xpose.msra.mxu0 %v1577
        %1581 = vmatprep.subr.bf16.mxu0 0
        %1582 = vmatpush1.bf16.xpose.msra.mxu0 0
        %1583 = vmatprep.subr.bf16.mxu0 0
        %1584 = vmatpush1.bf16.xpose.msra.mxu0 0
        %1585 = vmatprep.subr.bf16.mxu0 0
        %1586 = vmatpush1.bf16.xpose.msra.mxu0 0
        %1587 = vmatprep.subr.bf16.mxu0 0
        %1588 = vmatpush1.bf16.xpose.msra.mxu0 0
        %1589 = vmatprep.subr.bf16.mxu0 0
        %1590 = vmatpush1.bf16.xpose.msra.mxu0 0
        %1591 = vmatprep.subr.bf16.mxu0 0
        %1592 = vmatpush1.bf16.xpose.msra.mxu0 0
        %1593 = vmatprep.subr.bf16.mxu0 0
        %1594 = vmatpush1.bf16.xpose.msra.mxu0 0
        %1595 = vmatprep.subr.bf16.mxu0 0
        %1596 = vmatpush1.bf16.xpose.msra.mxu0 0
        %1597 = vmatprep.subr.bf16.mxu0 0
        %1598 = vmatpush1.bf16.xpose.msra.mxu0 0
        %1599 = vmatprep.subr.bf16.mxu0 0
        %1600 = vmatpush1.bf16.xpose.msra.mxu0 0
        %1601 = vmatprep.subr.bf16.mxu0 0
        %1602 = vmatpush1.bf16.xpose.msra.mxu0 0
        %1603 = vmatprep.subr.bf16.mxu0 0
        %1604 = vmatpush1.bf16.xpose.msra.mxu0 0
        %1605 = vmatprep.subr.bf16.mxu0 0
        %1606 = vmatpush1.bf16.xpose.msra.mxu0 0
        %1607 = vmatprep.subr.bf16.mxu0 0
        %1608 = vmatpush1.bf16.xpose.msra.mxu0 0
        %1609 = vmatprep.subr.bf16.mxu0 0
        %1610 = vmatpush1.bf16.xpose.msra.mxu0 0
        %1611 = vmatprep.mubr.bf16.mxu0 0
        %1612 = vmatmul.mubr.bf16.gmra.mrb[0].mxu0 %v1574
        %v1613 = vpop.f32.mrb[0].mxu0
        %v1614 = vadd.f32 0.0, %v1613
        %v1615 = vpop.f32.mrb[0].mxu0
        %v1616 = vpop.f32.mrb[0].mxu0
        %v1617 = vadd.f32 0.0, %v1616
        %v1618 = vpop.f32.mrb[0].mxu0
        %1619 = vdwg.mxu0
        %1620 = vrot.lane.b32.xlu0 %v365, 112
        %v1621 = vpop.permute.xlu0 %1620
        %1622 = vrot.lane.b32.xlu0 %v365, 80
        %v1623 = vpop.permute.xlu0 %1622
        %v1625 = vsel %vm370, %v1621, 0
        %v1628 = vsel %vm370, %v1623, 0
        %1630 = vmatprep.subr.bf16.mxu0 0
        %1631 = vmatpush1.bf16.xpose.msra.mxu0 %v1628
        %1632 = vmatprep.subr.bf16.mxu0 0
        %1633 = vmatpush1.bf16.xpose.msra.mxu0 0
        %1634 = vmatprep.subr.bf16.mxu0 0
        %1635 = vmatpush1.bf16.xpose.msra.mxu0 0
        %1636 = vmatprep.subr.bf16.mxu0 0
        %1637 = vmatpush1.bf16.xpose.msra.mxu0 0
        %1638 = vmatprep.subr.bf16.mxu0 0
        %1639 = vmatpush1.bf16.xpose.msra.mxu0 0
        %1640 = vmatprep.subr.bf16.mxu0 0
        %1641 = vmatpush1.bf16.xpose.msra.mxu0 0
        %1642 = vmatprep.subr.bf16.mxu0 0
        %1643 = vmatpush1.bf16.xpose.msra.mxu0 0
        %1644 = vmatprep.subr.bf16.mxu0 0
        %1645 = vmatpush1.bf16.xpose.msra.mxu0 0
        %1646 = vmatprep.subr.bf16.mxu0 0
        %1647 = vmatpush1.bf16.xpose.msra.mxu0 0
        %1648 = vmatprep.subr.bf16.mxu0 0
        %1649 = vmatpush1.bf16.xpose.msra.mxu0 0
        %1650 = vmatprep.subr.bf16.mxu0 0
        %1651 = vmatpush1.bf16.xpose.msra.mxu0 0
        %1652 = vmatprep.subr.bf16.mxu0 0
        %1653 = vmatpush1.bf16.xpose.msra.mxu0 0
        %1654 = vmatprep.subr.bf16.mxu0 0
        %1655 = vmatpush1.bf16.xpose.msra.mxu0 0
        %1656 = vmatprep.subr.bf16.mxu0 0
        %1657 = vmatpush1.bf16.xpose.msra.mxu0 0
        %1658 = vmatprep.subr.bf16.mxu0 0
        %1659 = vmatpush1.bf16.xpose.msra.mxu0 0
        %1660 = vmatprep.subr.bf16.mxu0 0
        %1661 = vmatpush1.bf16.xpose.msra.mxu0 0
        %1662 = vmatprep.mubr.bf16.mxu0 0
        %1663 = vmatmul.mubr.bf16.gmra.mrb[0].mxu0 %v1625
        %v1664 = vpop.f32.mrb[0].mxu0
        %v1665 = vadd.f32 0.0, %v1664
        %v1666 = vpop.f32.mrb[0].mxu0
        %v1667 = vpop.f32.mrb[0].mxu0
        %v1668 = vadd.f32 0.0, %v1667
        %v1669 = vpop.f32.mrb[0].mxu0
        %1670 = vdwg.mxu0
        %1671 = vrot.lane.b32.xlu0 %v366, 112
        %v1672 = vpop.permute.xlu0 %1671
        %1673 = vrot.lane.b32.xlu0 %v366, 80
        %v1674 = vpop.permute.xlu0 %1673
        %v1676 = vsel %vm370, %v1672, 0
        %v1679 = vsel %vm370, %v1674, 0
        %1681 = vmatprep.subr.bf16.mxu0 0
        %1682 = vmatpush1.bf16.xpose.msra.mxu0 %v1679
        %1683 = vmatprep.subr.bf16.mxu0 0
        %1684 = vmatpush1.bf16.xpose.msra.mxu0 0
        %1685 = vmatprep.subr.bf16.mxu0 0
        %1686 = vmatpush1.bf16.xpose.msra.mxu0 0
        %1687 = vmatprep.subr.bf16.mxu0 0
        %1688 = vmatpush1.bf16.xpose.msra.mxu0 0
        %1689 = vmatprep.subr.bf16.mxu0 0
        %1690 = vmatpush1.bf16.xpose.msra.mxu0 0
        %1691 = vmatprep.subr.bf16.mxu0 0
        %1692 = vmatpush1.bf16.xpose.msra.mxu0 0
        %1693 = vmatprep.subr.bf16.mxu0 0
        %1694 = vmatpush1.bf16.xpose.msra.mxu0 0
        %1695 = vmatprep.subr.bf16.mxu0 0
        %1696 = vmatpush1.bf16.xpose.msra.mxu0 0
        %1697 = vmatprep.subr.bf16.mxu0 0
        %1698 = vmatpush1.bf16.xpose.msra.mxu0 0
        %1699 = vmatprep.subr.bf16.mxu0 0
        %1700 = vmatpush1.bf16.xpose.msra.mxu0 0
        %1701 = vmatprep.subr.bf16.mxu0 0
        %1702 = vmatpush1.bf16.xpose.msra.mxu0 0
        %1703 = vmatprep.subr.bf16.mxu0 0
        %1704 = vmatpush1.bf16.xpose.msra.mxu0 0
        %1705 = vmatprep.subr.bf16.mxu0 0
        %1706 = vmatpush1.bf16.xpose.msra.mxu0 0
        %1707 = vmatprep.subr.bf16.mxu0 0
        %1708 = vmatpush1.bf16.xpose.msra.mxu0 0
        %1709 = vmatprep.subr.bf16.mxu0 0
        %1710 = vmatpush1.bf16.xpose.msra.mxu0 0
        %1711 = vmatprep.subr.bf16.mxu0 0
        %1712 = vmatpush1.bf16.xpose.msra.mxu0 0
        %1713 = vmatprep.mubr.bf16.mxu0 0
        %1714 = vmatmul.mubr.bf16.gmra.mrb[0].mxu0 %v1676
        %v1715 = vpop.f32.mrb[0].mxu0
        %v1716 = vadd.f32 0.0, %v1715
        %v1717 = vpop.f32.mrb[0].mxu0
        %v1718 = vpop.f32.mrb[0].mxu0
        %v1719 = vadd.f32 0.0, %v1718
        %v1720 = vpop.f32.mrb[0].mxu0
        %1721 = vdwg.mxu0
        %v1722 = vmul.f32 %v1563, 0.35355338
        %v1723 = vmul.f32 %v1566, 0.35355338
        %v1724 = vmul.f32 %v1614, 0.35355338
        %v1725 = vmul.f32 %v1617, 0.35355338
        %v1726 = vmul.f32 %v1665, 0.35355338
        %v1727 = vmul.f32 %v1668, 0.35355338
        %v1728 = vmul.f32 %v1716, 0.35355338
        %v1729 = vmul.f32 %v1719, 0.35355338
        %v1730 = vsel %vm576, %v1722, -inf
        %1731 = vmax.xlane.f32.xlu0 %v1730
        %v1732 = vpop.xlane.xlu0 %1731
        %v1733 = vsel %vm576, %v1723, -inf
        %1734 = vmax.xlane.f32.xlu0 %v1733
        %v1735 = vpop.xlane.xlu0 %1734
        %v1736 = vsel %vm576, %v1724, -inf
        %1737 = vmax.xlane.f32.xlu0 %v1736
        %v1738 = vpop.xlane.xlu0 %1737
        %v1739 = vsel %vm576, %v1725, -inf
        %1740 = vmax.xlane.f32.xlu0 %v1739
        %v1741 = vpop.xlane.xlu0 %1740
        %v1742 = vsel %vm576, %v1726, -inf
        %1743 = vmax.xlane.f32.xlu0 %v1742
        %v1744 = vpop.xlane.xlu0 %1743
        %v1745 = vsel %vm576, %v1727, -inf
        %1746 = vmax.xlane.f32.xlu0 %v1745
        %v1747 = vpop.xlane.xlu0 %1746
        %v1748 = vsel %vm576, %v1728, -inf
        %1749 = vmax.xlane.f32.xlu0 %v1748
        %v1750 = vpop.xlane.xlu0 %1749
        %v1751 = vsel %vm576, %v1729, -inf
        %1752 = vmax.xlane.f32.xlu0 %v1751
        %v1753 = vpop.xlane.xlu0 %1752
        %v1754 = vsub.f32 %v1722, %v1732
        %v1755 = vsub.f32 %v1723, %v1735
        %v1756 = vsub.f32 %v1724, %v1738
        %v1757 = vsub.f32 %v1725, %v1741
        %v1758 = vsub.f32 %v1726, %v1744
        %v1759 = vsub.f32 %v1727, %v1747
        %v1760 = vsub.f32 %v1728, %v1750
        %v1761 = vsub.f32 %v1729, %v1753
        %v1762 = vmul.f32 %v1754, 1.442695
        %v1763 = vpow.pop %v1762
        %v1764 = vmul.f32 %v1755, 1.442695
        %v1765 = vpow.pop %v1764
        %v1766 = vmul.f32 %v1756, 1.442695
        %v1767 = vpow.pop %v1766
        %v1768 = vmul.f32 %v1757, 1.442695
        %v1769 = vpow.pop %v1768
        %v1770 = vmul.f32 %v1758, 1.442695
        %v1771 = vpow.pop %v1770
        %v1772 = vmul.f32 %v1759, 1.442695
        %v1773 = vpow.pop %v1772
        %v1774 = vmul.f32 %v1760, 1.442695
        %v1775 = vpow.pop %v1774
        %v1776 = vmul.f32 %v1761, 1.442695
        %v1777 = vpow.pop %v1776
        %v1778 = vsel %vm576, %v1763, 0.0
        %1779 = vadd.xlane.f32.xlu0 %v1778
        %v1780 = vpop.xlane.xlu0 %1779
        %v1781 = vsel %vm576, %v1765, 0.0
        %1782 = vadd.xlane.f32.xlu0 %v1781
        %v1783 = vpop.xlane.xlu0 %1782
        %v1784 = vsel %vm576, %v1767, 0.0
        %1785 = vadd.xlane.f32.xlu0 %v1784
        %v1786 = vpop.xlane.xlu0 %1785
        %v1787 = vsel %vm576, %v1769, 0.0
        %1788 = vadd.xlane.f32.xlu0 %v1787
        %v1789 = vpop.xlane.xlu0 %1788
        %v1790 = vsel %vm576, %v1771, 0.0
        %1791 = vadd.xlane.f32.xlu0 %v1790
        %v1792 = vpop.xlane.xlu0 %1791
        %v1793 = vsel %vm576, %v1773, 0.0
        %1794 = vadd.xlane.f32.xlu0 %v1793
        %v1795 = vpop.xlane.xlu0 %1794
        %v1796 = vsel %vm576, %v1775, 0.0
        %1797 = vadd.xlane.f32.xlu0 %v1796
        %v1798 = vpop.xlane.xlu0 %1797
        %v1799 = vsel %vm576, %v1777, 0.0
        %1800 = vadd.xlane.f32.xlu0 %v1799
        %v1801 = vpop.xlane.xlu0 %1800
        %v1802 = vrcp.pop %v1780
        %v1803 = vrcp.pop %v1783
        %v1804 = vrcp.pop %v1786
        %v1805 = vrcp.pop %v1789
        %v1806 = vrcp.pop %v1792
        %v1807 = vrcp.pop %v1795
        %v1808 = vrcp.pop %v1798
        %v1809 = vrcp.pop %v1801
        %v1810 = vmul.f32 %v1763, %v1802
        %v1811 = vmul.f32 %v1765, %v1803
        %v1812 = vmul.f32 %v1767, %v1804
        %v1813 = vmul.f32 %v1769, %v1805
        %v1814 = vmul.f32 %v1771, %v1806
        %v1815 = vmul.f32 %v1773, %v1807
        %v1816 = vmul.f32 %v1775, %v1808
        %v1817 = vmul.f32 %v1777, %v1809
        %v1818 = vpack.c.bf16 %v1811, %v1810
        %v1819 = vpack.c.bf16 %v1813, %v1812
        %v1820 = vpack.c.bf16 %v1815, %v1814
        %v1821 = vpack.c.bf16 %v1817, %v1816
        %1822 = vrot.lane.b32.xlu0 %v363, 48
        %v1823 = vpop.permute.xlu0 %1822
        %v1826 = vsel %vm576, %v1818, 0
        %1828 = vmatprep.subr.bf16.mxu0 0
        %1829 = vmatpush1.bf16.msra.mxu0 %v1823
        %1830 = vmatprep.subr.bf16.mxu0 0
        %1831 = vmatpush1.bf16.msra.mxu0 0
        %1832 = vmatprep.subr.bf16.mxu0 0
        %1833 = vmatpush1.bf16.msra.mxu0 0
        %1834 = vmatprep.subr.bf16.mxu0 0
        %1835 = vmatpush1.bf16.msra.mxu0 0
        %1836 = vmatprep.subr.bf16.mxu0 0
        %1837 = vmatpush1.bf16.msra.mxu0 0
        %1838 = vmatprep.subr.bf16.mxu0 0
        %1839 = vmatpush1.bf16.msra.mxu0 0
        %1840 = vmatprep.subr.bf16.mxu0 0
        %1841 = vmatpush1.bf16.msra.mxu0 0
        %1842 = vmatprep.subr.bf16.mxu0 0
        %1843 = vmatpush1.bf16.msra.mxu0 0
        %1844 = vmatprep.subr.bf16.mxu0 0
        %1845 = vmatpush1.bf16.msra.mxu0 0
        %1846 = vmatprep.subr.bf16.mxu0 0
        %1847 = vmatpush1.bf16.msra.mxu0 0
        %1848 = vmatprep.subr.bf16.mxu0 0
        %1849 = vmatpush1.bf16.msra.mxu0 0
        %1850 = vmatprep.subr.bf16.mxu0 0
        %1851 = vmatpush1.bf16.msra.mxu0 0
        %1852 = vmatprep.subr.bf16.mxu0 0
        %1853 = vmatpush1.bf16.msra.mxu0 0
        %1854 = vmatprep.subr.bf16.mxu0 0
        %1855 = vmatpush1.bf16.msra.mxu0 0
        %1856 = vmatprep.subr.bf16.mxu0 0
        %1857 = vmatpush1.bf16.msra.mxu0 0
        %1858 = vmatprep.subr.bf16.mxu0 0
        %1859 = vmatpush1.bf16.msra.mxu0 0
        %1860 = vmatprep.mubr.bf16.mxu0 0
        %1861 = vmatmul.mubr.bf16.gmra.mrb[0].mxu0 %v1826
        %v1862 = vpop.f32.mrb[0].mxu0
        %v1863 = vadd.f32 0.0, %v1862
        %v1864 = vpop.f32.mrb[0].mxu0
        %v1865 = vpop.f32.mrb[0].mxu0
        %v1866 = vadd.f32 0.0, %v1865
        %v1867 = vpop.f32.mrb[0].mxu0
        %1868 = vdwg.mxu0
        %1869 = vrot.lane.b32.xlu0 %v364, 48
        %v1870 = vpop.permute.xlu0 %1869
        %v1873 = vsel %vm576, %v1819, 0
        %1875 = vmatprep.subr.bf16.mxu0 0
        %1876 = vmatpush1.bf16.msra.mxu0 %v1870
        %1877 = vmatprep.subr.bf16.mxu0 0
        %1878 = vmatpush1.bf16.msra.mxu0 0
        %1879 = vmatprep.subr.bf16.mxu0 0
        %1880 = vmatpush1.bf16.msra.mxu0 0
        %1881 = vmatprep.subr.bf16.mxu0 0
        %1882 = vmatpush1.bf16.msra.mxu0 0
        %1883 = vmatprep.subr.bf16.mxu0 0
        %1884 = vmatpush1.bf16.msra.mxu0 0
        %1885 = vmatprep.subr.bf16.mxu0 0
        %1886 = vmatpush1.bf16.msra.mxu0 0
        %1887 = vmatprep.subr.bf16.mxu0 0
        %1888 = vmatpush1.bf16.msra.mxu0 0
        %1889 = vmatprep.subr.bf16.mxu0 0
        %1890 = vmatpush1.bf16.msra.mxu0 0
        %1891 = vmatprep.subr.bf16.mxu0 0
        %1892 = vmatpush1.bf16.msra.mxu0 0
        %1893 = vmatprep.subr.bf16.mxu0 0
        %1894 = vmatpush1.bf16.msra.mxu0 0
        %1895 = vmatprep.subr.bf16.mxu0 0
        %1896 = vmatpush1.bf16.msra.mxu0 0
        %1897 = vmatprep.subr.bf16.mxu0 0
        %1898 = vmatpush1.bf16.msra.mxu0 0
        %1899 = vmatprep.subr.bf16.mxu0 0
        %1900 = vmatpush1.bf16.msra.mxu0 0
        %1901 = vmatprep.subr.bf16.mxu0 0
        %1902 = vmatpush1.bf16.msra.mxu0 0
        %1903 = vmatprep.subr.bf16.mxu0 0
        %1904 = vmatpush1.bf16.msra.mxu0 0
        %1905 = vmatprep.subr.bf16.mxu0 0
        %1906 = vmatpush1.bf16.msra.mxu0 0
        %1907 = vmatprep.mubr.bf16.mxu0 0
        %1908 = vmatmul.mubr.bf16.gmra.mrb[0].mxu0 %v1873
        %v1909 = vpop.f32.mrb[0].mxu0
        %v1910 = vadd.f32 0.0, %v1909
        %v1911 = vpop.f32.mrb[0].mxu0
        %v1912 = vpop.f32.mrb[0].mxu0
        %v1913 = vadd.f32 0.0, %v1912
        %v1914 = vpop.f32.mrb[0].mxu0
        %1915 = vdwg.mxu0
        %1916 = vrot.lane.b32.xlu0 %v365, 48
        %v1917 = vpop.permute.xlu0 %1916
        %v1920 = vsel %vm576, %v1820, 0
        %1922 = vmatprep.subr.bf16.mxu0 0
        %1923 = vmatpush1.bf16.msra.mxu0 %v1917
        %1924 = vmatprep.subr.bf16.mxu0 0
        %1925 = vmatpush1.bf16.msra.mxu0 0
        %1926 = vmatprep.subr.bf16.mxu0 0
        %1927 = vmatpush1.bf16.msra.mxu0 0
        %1928 = vmatprep.subr.bf16.mxu0 0
        %1929 = vmatpush1.bf16.msra.mxu0 0
        %1930 = vmatprep.subr.bf16.mxu0 0
        %1931 = vmatpush1.bf16.msra.mxu0 0
        %1932 = vmatprep.subr.bf16.mxu0 0
        %1933 = vmatpush1.bf16.msra.mxu0 0
        %1934 = vmatprep.subr.bf16.mxu0 0
        %1935 = vmatpush1.bf16.msra.mxu0 0
        %1936 = vmatprep.subr.bf16.mxu0 0
        %1937 = vmatpush1.bf16.msra.mxu0 0
        %1938 = vmatprep.subr.bf16.mxu0 0
        %1939 = vmatpush1.bf16.msra.mxu0 0
        %1940 = vmatprep.subr.bf16.mxu0 0
        %1941 = vmatpush1.bf16.msra.mxu0 0
        %1942 = vmatprep.subr.bf16.mxu0 0
        %1943 = vmatpush1.bf16.msra.mxu0 0
        %1944 = vmatprep.subr.bf16.mxu0 0
        %1945 = vmatpush1.bf16.msra.mxu0 0
        %1946 = vmatprep.subr.bf16.mxu0 0
        %1947 = vmatpush1.bf16.msra.mxu0 0
        %1948 = vmatprep.subr.bf16.mxu0 0
        %1949 = vmatpush1.bf16.msra.mxu0 0
        %1950 = vmatprep.subr.bf16.mxu0 0
        %1951 = vmatpush1.bf16.msra.mxu0 0
        %1952 = vmatprep.subr.bf16.mxu0 0
        %1953 = vmatpush1.bf16.msra.mxu0 0
        %1954 = vmatprep.mubr.bf16.mxu0 0
        %1955 = vmatmul.mubr.bf16.gmra.mrb[0].mxu0 %v1920
        %v1956 = vpop.f32.mrb[0].mxu0
        %v1957 = vadd.f32 0.0, %v1956
        %v1958 = vpop.f32.mrb[0].mxu0
        %v1959 = vpop.f32.mrb[0].mxu0
        %v1960 = vadd.f32 0.0, %v1959
        %v1961 = vpop.f32.mrb[0].mxu0
        %1962 = vdwg.mxu0
        %1963 = vrot.lane.b32.xlu0 %v366, 48
        %v1964 = vpop.permute.xlu0 %1963
        %v1967 = vsel %vm576, %v1821, 0
        %1969 = vmatprep.subr.bf16.mxu0 0
        %1970 = vmatpush1.bf16.msra.mxu0 %v1964
        %1971 = vmatprep.subr.bf16.mxu0 0
        %1972 = vmatpush1.bf16.msra.mxu0 0
        %1973 = vmatprep.subr.bf16.mxu0 0
        %1974 = vmatpush1.bf16.msra.mxu0 0
        %1975 = vmatprep.subr.bf16.mxu0 0
        %1976 = vmatpush1.bf16.msra.mxu0 0
        %1977 = vmatprep.subr.bf16.mxu0 0
        %1978 = vmatpush1.bf16.msra.mxu0 0
        %1979 = vmatprep.subr.bf16.mxu0 0
        %1980 = vmatpush1.bf16.msra.mxu0 0
        %1981 = vmatprep.subr.bf16.mxu0 0
        %1982 = vmatpush1.bf16.msra.mxu0 0
        %1983 = vmatprep.subr.bf16.mxu0 0
        %1984 = vmatpush1.bf16.msra.mxu0 0
        %1985 = vmatprep.subr.bf16.mxu0 0
        %1986 = vmatpush1.bf16.msra.mxu0 0
        %1987 = vmatprep.subr.bf16.mxu0 0
        %1988 = vmatpush1.bf16.msra.mxu0 0
        %1989 = vmatprep.subr.bf16.mxu0 0
        %1990 = vmatpush1.bf16.msra.mxu0 0
        %1991 = vmatprep.subr.bf16.mxu0 0
        %1992 = vmatpush1.bf16.msra.mxu0 0
        %1993 = vmatprep.subr.bf16.mxu0 0
        %1994 = vmatpush1.bf16.msra.mxu0 0
        %1995 = vmatprep.subr.bf16.mxu0 0
        %1996 = vmatpush1.bf16.msra.mxu0 0
        %1997 = vmatprep.subr.bf16.mxu0 0
        %1998 = vmatpush1.bf16.msra.mxu0 0
        %1999 = vmatprep.subr.bf16.mxu0 0
        %2000 = vmatpush1.bf16.msra.mxu0 0
        %2001 = vmatprep.mubr.bf16.mxu0 0
        %2002 = vmatmul.mubr.bf16.gmra.mrb[0].mxu0 %v1967
        %v2003 = vpop.f32.mrb[0].mxu0
        %v2004 = vadd.f32 0.0, %v2003
        %v2005 = vpop.f32.mrb[0].mxu0
        %v2006 = vpop.f32.mrb[0].mxu0
        %v2007 = vadd.f32 0.0, %v2006
        %v2008 = vpop.f32.mrb[0].mxu0
        %2009 = vdwg.mxu0
        %v2010 = vpack.c.bf16 %v1866, %v1863
        %v2011 = vpack.c.bf16 %v1913, %v1910
        %v2012 = vpack.c.bf16 %v1960, %v1957
        %v2013 = vpack.c.bf16 %v2007, %v2004
        %v2015 = vsel %vm370, %v2010, 0
        %v2018 = vsel %vm370, %v2011, 0
        %v2021 = vsel %vm370, %v2012, 0
        %v2024 = vsel %vm370, %v2013, 0
        %v2027 = vsel %vm1369, %v361, 0
        %2029 = vmatprep.subr.bf16.mxu0 0
        %2030 = vmatpush1.bf16.msra.mxu0 %v2027
        %2031 = vmatprep.subr.bf16.mxu0 0
        %2032 = vmatpush1.bf16.msra.mxu0 0
        %2033 = vmatprep.subr.bf16.mxu0 0
        %2034 = vmatpush1.bf16.msra.mxu0 0
        %2035 = vmatprep.subr.bf16.mxu0 0
        %2036 = vmatpush1.bf16.msra.mxu0 0
        %2037 = vmatprep.subr.bf16.mxu0 0
        %2038 = vmatpush1.bf16.msra.mxu0 0
        %2039 = vmatprep.subr.bf16.mxu0 0
        %2040 = vmatpush1.bf16.msra.mxu0 0
        %2041 = vmatprep.subr.bf16.mxu0 0
        %2042 = vmatpush1.bf16.msra.mxu0 0
        %2043 = vmatprep.subr.bf16.mxu0 0
        %2044 = vmatpush1.bf16.msra.mxu0 0
        %2045 = vmatprep.subr.bf16.mxu0 0
        %2046 = vmatpush1.bf16.msra.mxu0 0
        %2047 = vmatprep.subr.bf16.mxu0 0
        %2048 = vmatpush1.bf16.msra.mxu0 0
        %2049 = vmatprep.subr.bf16.mxu0 0
        %2050 = vmatpush1.bf16.msra.mxu0 0
        %2051 = vmatprep.subr.bf16.mxu0 0
        %2052 = vmatpush1.bf16.msra.mxu0 0
        %2053 = vmatprep.subr.bf16.mxu0 0
        %2054 = vmatpush1.bf16.msra.mxu0 0
        %2055 = vmatprep.subr.bf16.mxu0 0
        %2056 = vmatpush1.bf16.msra.mxu0 0
        %2057 = vmatprep.subr.bf16.mxu0 0
        %2058 = vmatpush1.bf16.msra.mxu0 0
        %2059 = vmatprep.subr.bf16.mxu0 0
        %2060 = vmatpush1.bf16.msra.mxu0 0
        %2061 = vmatprep.mubr.bf16.mxu0 0
        %2062 = vmatmul.mubr.bf16.gmra.mrb[0].mxu0 %v2015
        %v2063 = vpop.f32.mrb[0].mxu0
        %v2064 = vadd.f32 0.0, %v2063
        %v2065 = vpop.f32.mrb[0].mxu0
        %v2066 = vpop.f32.mrb[0].mxu0
        %v2067 = vadd.f32 0.0, %v2066
        %v2068 = vpop.f32.mrb[0].mxu0
        %2069 = vmatprep.mubr.bf16.mxu0 0
        %2070 = vmatmul.mubr.bf16.gmra.mrb[0].mxu0 %v2018
        %v2071 = vpop.f32.mrb[0].mxu0
        %v2072 = vadd.f32 0.0, %v2071
        %v2073 = vpop.f32.mrb[0].mxu0
        %v2074 = vpop.f32.mrb[0].mxu0
        %v2075 = vadd.f32 0.0, %v2074
        %v2076 = vpop.f32.mrb[0].mxu0
        %2077 = vmatprep.mubr.bf16.mxu0 0
        %2078 = vmatmul.mubr.bf16.gmra.mrb[0].mxu0 %v2021
        %v2079 = vpop.f32.mrb[0].mxu0
        %v2080 = vadd.f32 0.0, %v2079
        %v2081 = vpop.f32.mrb[0].mxu0
        %v2082 = vpop.f32.mrb[0].mxu0
        %v2083 = vadd.f32 0.0, %v2082
        %v2084 = vpop.f32.mrb[0].mxu0
        %2085 = vmatprep.mubr.bf16.mxu0 0
        %2086 = vmatmul.mubr.bf16.gmra.mrb[0].mxu0 %v2024
        %v2087 = vpop.f32.mrb[0].mxu0
        %v2088 = vadd.f32 0.0, %v2087
        %v2089 = vpop.f32.mrb[0].mxu0
        %v2090 = vpop.f32.mrb[0].mxu0
        %v2091 = vadd.f32 0.0, %v2090
        %v2092 = vpop.f32.mrb[0].mxu0
        %2093 = vdwg.mxu0
        %v2094 = vadd.f32 %v1488, %v2064
        %v2095 = vadd.f32 %v1491, %v2067
        %v2096 = vadd.f32 %v1496, %v2072
        %v2097 = vadd.f32 %v1499, %v2075
        %v2098 = vadd.f32 %v1504, %v2080
        %v2099 = vadd.f32 %v1507, %v2083
        %v2100 = vadd.f32 %v1512, %v2088
        %v2101 = vadd.f32 %v1515, %v2091
        %2102 = vrot.lane.b32.xlu0 %v363, 104
        %v2103 = vpop.permute.xlu0 %2102
        %2104 = vrot.lane.b32.xlu0 %v363, 72
        %v2105 = vpop.permute.xlu0 %2104
        %v2107 = vsel %vm370, %v2103, 0
        %v2110 = vsel %vm370, %v2105, 0
        %2112 = vmatprep.subr.bf16.mxu0 0
        %2113 = vmatpush1.bf16.xpose.msra.mxu0 %v2110
        %2114 = vmatprep.subr.bf16.mxu0 0
        %2115 = vmatpush1.bf16.xpose.msra.mxu0 0
        %2116 = vmatprep.subr.bf16.mxu0 0
        %2117 = vmatpush1.bf16.xpose.msra.mxu0 0
        %2118 = vmatprep.subr.bf16.mxu0 0
        %2119 = vmatpush1.bf16.xpose.msra.mxu0 0
        %2120 = vmatprep.subr.bf16.mxu0 0
        %2121 = vmatpush1.bf16.xpose.msra.mxu0 0
        %2122 = vmatprep.subr.bf16.mxu0 0
        %2123 = vmatpush1.bf16.xpose.msra.mxu0 0
        %2124 = vmatprep.subr.bf16.mxu0 0
        %2125 = vmatpush1.bf16.xpose.msra.mxu0 0
        %2126 = vmatprep.subr.bf16.mxu0 0
        %2127 = vmatpush1.bf16.xpose.msra.mxu0 0
        %2128 = vmatprep.subr.bf16.mxu0 0
        %2129 = vmatpush1.bf16.xpose.msra.mxu0 0
        %2130 = vmatprep.subr.bf16.mxu0 0
        %2131 = vmatpush1.bf16.xpose.msra.mxu0 0
        %2132 = vmatprep.subr.bf16.mxu0 0
        %2133 = vmatpush1.bf16.xpose.msra.mxu0 0
        %2134 = vmatprep.subr.bf16.mxu0 0
        %2135 = vmatpush1.bf16.xpose.msra.mxu0 0
        %2136 = vmatprep.subr.bf16.mxu0 0
        %2137 = vmatpush1.bf16.xpose.msra.mxu0 0
        %2138 = vmatprep.subr.bf16.mxu0 0
        %2139 = vmatpush1.bf16.xpose.msra.mxu0 0
        %2140 = vmatprep.subr.bf16.mxu0 0
        %2141 = vmatpush1.bf16.xpose.msra.mxu0 0
        %2142 = vmatprep.subr.bf16.mxu0 0
        %2143 = vmatpush1.bf16.xpose.msra.mxu0 0
        %2144 = vmatprep.mubr.bf16.mxu0 0
        %2145 = vmatmul.mubr.bf16.gmra.mrb[0].mxu0 %v2107
        %v2146 = vpop.f32.mrb[0].mxu0
        %v2147 = vadd.f32 0.0, %v2146
        %v2148 = vpop.f32.mrb[0].mxu0
        %v2149 = vpop.f32.mrb[0].mxu0
        %v2150 = vadd.f32 0.0, %v2149
        %v2151 = vpop.f32.mrb[0].mxu0
        %2152 = vdwg.mxu0
        %2153 = vrot.lane.b32.xlu0 %v364, 104
        %v2154 = vpop.permute.xlu0 %2153
        %2155 = vrot.lane.b32.xlu0 %v364, 72
        %v2156 = vpop.permute.xlu0 %2155
        %v2158 = vsel %vm370, %v2154, 0
        %v2161 = vsel %vm370, %v2156, 0
        %2163 = vmatprep.subr.bf16.mxu0 0
        %2164 = vmatpush1.bf16.xpose.msra.mxu0 %v2161
        %2165 = vmatprep.subr.bf16.mxu0 0
        %2166 = vmatpush1.bf16.xpose.msra.mxu0 0
        %2167 = vmatprep.subr.bf16.mxu0 0
        %2168 = vmatpush1.bf16.xpose.msra.mxu0 0
        %2169 = vmatprep.subr.bf16.mxu0 0
        %2170 = vmatpush1.bf16.xpose.msra.mxu0 0
        %2171 = vmatprep.subr.bf16.mxu0 0
        %2172 = vmatpush1.bf16.xpose.msra.mxu0 0
        %2173 = vmatprep.subr.bf16.mxu0 0
        %2174 = vmatpush1.bf16.xpose.msra.mxu0 0
        %2175 = vmatprep.subr.bf16.mxu0 0
        %2176 = vmatpush1.bf16.xpose.msra.mxu0 0
        %2177 = vmatprep.subr.bf16.mxu0 0
        %2178 = vmatpush1.bf16.xpose.msra.mxu0 0
        %2179 = vmatprep.subr.bf16.mxu0 0
        %2180 = vmatpush1.bf16.xpose.msra.mxu0 0
        %2181 = vmatprep.subr.bf16.mxu0 0
        %2182 = vmatpush1.bf16.xpose.msra.mxu0 0
        %2183 = vmatprep.subr.bf16.mxu0 0
        %2184 = vmatpush1.bf16.xpose.msra.mxu0 0
        %2185 = vmatprep.subr.bf16.mxu0 0
        %2186 = vmatpush1.bf16.xpose.msra.mxu0 0
        %2187 = vmatprep.subr.bf16.mxu0 0
        %2188 = vmatpush1.bf16.xpose.msra.mxu0 0
        %2189 = vmatprep.subr.bf16.mxu0 0
        %2190 = vmatpush1.bf16.xpose.msra.mxu0 0
        %2191 = vmatprep.subr.bf16.mxu0 0
        %2192 = vmatpush1.bf16.xpose.msra.mxu0 0
        %2193 = vmatprep.subr.bf16.mxu0 0
        %2194 = vmatpush1.bf16.xpose.msra.mxu0 0
        %2195 = vmatprep.mubr.bf16.mxu0 0
        %2196 = vmatmul.mubr.bf16.gmra.mrb[0].mxu0 %v2158
        %v2197 = vpop.f32.mrb[0].mxu0
        %v2198 = vadd.f32 0.0, %v2197
        %v2199 = vpop.f32.mrb[0].mxu0
        %v2200 = vpop.f32.mrb[0].mxu0
        %v2201 = vadd.f32 0.0, %v2200
        %v2202 = vpop.f32.mrb[0].mxu0
        %2203 = vdwg.mxu0
        %2204 = vrot.lane.b32.xlu0 %v365, 104
        %v2205 = vpop.permute.xlu0 %2204
        %2206 = vrot.lane.b32.xlu0 %v365, 72
        %v2207 = vpop.permute.xlu0 %2206
        %v2209 = vsel %vm370, %v2205, 0
        %v2212 = vsel %vm370, %v2207, 0
        %2214 = vmatprep.subr.bf16.mxu0 0
        %2215 = vmatpush1.bf16.xpose.msra.mxu0 %v2212
        %2216 = vmatprep.subr.bf16.mxu0 0
        %2217 = vmatpush1.bf16.xpose.msra.mxu0 0
        %2218 = vmatprep.subr.bf16.mxu0 0
        %2219 = vmatpush1.bf16.xpose.msra.mxu0 0
        %2220 = vmatprep.subr.bf16.mxu0 0
        %2221 = vmatpush1.bf16.xpose.msra.mxu0 0
        %2222 = vmatprep.subr.bf16.mxu0 0
        %2223 = vmatpush1.bf16.xpose.msra.mxu0 0
        %2224 = vmatprep.subr.bf16.mxu0 0
        %2225 = vmatpush1.bf16.xpose.msra.mxu0 0
        %2226 = vmatprep.subr.bf16.mxu0 0
        %2227 = vmatpush1.bf16.xpose.msra.mxu0 0
        %2228 = vmatprep.subr.bf16.mxu0 0
        %2229 = vmatpush1.bf16.xpose.msra.mxu0 0
        %2230 = vmatprep.subr.bf16.mxu0 0
        %2231 = vmatpush1.bf16.xpose.msra.mxu0 0
        %2232 = vmatprep.subr.bf16.mxu0 0
        %2233 = vmatpush1.bf16.xpose.msra.mxu0 0
        %2234 = vmatprep.subr.bf16.mxu0 0
        %2235 = vmatpush1.bf16.xpose.msra.mxu0 0
        %2236 = vmatprep.subr.bf16.mxu0 0
        %2237 = vmatpush1.bf16.xpose.msra.mxu0 0
        %2238 = vmatprep.subr.bf16.mxu0 0
        %2239 = vmatpush1.bf16.xpose.msra.mxu0 0
        %2240 = vmatprep.subr.bf16.mxu0 0
        %2241 = vmatpush1.bf16.xpose.msra.mxu0 0
        %2242 = vmatprep.subr.bf16.mxu0 0
        %2243 = vmatpush1.bf16.xpose.msra.mxu0 0
        %2244 = vmatprep.subr.bf16.mxu0 0
        %2245 = vmatpush1.bf16.xpose.msra.mxu0 0
        %2246 = vmatprep.mubr.bf16.mxu0 0
        %2247 = vmatmul.mubr.bf16.gmra.mrb[0].mxu0 %v2209
        %v2248 = vpop.f32.mrb[0].mxu0
        %v2249 = vadd.f32 0.0, %v2248
        %v2250 = vpop.f32.mrb[0].mxu0
        %v2251 = vpop.f32.mrb[0].mxu0
        %v2252 = vadd.f32 0.0, %v2251
        %v2253 = vpop.f32.mrb[0].mxu0
        %2254 = vdwg.mxu0
        %2255 = vrot.lane.b32.xlu0 %v366, 104
        %v2256 = vpop.permute.xlu0 %2255
        %2257 = vrot.lane.b32.xlu0 %v366, 72
        %v2258 = vpop.permute.xlu0 %2257
        %v2260 = vsel %vm370, %v2256, 0
        %v2263 = vsel %vm370, %v2258, 0
        %2265 = vmatprep.subr.bf16.mxu0 0
        %2266 = vmatpush1.bf16.xpose.msra.mxu0 %v2263
        %2267 = vmatprep.subr.bf16.mxu0 0
        %2268 = vmatpush1.bf16.xpose.msra.mxu0 0
        %2269 = vmatprep.subr.bf16.mxu0 0
        %2270 = vmatpush1.bf16.xpose.msra.mxu0 0
        %2271 = vmatprep.subr.bf16.mxu0 0
        %2272 = vmatpush1.bf16.xpose.msra.mxu0 0
        %2273 = vmatprep.subr.bf16.mxu0 0
        %2274 = vmatpush1.bf16.xpose.msra.mxu0 0
        %2275 = vmatprep.subr.bf16.mxu0 0
        %2276 = vmatpush1.bf16.xpose.msra.mxu0 0
        %2277 = vmatprep.subr.bf16.mxu0 0
        %2278 = vmatpush1.bf16.xpose.msra.mxu0 0
        %2279 = vmatprep.subr.bf16.mxu0 0
        %2280 = vmatpush1.bf16.xpose.msra.mxu0 0
        %2281 = vmatprep.subr.bf16.mxu0 0
        %2282 = vmatpush1.bf16.xpose.msra.mxu0 0
        %2283 = vmatprep.subr.bf16.mxu0 0
        %2284 = vmatpush1.bf16.xpose.msra.mxu0 0
        %2285 = vmatprep.subr.bf16.mxu0 0
        %2286 = vmatpush1.bf16.xpose.msra.mxu0 0
        %2287 = vmatprep.subr.bf16.mxu0 0
        %2288 = vmatpush1.bf16.xpose.msra.mxu0 0
        %2289 = vmatprep.subr.bf16.mxu0 0
        %2290 = vmatpush1.bf16.xpose.msra.mxu0 0
        %2291 = vmatprep.subr.bf16.mxu0 0
        %2292 = vmatpush1.bf16.xpose.msra.mxu0 0
        %2293 = vmatprep.subr.bf16.mxu0 0
        %2294 = vmatpush1.bf16.xpose.msra.mxu0 0
        %2295 = vmatprep.subr.bf16.mxu0 0
        %2296 = vmatpush1.bf16.xpose.msra.mxu0 0
        %2297 = vmatprep.mubr.bf16.mxu0 0
        %2298 = vmatmul.mubr.bf16.gmra.mrb[0].mxu0 %v2260
        %v2299 = vpop.f32.mrb[0].mxu0
        %v2300 = vadd.f32 0.0, %v2299
        %v2301 = vpop.f32.mrb[0].mxu0
        %v2302 = vpop.f32.mrb[0].mxu0
        %v2303 = vadd.f32 0.0, %v2302
        %v2304 = vpop.f32.mrb[0].mxu0
        %2305 = vdwg.mxu0
        %v2306 = vmul.f32 %v2147, 0.35355338
        %v2307 = vmul.f32 %v2150, 0.35355338
        %v2308 = vmul.f32 %v2198, 0.35355338
        %v2309 = vmul.f32 %v2201, 0.35355338
        %v2310 = vmul.f32 %v2249, 0.35355338
        %v2311 = vmul.f32 %v2252, 0.35355338
        %v2312 = vmul.f32 %v2300, 0.35355338
        %v2313 = vmul.f32 %v2303, 0.35355338
        %v2314 = vsel %vm576, %v2306, -inf
        %2315 = vmax.xlane.f32.xlu0 %v2314
        %v2316 = vpop.xlane.xlu0 %2315
        %v2317 = vsel %vm576, %v2307, -inf
        %2318 = vmax.xlane.f32.xlu0 %v2317
        %v2319 = vpop.xlane.xlu0 %2318
        %v2320 = vsel %vm576, %v2308, -inf
        %2321 = vmax.xlane.f32.xlu0 %v2320
        %v2322 = vpop.xlane.xlu0 %2321
        %v2323 = vsel %vm576, %v2309, -inf
        %2324 = vmax.xlane.f32.xlu0 %v2323
        %v2325 = vpop.xlane.xlu0 %2324
        %v2326 = vsel %vm576, %v2310, -inf
        %2327 = vmax.xlane.f32.xlu0 %v2326
        %v2328 = vpop.xlane.xlu0 %2327
        %v2329 = vsel %vm576, %v2311, -inf
        %2330 = vmax.xlane.f32.xlu0 %v2329
        %v2331 = vpop.xlane.xlu0 %2330
        %v2332 = vsel %vm576, %v2312, -inf
        %2333 = vmax.xlane.f32.xlu0 %v2332
        %v2334 = vpop.xlane.xlu0 %2333
        %v2335 = vsel %vm576, %v2313, -inf
        %2336 = vmax.xlane.f32.xlu0 %v2335
        %v2337 = vpop.xlane.xlu0 %2336
        %v2338 = vsub.f32 %v2306, %v2316
        %v2339 = vsub.f32 %v2307, %v2319
        %v2340 = vsub.f32 %v2308, %v2322
        %v2341 = vsub.f32 %v2309, %v2325
        %v2342 = vsub.f32 %v2310, %v2328
        %v2343 = vsub.f32 %v2311, %v2331
        %v2344 = vsub.f32 %v2312, %v2334
        %v2345 = vsub.f32 %v2313, %v2337
        %v2346 = vmul.f32 %v2338, 1.442695
        %v2347 = vpow.pop %v2346
        %v2348 = vmul.f32 %v2339, 1.442695
        %v2349 = vpow.pop %v2348
        %v2350 = vmul.f32 %v2340, 1.442695
        %v2351 = vpow.pop %v2350
        %v2352 = vmul.f32 %v2341, 1.442695
        %v2353 = vpow.pop %v2352
        %v2354 = vmul.f32 %v2342, 1.442695
        %v2355 = vpow.pop %v2354
        %v2356 = vmul.f32 %v2343, 1.442695
        %v2357 = vpow.pop %v2356
        %v2358 = vmul.f32 %v2344, 1.442695
        %v2359 = vpow.pop %v2358
        %v2360 = vmul.f32 %v2345, 1.442695
        %v2361 = vpow.pop %v2360
        %v2362 = vsel %vm576, %v2347, 0.0
        %2363 = vadd.xlane.f32.xlu0 %v2362
        %v2364 = vpop.xlane.xlu0 %2363
        %v2365 = vsel %vm576, %v2349, 0.0
        %2366 = vadd.xlane.f32.xlu0 %v2365
        %v2367 = vpop.xlane.xlu0 %2366
        %v2368 = vsel %vm576, %v2351, 0.0
        %2369 = vadd.xlane.f32.xlu0 %v2368
        %v2370 = vpop.xlane.xlu0 %2369
        %v2371 = vsel %vm576, %v2353, 0.0
        %2372 = vadd.xlane.f32.xlu0 %v2371
        %v2373 = vpop.xlane.xlu0 %2372
        %v2374 = vsel %vm576, %v2355, 0.0
        %2375 = vadd.xlane.f32.xlu0 %v2374
        %v2376 = vpop.xlane.xlu0 %2375
        %v2377 = vsel %vm576, %v2357, 0.0
        %2378 = vadd.xlane.f32.xlu0 %v2377
        %v2379 = vpop.xlane.xlu0 %2378
        %v2380 = vsel %vm576, %v2359, 0.0
        %2381 = vadd.xlane.f32.xlu0 %v2380
        %v2382 = vpop.xlane.xlu0 %2381
        %v2383 = vsel %vm576, %v2361, 0.0
        %2384 = vadd.xlane.f32.xlu0 %v2383
        %v2385 = vpop.xlane.xlu0 %2384
        %v2386 = vrcp.pop %v2364
        %v2387 = vrcp.pop %v2367
        %v2388 = vrcp.pop %v2370
        %v2389 = vrcp.pop %v2373
        %v2390 = vrcp.pop %v2376
        %v2391 = vrcp.pop %v2379
        %v2392 = vrcp.pop %v2382
        %v2393 = vrcp.pop %v2385
        %v2394 = vmul.f32 %v2347, %v2386
        %v2395 = vmul.f32 %v2349, %v2387
        %v2396 = vmul.f32 %v2351, %v2388
        %v2397 = vmul.f32 %v2353, %v2389
        %v2398 = vmul.f32 %v2355, %v2390
        %v2399 = vmul.f32 %v2357, %v2391
        %v2400 = vmul.f32 %v2359, %v2392
        %v2401 = vmul.f32 %v2361, %v2393
        %v2402 = vpack.c.bf16 %v2395, %v2394
        %v2403 = vpack.c.bf16 %v2397, %v2396
        %v2404 = vpack.c.bf16 %v2399, %v2398
        %v2405 = vpack.c.bf16 %v2401, %v2400
        %2406 = vrot.lane.b32.xlu0 %v363, 40
        %v2407 = vpop.permute.xlu0 %2406
        %v2410 = vsel %vm576, %v2402, 0
        %2412 = vmatprep.subr.bf16.mxu0 0
        %2413 = vmatpush1.bf16.msra.mxu0 %v2407
        %2414 = vmatprep.subr.bf16.mxu0 0
        %2415 = vmatpush1.bf16.msra.mxu0 0
        %2416 = vmatprep.subr.bf16.mxu0 0
        %2417 = vmatpush1.bf16.msra.mxu0 0
        %2418 = vmatprep.subr.bf16.mxu0 0
        %2419 = vmatpush1.bf16.msra.mxu0 0
        %2420 = vmatprep.subr.bf16.mxu0 0
        %2421 = vmatpush1.bf16.msra.mxu0 0
        %2422 = vmatprep.subr.bf16.mxu0 0
        %2423 = vmatpush1.bf16.msra.mxu0 0
        %2424 = vmatprep.subr.bf16.mxu0 0
        %2425 = vmatpush1.bf16.msra.mxu0 0
        %2426 = vmatprep.subr.bf16.mxu0 0
        %2427 = vmatpush1.bf16.msra.mxu0 0
        %2428 = vmatprep.subr.bf16.mxu0 0
        %2429 = vmatpush1.bf16.msra.mxu0 0
        %2430 = vmatprep.subr.bf16.mxu0 0
        %2431 = vmatpush1.bf16.msra.mxu0 0
        %2432 = vmatprep.subr.bf16.mxu0 0
        %2433 = vmatpush1.bf16.msra.mxu0 0
        %2434 = vmatprep.subr.bf16.mxu0 0
        %2435 = vmatpush1.bf16.msra.mxu0 0
        %2436 = vmatprep.subr.bf16.mxu0 0
        %2437 = vmatpush1.bf16.msra.mxu0 0
        %2438 = vmatprep.subr.bf16.mxu0 0
        %2439 = vmatpush1.bf16.msra.mxu0 0
        %2440 = vmatprep.subr.bf16.mxu0 0
        %2441 = vmatpush1.bf16.msra.mxu0 0
        %2442 = vmatprep.subr.bf16.mxu0 0
        %2443 = vmatpush1.bf16.msra.mxu0 0
        %2444 = vmatprep.mubr.bf16.mxu0 0
        %2445 = vmatmul.mubr.bf16.gmra.mrb[0].mxu0 %v2410
        %v2446 = vpop.f32.mrb[0].mxu0
        %v2447 = vadd.f32 0.0, %v2446
        %v2448 = vpop.f32.mrb[0].mxu0
        %v2449 = vpop.f32.mrb[0].mxu0
        %v2450 = vadd.f32 0.0, %v2449
        %v2451 = vpop.f32.mrb[0].mxu0
        %2452 = vdwg.mxu0
        %2453 = vrot.lane.b32.xlu0 %v364, 40
        %v2454 = vpop.permute.xlu0 %2453
        %v2457 = vsel %vm576, %v2403, 0
        %2459 = vmatprep.subr.bf16.mxu0 0
        %2460 = vmatpush1.bf16.msra.mxu0 %v2454
        %2461 = vmatprep.subr.bf16.mxu0 0
        %2462 = vmatpush1.bf16.msra.mxu0 0
        %2463 = vmatprep.subr.bf16.mxu0 0
        %2464 = vmatpush1.bf16.msra.mxu0 0
        %2465 = vmatprep.subr.bf16.mxu0 0
        %2466 = vmatpush1.bf16.msra.mxu0 0
        %2467 = vmatprep.subr.bf16.mxu0 0
        %2468 = vmatpush1.bf16.msra.mxu0 0
        %2469 = vmatprep.subr.bf16.mxu0 0
        %2470 = vmatpush1.bf16.msra.mxu0 0
        %2471 = vmatprep.subr.bf16.mxu0 0
        %2472 = vmatpush1.bf16.msra.mxu0 0
        %2473 = vmatprep.subr.bf16.mxu0 0
        %2474 = vmatpush1.bf16.msra.mxu0 0
        %2475 = vmatprep.subr.bf16.mxu0 0
        %2476 = vmatpush1.bf16.msra.mxu0 0
        %2477 = vmatprep.subr.bf16.mxu0 0
        %2478 = vmatpush1.bf16.msra.mxu0 0
        %2479 = vmatprep.subr.bf16.mxu0 0
        %2480 = vmatpush1.bf16.msra.mxu0 0
        %2481 = vmatprep.subr.bf16.mxu0 0
        %2482 = vmatpush1.bf16.msra.mxu0 0
        %2483 = vmatprep.subr.bf16.mxu0 0
        %2484 = vmatpush1.bf16.msra.mxu0 0
        %2485 = vmatprep.subr.bf16.mxu0 0
        %2486 = vmatpush1.bf16.msra.mxu0 0
        %2487 = vmatprep.subr.bf16.mxu0 0
        %2488 = vmatpush1.bf16.msra.mxu0 0
        %2489 = vmatprep.subr.bf16.mxu0 0
        %2490 = vmatpush1.bf16.msra.mxu0 0
        %2491 = vmatprep.mubr.bf16.mxu0 0
        %2492 = vmatmul.mubr.bf16.gmra.mrb[0].mxu0 %v2457
        %v2493 = vpop.f32.mrb[0].mxu0
        %v2494 = vadd.f32 0.0, %v2493
        %v2495 = vpop.f32.mrb[0].mxu0
        %v2496 = vpop.f32.mrb[0].mxu0
        %v2497 = vadd.f32 0.0, %v2496
        %v2498 = vpop.f32.mrb[0].mxu0
        %2499 = vdwg.mxu0
        %2500 = vrot.lane.b32.xlu0 %v365, 40
        %v2501 = vpop.permute.xlu0 %2500
        %v2504 = vsel %vm576, %v2404, 0
        %2506 = vmatprep.subr.bf16.mxu0 0
        %2507 = vmatpush1.bf16.msra.mxu0 %v2501
        %2508 = vmatprep.subr.bf16.mxu0 0
        %2509 = vmatpush1.bf16.msra.mxu0 0
        %2510 = vmatprep.subr.bf16.mxu0 0
        %2511 = vmatpush1.bf16.msra.mxu0 0
        %2512 = vmatprep.subr.bf16.mxu0 0
        %2513 = vmatpush1.bf16.msra.mxu0 0
        %2514 = vmatprep.subr.bf16.mxu0 0
        %2515 = vmatpush1.bf16.msra.mxu0 0
        %2516 = vmatprep.subr.bf16.mxu0 0
        %2517 = vmatpush1.bf16.msra.mxu0 0
        %2518 = vmatprep.subr.bf16.mxu0 0
        %2519 = vmatpush1.bf16.msra.mxu0 0
        %2520 = vmatprep.subr.bf16.mxu0 0
        %2521 = vmatpush1.bf16.msra.mxu0 0
        %2522 = vmatprep.subr.bf16.mxu0 0
        %2523 = vmatpush1.bf16.msra.mxu0 0
        %2524 = vmatprep.subr.bf16.mxu0 0
        %2525 = vmatpush1.bf16.msra.mxu0 0
        %2526 = vmatprep.subr.bf16.mxu0 0
        %2527 = vmatpush1.bf16.msra.mxu0 0
        %2528 = vmatprep.subr.bf16.mxu0 0
        %2529 = vmatpush1.bf16.msra.mxu0 0
        %2530 = vmatprep.subr.bf16.mxu0 0
        %2531 = vmatpush1.bf16.msra.mxu0 0
        %2532 = vmatprep.subr.bf16.mxu0 0
        %2533 = vmatpush1.bf16.msra.mxu0 0
        %2534 = vmatprep.subr.bf16.mxu0 0
        %2535 = vmatpush1.bf16.msra.mxu0 0
        %2536 = vmatprep.subr.bf16.mxu0 0
        %2537 = vmatpush1.bf16.msra.mxu0 0
        %2538 = vmatprep.mubr.bf16.mxu0 0
        %2539 = vmatmul.mubr.bf16.gmra.mrb[0].mxu0 %v2504
        %v2540 = vpop.f32.mrb[0].mxu0
        %v2541 = vadd.f32 0.0, %v2540
        %v2542 = vpop.f32.mrb[0].mxu0
        %v2543 = vpop.f32.mrb[0].mxu0
        %v2544 = vadd.f32 0.0, %v2543
        %v2545 = vpop.f32.mrb[0].mxu0
        %2546 = vdwg.mxu0
        %2547 = vrot.lane.b32.xlu0 %v366, 40
        %v2548 = vpop.permute.xlu0 %2547
        %v2551 = vsel %vm576, %v2405, 0
        %2553 = vmatprep.subr.bf16.mxu0 0
        %2554 = vmatpush1.bf16.msra.mxu0 %v2548
        %2555 = vmatprep.subr.bf16.mxu0 0
        %2556 = vmatpush1.bf16.msra.mxu0 0
        %2557 = vmatprep.subr.bf16.mxu0 0
        %2558 = vmatpush1.bf16.msra.mxu0 0
        %2559 = vmatprep.subr.bf16.mxu0 0
        %2560 = vmatpush1.bf16.msra.mxu0 0
        %2561 = vmatprep.subr.bf16.mxu0 0
        %2562 = vmatpush1.bf16.msra.mxu0 0
        %2563 = vmatprep.subr.bf16.mxu0 0
        %2564 = vmatpush1.bf16.msra.mxu0 0
        %2565 = vmatprep.subr.bf16.mxu0 0
        %2566 = vmatpush1.bf16.msra.mxu0 0
        %2567 = vmatprep.subr.bf16.mxu0 0
        %2568 = vmatpush1.bf16.msra.mxu0 0
        %2569 = vmatprep.subr.bf16.mxu0 0
        %2570 = vmatpush1.bf16.msra.mxu0 0
        %2571 = vmatprep.subr.bf16.mxu0 0
        %2572 = vmatpush1.bf16.msra.mxu0 0
        %2573 = vmatprep.subr.bf16.mxu0 0
        %2574 = vmatpush1.bf16.msra.mxu0 0
        %2575 = vmatprep.subr.bf16.mxu0 0
        %2576 = vmatpush1.bf16.msra.mxu0 0
        %2577 = vmatprep.subr.bf16.mxu0 0
        %2578 = vmatpush1.bf16.msra.mxu0 0
        %2579 = vmatprep.subr.bf16.mxu0 0
        %2580 = vmatpush1.bf16.msra.mxu0 0
        %2581 = vmatprep.subr.bf16.mxu0 0
        %2582 = vmatpush1.bf16.msra.mxu0 0
        %2583 = vmatprep.subr.bf16.mxu0 0
        %2584 = vmatpush1.bf16.msra.mxu0 0
        %2585 = vmatprep.mubr.bf16.mxu0 0
        %2586 = vmatmul.mubr.bf16.gmra.mrb[0].mxu0 %v2551
        %v2587 = vpop.f32.mrb[0].mxu0
        %v2588 = vadd.f32 0.0, %v2587
        %v2589 = vpop.f32.mrb[0].mxu0
        %v2590 = vpop.f32.mrb[0].mxu0
        %v2591 = vadd.f32 0.0, %v2590
        %v2592 = vpop.f32.mrb[0].mxu0
        %2593 = vdwg.mxu0
        %v2594 = vpack.c.bf16 %v2450, %v2447
        %v2595 = vpack.c.bf16 %v2497, %v2494
        %v2596 = vpack.c.bf16 %v2544, %v2541
        %v2597 = vpack.c.bf16 %v2591, %v2588
        %v2599 = vsel %vm370, %v2594, 0
        %v2602 = vsel %vm370, %v2595, 0
        %v2605 = vsel %vm370, %v2596, 0
        %v2608 = vsel %vm370, %v2597, 0
        %v2611 = vsel %vm1369, %v362, 0
        %2613 = vmatprep.subr.bf16.mxu0 0
        %2614 = vmatpush1.bf16.msra.mxu0 %v2611
        %2615 = vmatprep.subr.bf16.mxu0 0
        %2616 = vmatpush1.bf16.msra.mxu0 0
        %2617 = vmatprep.subr.bf16.mxu0 0
        %2618 = vmatpush1.bf16.msra.mxu0 0
        %2619 = vmatprep.subr.bf16.mxu0 0
        %2620 = vmatpush1.bf16.msra.mxu0 0
        %2621 = vmatprep.subr.bf16.mxu0 0
        %2622 = vmatpush1.bf16.msra.mxu0 0
        %2623 = vmatprep.subr.bf16.mxu0 0
        %2624 = vmatpush1.bf16.msra.mxu0 0
        %2625 = vmatprep.subr.bf16.mxu0 0
        %2626 = vmatpush1.bf16.msra.mxu0 0
        %2627 = vmatprep.subr.bf16.mxu0 0
        %2628 = vmatpush1.bf16.msra.mxu0 0
        %2629 = vmatprep.subr.bf16.mxu0 0
        %2630 = vmatpush1.bf16.msra.mxu0 0
        %2631 = vmatprep.subr.bf16.mxu0 0
        %2632 = vmatpush1.bf16.msra.mxu0 0
        %2633 = vmatprep.subr.bf16.mxu0 0
        %2634 = vmatpush1.bf16.msra.mxu0 0
        %2635 = vmatprep.subr.bf16.mxu0 0
        %2636 = vmatpush1.bf16.msra.mxu0 0
        %2637 = vmatprep.subr.bf16.mxu0 0
        %2638 = vmatpush1.bf16.msra.mxu0 0
        %2639 = vmatprep.subr.bf16.mxu0 0
        %2640 = vmatpush1.bf16.msra.mxu0 0
        %2641 = vmatprep.subr.bf16.mxu0 0
        %2642 = vmatpush1.bf16.msra.mxu0 0
        %2643 = vmatprep.subr.bf16.mxu0 0
        %2644 = vmatpush1.bf16.msra.mxu0 0
        %2645 = vmatprep.mubr.bf16.mxu0 0
        %2646 = vmatmul.mubr.bf16.gmra.mrb[0].mxu0 %v2599
        %v2647 = vpop.f32.mrb[0].mxu0
        %v2648 = vadd.f32 0.0, %v2647
        %v2649 = vpop.f32.mrb[0].mxu0
        %v2650 = vpop.f32.mrb[0].mxu0
        %v2651 = vadd.f32 0.0, %v2650
        %v2652 = vpop.f32.mrb[0].mxu0
        %2653 = vmatprep.mubr.bf16.mxu0 0
        %2654 = vmatmul.mubr.bf16.gmra.mrb[0].mxu0 %v2602
        %v2655 = vpop.f32.mrb[0].mxu0
        %v2656 = vadd.f32 0.0, %v2655
        %v2657 = vpop.f32.mrb[0].mxu0
        %v2658 = vpop.f32.mrb[0].mxu0
        %v2659 = vadd.f32 0.0, %v2658
        %v2660 = vpop.f32.mrb[0].mxu0
        %2661 = vmatprep.mubr.bf16.mxu0 0
        %2662 = vmatmul.mubr.bf16.gmra.mrb[0].mxu0 %v2605
        %v2663 = vpop.f32.mrb[0].mxu0
        %v2664 = vadd.f32 0.0, %v2663
        %v2665 = vpop.f32.mrb[0].mxu0
        %v2666 = vpop.f32.mrb[0].mxu0
        %v2667 = vadd.f32 0.0, %v2666
        %v2668 = vpop.f32.mrb[0].mxu0
        %2669 = vmatprep.mubr.bf16.mxu0 0
        %2670 = vmatmul.mubr.bf16.gmra.mrb[0].mxu0 %v2608
        %v2671 = vpop.f32.mrb[0].mxu0
        %v2672 = vadd.f32 0.0, %v2671
        %v2673 = vpop.f32.mrb[0].mxu0
        %v2674 = vpop.f32.mrb[0].mxu0
        %v2675 = vadd.f32 0.0, %v2674
        %v2676 = vpop.f32.mrb[0].mxu0
        %2677 = vdwg.mxu0
        %v2678 = vadd.f32 %v2094, %v2648
        %v2679 = vadd.f32 %v2095, %v2651
        %v2680 = vadd.f32 %v2096, %v2656
        %v2681 = vadd.f32 %v2097, %v2659
        %v2682 = vadd.f32 %v2098, %v2664
        %v2683 = vadd.f32 %v2099, %v2667
        %v2684 = vadd.f32 %v2100, %v2672
        %v2685 = vadd.f32 %v2101, %v2675
        %v2686 = vld [vmem:[%s4] sm:$0x1]
        %v2688 = vlaneseq
        %v2689 = vshrl.u32 %v2688, 7
        %v2690 = vsub.s32 0, %v2689
        %v2691 = vrot.slane %v2686, %v2690
        %v2693 = vadd.f32 %v2678, %v2691
        %v2694 = vadd.f32 %v2679, %v2691
        %v2695 = vadd.f32 %v2680, %v2691
        %v2696 = vadd.f32 %v2681, %v2691
        %v2697 = vadd.f32 %v2682, %v2691
        %v2698 = vadd.f32 %v2683, %v2691
        %v2699 = vadd.f32 %v2684, %v2691
        %v2700 = vadd.f32 %v2685, %v2691
        %v2701 = vadd.f32 %v2693, %v246
        %v2702 = vadd.f32 %v2694, %v247
        %v2703 = vadd.f32 %v2695, %v248
        %v2704 = vadd.f32 %v2696, %v249
        %v2705 = vadd.f32 %v2697, %v250
        %v2706 = vadd.f32 %v2698, %v251
        %v2707 = vadd.f32 %v2699, %v252
        %v2708 = vadd.f32 %v2700, %v253
        %2709 = vst.msk [vmem:[%s244] sm:$0xff] %vm281, %v2701
        %2710 = vst.msk [vmem:[%s244 + $0x8] sm:$0xff] %vm281, %v2702
        %2711 = vst.msk [vmem:[%s244 + $0x10] sm:$0xff] %vm281, %v2703
        %2712 = vst.msk [vmem:[%s244 + $0x18] sm:$0xff] %vm281, %v2704
        %2713 = vst.msk [vmem:[%s244 + $0x20] sm:$0xff] %vm281, %v2705
        %2714 = vst.msk [vmem:[%s244 + $0x28] sm:$0xff] %vm281, %v2706
        %2715 = vst.msk [vmem:[%s244 + $0x30] sm:$0xff] %vm281, %v2707
        %2716 = vst.msk [vmem:[%s244 + $0x38] sm:$0xff] %vm281, %v2708
        %p2717 = scmp.lt.s32.totalorder %s19, 1
        %s2718 = scalar_select %p2717, %s19, 1
        %s2719 = smul.addr %s2718, 8
        %s2720 = smul.addr %s2719, 8
        %s2721 = scalar_lea.vmem %s5, %s2720
        // Predicated region
        $region45: #{_lambda_.3} parent=39 // pred_check
          %p2722 = pneg %p147
        $region46: #{_lambda_.3} parent=39 // pred_check_branch
          %2724 = sbr.rel (%p2722) target = $region48
        $region47: #{_lambda_.3} parent=39 // pred_region
          _
        $region48: #{_lambda_.3} parent=39 // pred_fallthru
          _
      $region40: #{_lambda_.3} parent=5 // pred_fallthru
        _
      %p2725 = scmp.le.s32.totalorder 2, %s14
      // Predicated region
      $region49: #{_lambda_.3} parent=5 // pred_check
        %p2726 = pneg %p2725
      $region50: #{_lambda_.3} parent=5 // pred_check_branch
        %2728 = sbr.rel (%p2726) target = $region52
      $region51: #{_lambda_.3} parent=5 // pred_region
        %s2729 = ssub.s32 %s14, 2
        // Predicated region
        $region53: #{_lambda_.3} parent=51 // pred_check
          %p2730 = pneg %p153
        $region54: #{_lambda_.3} parent=51 // pred_check_branch
          %2732 = sbr.rel (%p2730) target = $region56
        $region55: #{_lambda_.3} parent=51 // pred_region
          %p2733 = scmp.lt.s32.totalorder %s20, 1
          %s2734 = scalar_select %p2733, %s20, 1
          %s2735 = smul.addr %s2734, 8
          %s2736 = smul.addr %s2735, 8
          %s2737 = scalar_lea.vmem %s5, %s2736
        $region56: #{_lambda_.3} parent=51 // pred_fallthru
          _
      $region52: #{_lambda_.3} parent=5 // pred_fallthru
        _
    $region6: #{_lambda_.3} parent=1 // loop_footer
      %s18 = sadd.s32 1, %s14
    $region7: #{_lambda_.3} parent=1 // loop_footer_branch
      %13 = sbr.rel target = $region3
    $region8: #{_lambda_.3} parent=1 // loop_exit
      _
    %2738 = vsyncpa [#allocation3], 1
    %s2739 = scalar_lea.sflag [#allocation3], 1
    %2740 = vsyncpa %s2739, 1

</llo_original>
